<compile_context>
chip_gen: v5e
topology: v5e:2x2
jax: 0.10.0
libtpu: 0.0.40
codegen_flags: <defaults>
</compile_context>

<pallas_src>
import functools

import jax
import jax.numpy as jnp
import numpy as np
from jax.experimental import pallas as pl
from jax.experimental.pallas import tpu as pltpu

_FILTERS = (4, 8, 16)
_DILATIONS = (1, 2, 5)


def _round_up(x, m):
    return (x + m - 1) // m * m


def _tap_offsets(dil):
    offs = []
    for tap in range(27):
        kd, kh, kw = tap // 9, (tap // 3) % 3, tap % 3
        offs.append(((kd - 1) * dil, (kh - 1) * dil, (kw - 1) * dil))
    return offs


def _build_masks(D, H, W):
    """(3*27, D*H*W) f32 validity masks, stage-major / tap-minor."""
    d = np.repeat(np.arange(D), H * W)
    h = np.tile(np.repeat(np.arange(H), W), D)
    w = np.tile(np.arange(W), D * H)
    rows = []
    for dil in _DILATIONS:
        for od, oh, ow in _tap_offsets(dil):
            ok = ((d + od >= 0) & (d + od < D) &
                  (h + oh >= 0) & (h + oh < H) &
                  (w + ow >= 0) & (w + ow < W))
            rows.append(ok.astype(np.float32))
    return jnp.asarray(np.stack(rows))


def _dilated_block_kernel(x_ref, m_ref, w1_ref, b1_ref, w2_ref, b2_ref,
                          w3_ref, b3_ref, out_ref, p_ref, *, spatial, stages):
    # x_ref : (1, cin_pad0, S)     flattened channels-first input tile
    # m_ref : (81, S)              per-stage/per-tap boundary masks (f32 0/1)
    # wX_ref: (cout_pad, 27*cin_pad)  BN-scale-folded weights
    # bX_ref: (cout_pad, 1)        folded BN shift
    # out_ref: (1, 16, S)          channels-first output tile
    # p_ref : (27*max_cin_pad, S)  im2col scratch (VMEM)
    D, H, W = spatial
    S = D * H * W
    w_refs = (w1_ref, w2_ref, w3_ref)
    b_refs = (b1_ref, b2_ref, b3_ref)

    act = x_ref[0]                                      # (cin_pad0, S) f32
    for s_idx, (dil, cin_p, _cout_p) in enumerate(stages):
        # Build P[tap*cin_p + c, i] = x[c, i + delta_tap] (0 if tap falls
        # outside the volume).  Roll along lanes is an XLU rotate; invalid
        # (wrapped / out-of-range) positions are zeroed by the mask.
        for tap, (od, oh, ow) in enumerate(_tap_offsets(dil)):
            delta = od * (H * W) + oh * W + ow
            if delta == 0:
                rows = act                              # centre tap: no shift/mask
            else:
                shifted = pltpu.roll(act, (-delta) % S, axis=1)
                mrow = s_idx * 27 + tap
                rows = shifted * m_ref[mrow:mrow + 1, :]
            p_ref[tap * cin_p:(tap + 1) * cin_p, :] = rows
        # One lane-dense MXU matmul over K = 27*cin_p, then BN shift + ReLU.
        y = jnp.dot(w_refs[s_idx][...], p_ref[0:27 * cin_p, :],
                    preferred_element_type=jnp.float32)
        act = jnp.maximum(y + b_refs[s_idx][...], 0.0)

    out_ref[0] = act.astype(out_ref.dtype)


def pack_params(in_channel, params):
    """Fold BN scale into weights; lay out as (Cout_pad, 27*Cin_pad) tiles."""
    cins = (in_channel, _FILTERS[0], _FILTERS[1])
    cin_pads = tuple(_round_up(c, 8) for c in cins)
    cout_pads = (cin_pads[1], cin_pads[2], _round_up(_FILTERS[2], 8))
    packed = []
    for i, (w, scale, shift) in enumerate(params):
        cin, cout = cins[i], _FILTERS[i]
        cin_p, cout_p = cin_pads[i], cout_pads[i]
        wt = jnp.transpose(w, (4, 0, 1, 2, 3))          # (Cout, 3, 3, 3, Cin)
        wt = wt * scale.reshape(cout, 1, 1, 1, 1)       # fold BN scale into W
        wt = jnp.pad(wt, ((0, cout_p - cout), (0, 0), (0, 0), (0, 0),
                          (0, cin_p - cin)))
        wmat = wt.reshape(cout_p, 27 * cin_p)           # row order matches P
        b = jnp.pad(shift, (0, cout_p - cout)).reshape(cout_p, 1)
        packed.append((wmat, b))
    return packed, cin_pads, cout_pads


def dilated_block(x_ncdhw, params):
    """Pallas implementation of Dliatedblock.forward. Input/output are NCDHW."""
    N, Cin, D, H, W = x_ncdhw.shape
    S = D * H * W
    packed, cin_pads, cout_pads = pack_params(Cin, params)
    cp0, cout_last = cin_pads[0], cout_pads[-1]

    x2 = x_ncdhw.reshape(N, Cin, S)                     # no transpose needed
    if cp0 > Cin:
        x2 = jnp.pad(x2, ((0, 0), (0, cp0 - Cin), (0, 0)))
    masks = _build_masks(D, H, W)                       # (81, S) f32

    (w1, b1), (w2, b2), (w3, b3) = packed
    stages = tuple(zip(_DILATIONS, cin_pads, cout_pads))
    kernel = functools.partial(_dilated_block_kernel, spatial=(D, H, W),
                               stages=stages)

    out = pl.pallas_call(
        kernel,
        out_shape=jax.ShapeDtypeStruct((N, cout_last, S), x_ncdhw.dtype),
        grid=(N,),
        in_specs=[
            pl.BlockSpec((1, cp0, S), lambda b: (b, 0, 0)),
            pl.BlockSpec(masks.shape, lambda b: (0, 0)),
            pl.BlockSpec(w1.shape, lambda b: (0, 0)),
            pl.BlockSpec(b1.shape, lambda b: (0, 0)),
            pl.BlockSpec(w2.shape, lambda b: (0, 0)),
            pl.BlockSpec(b2.shape, lambda b: (0, 0)),
            pl.BlockSpec(w3.shape, lambda b: (0, 0)),
            pl.BlockSpec(b3.shape, lambda b: (0, 0)),
        ],
        out_specs=pl.BlockSpec((1, cout_last, S), lambda b: (b, 0, 0)),
        scratch_shapes=[pltpu.VMEM((27 * max(cin_pads), S), jnp.float32)],
        compiler_params=pltpu.CompilerParams(
            dimension_semantics=("parallel",)),
    )(x2, masks, w1, b1, w2, b2, w3, b3)

    out = out.reshape(N, cout_last, D, H, W)
    return out[:, :_FILTERS[-1]]


def make_params(in_channel, key):
    """Deterministic synthetic parameters (conv weights + folded BN affines)."""
    eps = 1e-5
    cins = [in_channel] + list(_FILTERS[:-1])
    params = []
    for cin, cout in zip(cins, _FILTERS):
        key, kw, kg, kb, km, kv = jax.random.split(key, 6)
        fan_in = cin * 27
        w = jax.random.normal(kw, (3, 3, 3, cin, cout), jnp.float32) / jnp.sqrt(fan_in)
        gamma = 1.0 + 0.1 * jax.random.normal(kg, (cout,), jnp.float32)
        beta = 0.1 * jax.random.normal(kb, (cout,), jnp.float32)
        mean = 0.05 * jax.random.normal(km, (cout,), jnp.float32)
        var = 1.0 + 0.1 * jnp.abs(jax.random.normal(kv, (cout,), jnp.float32))
        scale = gamma / jnp.sqrt(var + eps)
        shift = beta - mean * scale
        params.append((w, scale, shift))
    return params


def dilated_block_ref(x_ncdhw, params):
    """Pure-JAX reference (XLA conv) for correctness checking."""
    x = jnp.transpose(x_ncdhw, (0, 2, 3, 4, 1))
    for (w, scale, shift), d in zip(params, _DILATIONS):
        y = jax.lax.conv_general_dilated(
            x, w, window_strides=(1, 1, 1),
            padding=[(d, d)] * 3, rhs_dilation=(d, d, d),
            dimension_numbers=('NDHWC', 'DHWIO', 'NDHWC'))
        y = y * scale + shift
        x = jnp.maximum(y, 0.0)
    return jnp.transpose(x, (0, 4, 1, 2, 3))


if __name__ == "__main__":
    key = jax.random.PRNGKey(0)
    key, kx, kp = jax.random.split(key, 3)

    # PyTorch-style NCDHW input: batch=2, in_channel=4, spatial 8x8x8.
    x = jax.random.normal(kx, (2, 4, 8, 8, 8), jnp.float32)
    params = make_params(in_channel=4, key=kp)

    out = jax.block_until_ready(dilated_block(x, params))
    ref = jax.block_until_ready(dilated_block_ref(x, params))

    assert out.shape == (2, 16, 8, 8, 8), out.shape
    max_err = float(jnp.max(jnp.abs(out - ref)))
    assert jnp.allclose(out, ref, atol=2e-4, rtol=2e-4), max_err
    print("KERNEL_OK")
</pallas_src>

<mosaic_0001>
module attributes {stable_mosaic.version = 11 : i64} {
  func.func @_dilated_block_kernel(%arg0: i32, %arg1: memref<1x8x512xf32, #tpu.memory_space<vmem>>, %arg2: memref<81x512xf32, #tpu.memory_space<vmem>>, %arg3: memref<8x216xf32, #tpu.memory_space<vmem>>, %arg4: memref<8x1xf32, #tpu.memory_space<vmem>>, %arg5: memref<8x216xf32, #tpu.memory_space<vmem>>, %arg6: memref<8x1xf32, #tpu.memory_space<vmem>>, %arg7: memref<16x216xf32, #tpu.memory_space<vmem>>, %arg8: memref<16x1xf32, #tpu.memory_space<vmem>>, %arg9: memref<1x16x512xf32, #tpu.memory_space<vmem>>, %arg10: memref<216x512xf32, #tpu.memory_space<vmem>>) attributes {dimension_semantics = [#tpu.dimension_semantics<parallel>], iteration_bounds = array<i64: 2>, scalar_prefetch = 0 : i64, scratch_operands = 1 : i64, tpu.core_type = #tpu.core_type<tc>, window_params = [{transform_indices = @transform_0, window_bounds = array<i64: 1, 8, 512>}, {pipeline_mode = #tpu.pipeline_mode<synchronous>, transform_indices = @transform_1, window_bounds = array<i64: 81, 512>}, {pipeline_mode = #tpu.pipeline_mode<synchronous>, transform_indices = @transform_2, window_bounds = array<i64: 8, 216>}, {pipeline_mode = #tpu.pipeline_mode<synchronous>, transform_indices = @transform_3, window_bounds = array<i64: 8, 1>}, {pipeline_mode = #tpu.pipeline_mode<synchronous>, transform_indices = @transform_4, window_bounds = array<i64: 8, 216>}, {pipeline_mode = #tpu.pipeline_mode<synchronous>, transform_indices = @transform_5, window_bounds = array<i64: 8, 1>}, {pipeline_mode = #tpu.pipeline_mode<synchronous>, transform_indices = @transform_6, window_bounds = array<i64: 16, 216>}, {pipeline_mode = #tpu.pipeline_mode<synchronous>, transform_indices = @transform_7, window_bounds = array<i64: 16, 1>}, {transform_indices = @transform_8, window_bounds = array<i64: 1, 16, 512>}]} {
    %c0 = arith.constant 0 : index
    %c0_0 = arith.constant 0 : index
    %c0_1 = arith.constant 0 : index
    %0 = vector.load %arg1[%c0, %c0_0, %c0_1] : memref<1x8x512xf32, #tpu.memory_space<vmem>>, vector<1x8x512xf32>
    %1 = vector.shape_cast %0 : vector<1x8x512xf32> to vector<8x512xf32>
    %c73_i32 = arith.constant 73 : i32
    %2 = tpu.dynamic_rotate %1 by %c73_i32 dim 1 : vector<8x512xf32>, i32 -> vector<8x512xf32>
    %c0_2 = arith.constant 0 : index
    %c0_3 = arith.constant 0 : index
    %3 = vector.load %arg2[%c0_2, %c0_3] : memref<81x512xf32, #tpu.memory_space<vmem>>, vector<1x512xf32>
    %4 = vector.broadcast %3 : vector<1x512xf32> to vector<8x512xf32>
    %5 = arith.mulf %2, %4 : vector<8x512xf32>
    %c0_4 = arith.constant 0 : index
    %c0_5 = arith.constant 0 : index
    %6 = vector.load %arg10[%c0_4, %c0_5] : memref<216x512xf32, #tpu.memory_space<vmem>>, vector<8x512xf32>
    tpu.vector_store %arg10[%c0_4, %c0_5], %5 {strides = array<i32>} : memref<216x512xf32, #tpu.memory_space<vmem>>, vector<8x512xf32>,
    %c72_i32 = arith.constant 72 : i32
    %7 = tpu.dynamic_rotate %1 by %c72_i32 dim 1 : vector<8x512xf32>, i32 -> vector<8x512xf32>
    %c1 = arith.constant 1 : index
    %c0_6 = arith.constant 0 : index
    %8 = vector.load %arg2[%c1, %c0_6] : memref<81x512xf32, #tpu.memory_space<vmem>>, vector<1x512xf32>
    %9 = vector.broadcast %8 : vector<1x512xf32> to vector<8x512xf32>
    %10 = arith.mulf %7, %9 : vector<8x512xf32>
    %c8 = arith.constant 8 : index
    %c0_7 = arith.constant 0 : index
    %11 = vector.load %arg10[%c8, %c0_7] : memref<216x512xf32, #tpu.memory_space<vmem>>, vector<8x512xf32>
    tpu.vector_store %arg10[%c8, %c0_7], %10 {strides = array<i32>} : memref<216x512xf32, #tpu.memory_space<vmem>>, vector<8x512xf32>,
    %c71_i32 = arith.constant 71 : i32
    %12 = tpu.dynamic_rotate %1 by %c71_i32 dim 1 : vector<8x512xf32>, i32 -> vector<8x512xf32>
    %c2 = arith.constant 2 : index
    %c0_8 = arith.constant 0 : index
    %13 = vector.load %arg2[%c2, %c0_8] : memref<81x512xf32, #tpu.memory_space<vmem>>, vector<1x512xf32>
    %14 = vector.broadcast %13 : vector<1x512xf32> to vector<8x512xf32>
    %15 = arith.mulf %12, %14 : vector<8x512xf32>
    %c16 = arith.constant 16 : index
    %c0_9 = arith.constant 0 : index
    %16 = vector.load %arg10[%c16, %c0_9] : memref<216x512xf32, #tpu.memory_space<vmem>>, vector<8x512xf32>
    tpu.vector_store %arg10[%c16, %c0_9], %15 {strides = array<i32>} : memref<216x512xf32, #tpu.memory_space<vmem>>, vector<8x512xf32>,
    %c65_i32 = arith.constant 65 : i32
    %17 = tpu.dynamic_rotate %1 by %c65_i32 dim 1 : vector<8x512xf32>, i32 -> vector<8x512xf32>
    %c3 = arith.constant 3 : index
    %c0_10 = arith.constant 0 : index
    %18 = vector.load %arg2[%c3, %c0_10] : memref<81x512xf32, #tpu.memory_space<vmem>>, vector<1x512xf32>
    %19 = vector.broadcast %18 : vector<1x512xf32> to vector<8x512xf32>
    %20 = arith.mulf %17, %19 : vector<8x512xf32>
    %c24 = arith.constant 24 : index
    %c0_11 = arith.constant 0 : index
    %21 = vector.load %arg10[%c24, %c0_11] : memref<216x512xf32, #tpu.memory_space<vmem>>, vector<8x512xf32>
    tpu.vector_store %arg10[%c24, %c0_11], %20 {strides = array<i32>} : memref<216x512xf32, #tpu.memory_space<vmem>>, vector<8x512xf32>,
    %c64_i32 = arith.constant 64 : i32
    %22 = tpu.dynamic_rotate %1 by %c64_i32 dim 1 : vector<8x512xf32>, i32 -> vector<8x512xf32>
    %c4 = arith.constant 4 : index
    %c0_12 = arith.constant 0 : index
    %23 = vector.load %arg2[%c4, %c0_12] : memref<81x512xf32, #tpu.memory_space<vmem>>, vector<1x512xf32>
    %24 = vector.broadcast %23 : vector<1x512xf32> to vector<8x512xf32>
    %25 = arith.mulf %22, %24 : vector<8x512xf32>
    %c32 = arith.constant 32 : index
    %c0_13 = arith.constant 0 : index
    %26 = vector.load %arg10[%c32, %c0_13] : memref<216x512xf32, #tpu.memory_space<vmem>>, vector<8x512xf32>
    tpu.vector_store %arg10[%c32, %c0_13], %25 {strides = array<i32>} : memref<216x512xf32, #tpu.memory_space<vmem>>, vector<8x512xf32>,
    %c63_i32 = arith.constant 63 : i32
    %27 = tpu.dynamic_rotate %1 by %c63_i32 dim 1 : vector<8x512xf32>, i32 -> vector<8x512xf32>
    %c5 = arith.constant 5 : index
    %c0_14 = arith.constant 0 : index
    %28 = vector.load %arg2[%c5, %c0_14] : memref<81x512xf32, #tpu.memory_space<vmem>>, vector<1x512xf32>
    %29 = vector.broadcast %28 : vector<1x512xf32> to vector<8x512xf32>
    %30 = arith.mulf %27, %29 : vector<8x512xf32>
    %c40 = arith.constant 40 : index
    %c0_15 = arith.constant 0 : index
    %31 = vector.load %arg10[%c40, %c0_15] : memref<216x512xf32, #tpu.memory_space<vmem>>, vector<8x512xf32>
    tpu.vector_store %arg10[%c40, %c0_15], %30 {strides = array<i32>} : memref<216x512xf32, #tpu.memory_space<vmem>>, vector<8x512xf32>,
    %c57_i32 = arith.constant 57 : i32
    %32 = tpu.dynamic_rotate %1 by %c57_i32 dim 1 : vector<8x512xf32>, i32 -> vector<8x512xf32>
    %c6 = arith.constant 6 : index
    %c0_16 = arith.constant 0 : index
    %33 = vector.load %arg2[%c6, %c0_16] : memref<81x512xf32, #tpu.memory_space<vmem>>, vector<1x512xf32>
    %34 = vector.broadcast %33 : vector<1x512xf32> to vector<8x512xf32>
    %35 = arith.mulf %32, %34 : vector<8x512xf32>
    %c48 = arith.constant 48 : index
    %c0_17 = arith.constant 0 : index
    %36 = vector.load %arg10[%c48, %c0_17] : memref<216x512xf32, #tpu.memory_space<vmem>>, vector<8x512xf32>
    tpu.vector_store %arg10[%c48, %c0_17], %35 {strides = array<i32>} : memref<216x512xf32, #tpu.memory_space<vmem>>, vector<8x512xf32>,
    %c56_i32 = arith.constant 56 : i32
    %37 = tpu.dynamic_rotate %1 by %c56_i32 dim 1 : vector<8x512xf32>, i32 -> vector<8x512xf32>
    %c7 = arith.constant 7 : index
    %c0_18 = arith.constant 0 : index
    %38 = vector.load %arg2[%c7, %c0_18] : memref<81x512xf32, #tpu.memory_space<vmem>>, vector<1x512xf32>
    %39 = vector.broadcast %38 : vector<1x512xf32> to vector<8x512xf32>
    %40 = arith.mulf %37, %39 : vector<8x512xf32>
    %c56 = arith.constant 56 : index
    %c0_19 = arith.constant 0 : index
    %41 = vector.load %arg10[%c56, %c0_19] : memref<216x512xf32, #tpu.memory_space<vmem>>, vector<8x512xf32>
    tpu.vector_store %arg10[%c56, %c0_19], %40 {strides = array<i32>} : memref<216x512xf32, #tpu.memory_space<vmem>>, vector<8x512xf32>,
    %c55_i32 = arith.constant 55 : i32
    %42 = tpu.dynamic_rotate %1 by %c55_i32 dim 1 : vector<8x512xf32>, i32 -> vector<8x512xf32>
    %c8_20 = arith.constant 8 : index
    %c0_21 = arith.constant 0 : index
    %43 = vector.load %arg2[%c8_20, %c0_21] : memref<81x512xf32, #tpu.memory_space<vmem>>, vector<1x512xf32>
    %44 = vector.broadcast %43 : vector<1x512xf32> to vector<8x512xf32>
    %45 = arith.mulf %42, %44 : vector<8x512xf32>
    %c64 = arith.constant 64 : index
    %c0_22 = arith.constant 0 : index
    %46 = vector.load %arg10[%c64, %c0_22] : memref<216x512xf32, #tpu.memory_space<vmem>>, vector<8x512xf32>
    tpu.vector_store %arg10[%c64, %c0_22], %45 {strides = array<i32>} : memref<216x512xf32, #tpu.memory_space<vmem>>, vector<8x512xf32>,
    %c9_i32 = arith.constant 9 : i32
    %47 = tpu.dynamic_rotate %1 by %c9_i32 dim 1 : vector<8x512xf32>, i32 -> vector<8x512xf32>
    %c9 = arith.constant 9 : index
    %c0_23 = arith.constant 0 : index
    %48 = vector.load %arg2[%c9, %c0_23] : memref<81x512xf32, #tpu.memory_space<vmem>>, vector<1x512xf32>
    %49 = vector.broadcast %48 : vector<1x512xf32> to vector<8x512xf32>
    %50 = arith.mulf %47, %49 : vector<8x512xf32>
    %c72 = arith.constant 72 : index
    %c0_24 = arith.constant 0 : index
    %51 = vector.load %arg10[%c72, %c0_24] : memref<216x512xf32, #tpu.memory_space<vmem>>, vector<8x512xf32>
    tpu.vector_store %arg10[%c72, %c0_24], %50 {strides = array<i32>} : memref<216x512xf32, #tpu.memory_space<vmem>>, vector<8x512xf32>,
    %c8_i32 = arith.constant 8 : i32
    %52 = tpu.dynamic_rotate %1 by %c8_i32 dim 1 : vector<8x512xf32>, i32 -> vector<8x512xf32>
    %c10 = arith.constant 10 : index
    %c0_25 = arith.constant 0 : index
    %53 = vector.load %arg2[%c10, %c0_25] : memref<81x512xf32, #tpu.memory_space<vmem>>, vector<1x512xf32>
    %54 = vector.broadcast %53 : vector<1x512xf32> to vector<8x512xf32>
    %55 = arith.mulf %52, %54 : vector<8x512xf32>
    %c80 = arith.constant 80 : index
    %c0_26 = arith.constant 0 : index
    %56 = vector.load %arg10[%c80, %c0_26] : memref<216x512xf32, #tpu.memory_space<vmem>>, vector<8x512xf32>
    tpu.vector_store %arg10[%c80, %c0_26], %55 {strides = array<i32>} : memref<216x512xf32, #tpu.memory_space<vmem>>, vector<8x512xf32>,
    %c7_i32 = arith.constant 7 : i32
    %57 = tpu.dynamic_rotate %1 by %c7_i32 dim 1 : vector<8x512xf32>, i32 -> vector<8x512xf32>
    %c11 = arith.constant 11 : index
    %c0_27 = arith.constant 0 : index
    %58 = vector.load %arg2[%c11, %c0_27] : memref<81x512xf32, #tpu.memory_space<vmem>>, vector<1x512xf32>
    %59 = vector.broadcast %58 : vector<1x512xf32> to vector<8x512xf32>
    %60 = arith.mulf %57, %59 : vector<8x512xf32>
    %c88 = arith.constant 88 : index
    %c0_28 = arith.constant 0 : index
    %61 = vector.load %arg10[%c88, %c0_28] : memref<216x512xf32, #tpu.memory_space<vmem>>, vector<8x512xf32>
    tpu.vector_store %arg10[%c88, %c0_28], %60 {strides = array<i32>} : memref<216x512xf32, #tpu.memory_space<vmem>>, vector<8x512xf32>,
    %c1_i32 = arith.constant 1 : i32
    %62 = tpu.dynamic_rotate %1 by %c1_i32 dim 1 : vector<8x512xf32>, i32 -> vector<8x512xf32>
    %c12 = arith.constant 12 : index
    %c0_29 = arith.constant 0 : index
    %63 = vector.load %arg2[%c12, %c0_29] : memref<81x512xf32, #tpu.memory_space<vmem>>, vector<1x512xf32>
    %64 = vector.broadcast %63 : vector<1x512xf32> to vector<8x512xf32>
    %65 = arith.mulf %62, %64 : vector<8x512xf32>
    %c96 = arith.constant 96 : index
    %c0_30 = arith.constant 0 : index
    %66 = vector.load %arg10[%c96, %c0_30] : memref<216x512xf32, #tpu.memory_space<vmem>>, vector<8x512xf32>
    tpu.vector_store %arg10[%c96, %c0_30], %65 {strides = array<i32>} : memref<216x512xf32, #tpu.memory_space<vmem>>, vector<8x512xf32>,
    %c104 = arith.constant 104 : index
    %c0_31 = arith.constant 0 : index
    %67 = vector.load %arg10[%c104, %c0_31] : memref<216x512xf32, #tpu.memory_space<vmem>>, vector<8x512xf32>
    tpu.vector_store %arg10[%c104, %c0_31], %1 {strides = array<i32>} : memref<216x512xf32, #tpu.memory_space<vmem>>, vector<8x512xf32>,
    %c511_i32 = arith.constant 511 : i32
    %68 = tpu.dynamic_rotate %1 by %c511_i32 dim 1 : vector<8x512xf32>, i32 -> vector<8x512xf32>
    %c14 = arith.constant 14 : index
    %c0_32 = arith.constant 0 : index
    %69 = vector.load %arg2[%c14, %c0_32] : memref<81x512xf32, #tpu.memory_space<vmem>>, vector<1x512xf32>
    %70 = vector.broadcast %69 : vector<1x512xf32> to vector<8x512xf32>
    %71 = arith.mulf %68, %70 : vector<8x512xf32>
    %c112 = arith.constant 112 : index
    %c0_33 = arith.constant 0 : index
    %72 = vector.load %arg10[%c112, %c0_33] : memref<216x512xf32, #tpu.memory_space<vmem>>, vector<8x512xf32>
    tpu.vector_store %arg10[%c112, %c0_33], %71 {strides = array<i32>} : memref<216x512xf32, #tpu.memory_space<vmem>>, vector<8x512xf32>,
    %c505_i32 = arith.constant 505 : i32
    %73 = tpu.dynamic_rotate %1 by %c505_i32 dim 1 : vector<8x512xf32>, i32 -> vector<8x512xf32>
    %c15 = arith.constant 15 : index
    %c0_34 = arith.constant 0 : index
    %74 = vector.load %arg2[%c15, %c0_34] : memref<81x512xf32, #tpu.memory_space<vmem>>, vector<1x512xf32>
    %75 = vector.broadcast %74 : vector<1x512xf32> to vector<8x512xf32>
    %76 = arith.mulf %73, %75 : vector<8x512xf32>
    %c120 = arith.constant 120 : index
    %c0_35 = arith.constant 0 : index
    %77 = vector.load %arg10[%c120, %c0_35] : memref<216x512xf32, #tpu.memory_space<vmem>>, vector<8x512xf32>
    tpu.vector_store %arg10[%c120, %c0_35], %76 {strides = array<i32>} : memref<216x512xf32, #tpu.memory_space<vmem>>, vector<8x512xf32>,
    %c504_i32 = arith.constant 504 : i32
    %78 = tpu.dynamic_rotate %1 by %c504_i32 dim 1 : vector<8x512xf32>, i32 -> vector<8x512xf32>
    %c16_36 = arith.constant 16 : index
    %c0_37 = arith.constant 0 : index
    %79 = vector.load %arg2[%c16_36, %c0_37] : memref<81x512xf32, #tpu.memory_space<vmem>>, vector<1x512xf32>
    %80 = vector.broadcast %79 : vector<1x512xf32> to vector<8x512xf32>
    %81 = arith.mulf %78, %80 : vector<8x512xf32>
    %c128 = arith.constant 128 : index
    %c0_38 = arith.constant 0 : index
    %82 = vector.load %arg10[%c128, %c0_38] : memref<216x512xf32, #tpu.memory_space<vmem>>, vector<8x512xf32>
    tpu.vector_store %arg10[%c128, %c0_38], %81 {strides = array<i32>} : memref<216x512xf32, #tpu.memory_space<vmem>>, vector<8x512xf32>,
    %c503_i32 = arith.constant 503 : i32
    %83 = tpu.dynamic_rotate %1 by %c503_i32 dim 1 : vector<8x512xf32>, i32 -> vector<8x512xf32>
    %c17 = arith.constant 17 : index
    %c0_39 = arith.constant 0 : index
    %84 = vector.load %arg2[%c17, %c0_39] : memref<81x512xf32, #tpu.memory_space<vmem>>, vector<1x512xf32>
    %85 = vector.broadcast %84 : vector<1x512xf32> to vector<8x512xf32>
    %86 = arith.mulf %83, %85 : vector<8x512xf32>
    %c136 = arith.constant 136 : index
    %c0_40 = arith.constant 0 : index
    %87 = vector.load %arg10[%c136, %c0_40] : memref<216x512xf32, #tpu.memory_space<vmem>>, vector<8x512xf32>
    tpu.vector_store %arg10[%c136, %c0_40], %86 {strides = array<i32>} : memref<216x512xf32, #tpu.memory_space<vmem>>, vector<8x512xf32>,
    %c457_i32 = arith.constant 457 : i32
    %88 = tpu.dynamic_rotate %1 by %c457_i32 dim 1 : vector<8x512xf32>, i32 -> vector<8x512xf32>
    %c18 = arith.constant 18 : index
    %c0_41 = arith.constant 0 : index
    %89 = vector.load %arg2[%c18, %c0_41] : memref<81x512xf32, #tpu.memory_space<vmem>>, vector<1x512xf32>
    %90 = vector.broadcast %89 : vector<1x512xf32> to vector<8x512xf32>
    %91 = arith.mulf %88, %90 : vector<8x512xf32>
    %c144 = arith.constant 144 : index
    %c0_42 = arith.constant 0 : index
    %92 = vector.load %arg10[%c144, %c0_42] : memref<216x512xf32, #tpu.memory_space<vmem>>, vector<8x512xf32>
    tpu.vector_store %arg10[%c144, %c0_42], %91 {strides = array<i32>} : memref<216x512xf32, #tpu.memory_space<vmem>>, vector<8x512xf32>,
    %c456_i32 = arith.constant 456 : i32
    %93 = tpu.dynamic_rotate %1 by %c456_i32 dim 1 : vector<8x512xf32>, i32 -> vector<8x512xf32>
    %c19 = arith.constant 19 : index
    %c0_43 = arith.constant 0 : index
    %94 = vector.load %arg2[%c19, %c0_43] : memref<81x512xf32, #tpu.memory_space<vmem>>, vector<1x512xf32>
    %95 = vector.broadcast %94 : vector<1x512xf32> to vector<8x512xf32>
    %96 = arith.mulf %93, %95 : vector<8x512xf32>
    %c152 = arith.constant 152 : index
    %c0_44 = arith.constant 0 : index
    %97 = vector.load %arg10[%c152, %c0_44] : memref<216x512xf32, #tpu.memory_space<vmem>>, vector<8x512xf32>
    tpu.vector_store %arg10[%c152, %c0_44], %96 {strides = array<i32>} : memref<216x512xf32, #tpu.memory_space<vmem>>, vector<8x512xf32>,
    %c455_i32 = arith.constant 455 : i32
    %98 = tpu.dynamic_rotate %1 by %c455_i32 dim 1 : vector<8x512xf32>, i32 -> vector<8x512xf32>
    %c20 = arith.constant 20 : index
    %c0_45 = arith.constant 0 : index
    %99 = vector.load %arg2[%c20, %c0_45] : memref<81x512xf32, #tpu.memory_space<vmem>>, vector<1x512xf32>
    %100 = vector.broadcast %99 : vector<1x512xf32> to vector<8x512xf32>
    %101 = arith.mulf %98, %100 : vector<8x512xf32>
    %c160 = arith.constant 160 : index
    %c0_46 = arith.constant 0 : index
    %102 = vector.load %arg10[%c160, %c0_46] : memref<216x512xf32, #tpu.memory_space<vmem>>, vector<8x512xf32>
    tpu.vector_store %arg10[%c160, %c0_46], %101 {strides = array<i32>} : memref<216x512xf32, #tpu.memory_space<vmem>>, vector<8x512xf32>,
    %c449_i32 = arith.constant 449 : i32
    %103 = tpu.dynamic_rotate %1 by %c449_i32 dim 1 : vector<8x512xf32>, i32 -> vector<8x512xf32>
    %c21 = arith.constant 21 : index
    %c0_47 = arith.constant 0 : index
    %104 = vector.load %arg2[%c21, %c0_47] : memref<81x512xf32, #tpu.memory_space<vmem>>, vector<1x512xf32>
    %105 = vector.broadcast %104 : vector<1x512xf32> to vector<8x512xf32>
    %106 = arith.mulf %103, %105 : vector<8x512xf32>
    %c168 = arith.constant 168 : index
    %c0_48 = arith.constant 0 : index
    %107 = vector.load %arg10[%c168, %c0_48] : memref<216x512xf32, #tpu.memory_space<vmem>>, vector<8x512xf32>
    tpu.vector_store %arg10[%c168, %c0_48], %106 {strides = array<i32>} : memref<216x512xf32, #tpu.memory_space<vmem>>, vector<8x512xf32>,
    %c448_i32 = arith.constant 448 : i32
    %108 = tpu.dynamic_rotate %1 by %c448_i32 dim 1 : vector<8x512xf32>, i32 -> vector<8x512xf32>
    %c22 = arith.constant 22 : index
    %c0_49 = arith.constant 0 : index
    %109 = vector.load %arg2[%c22, %c0_49] : memref<81x512xf32, #tpu.memory_space<vmem>>, vector<1x512xf32>
    %110 = vector.broadcast %109 : vector<1x512xf32> to vector<8x512xf32>
    %111 = arith.mulf %108, %110 : vector<8x512xf32>
    %c176 = arith.constant 176 : index
    %c0_50 = arith.constant 0 : index
    %112 = vector.load %arg10[%c176, %c0_50] : memref<216x512xf32, #tpu.memory_space<vmem>>, vector<8x512xf32>
    tpu.vector_store %arg10[%c176, %c0_50], %111 {strides = array<i32>} : memref<216x512xf32, #tpu.memory_space<vmem>>, vector<8x512xf32>,
    %c447_i32 = arith.constant 447 : i32
    %113 = tpu.dynamic_rotate %1 by %c447_i32 dim 1 : vector<8x512xf32>, i32 -> vector<8x512xf32>
    %c23 = arith.constant 23 : index
    %c0_51 = arith.constant 0 : index
    %114 = vector.load %arg2[%c23, %c0_51] : memref<81x512xf32, #tpu.memory_space<vmem>>, vector<1x512xf32>
    %115 = vector.broadcast %114 : vector<1x512xf32> to vector<8x512xf32>
    %116 = arith.mulf %113, %115 : vector<8x512xf32>
    %c184 = arith.constant 184 : index
    %c0_52 = arith.constant 0 : index
    %117 = vector.load %arg10[%c184, %c0_52] : memref<216x512xf32, #tpu.memory_space<vmem>>, vector<8x512xf32>
    tpu.vector_store %arg10[%c184, %c0_52], %116 {strides = array<i32>} : memref<216x512xf32, #tpu.memory_space<vmem>>, vector<8x512xf32>,
    %c441_i32 = arith.constant 441 : i32
    %118 = tpu.dynamic_rotate %1 by %c441_i32 dim 1 : vector<8x512xf32>, i32 -> vector<8x512xf32>
    %c24_53 = arith.constant 24 : index
    %c0_54 = arith.constant 0 : index
    %119 = vector.load %arg2[%c24_53, %c0_54] : memref<81x512xf32, #tpu.memory_space<vmem>>, vector<1x512xf32>
    %120 = vector.broadcast %119 : vector<1x512xf32> to vector<8x512xf32>
    %121 = arith.mulf %118, %120 : vector<8x512xf32>
    %c192 = arith.constant 192 : index
    %c0_55 = arith.constant 0 : index
    %122 = vector.load %arg10[%c192, %c0_55] : memref<216x512xf32, #tpu.memory_space<vmem>>, vector<8x512xf32>
    tpu.vector_store %arg10[%c192, %c0_55], %121 {strides = array<i32>} : memref<216x512xf32, #tpu.memory_space<vmem>>, vector<8x512xf32>,
    %c440_i32 = arith.constant 440 : i32
    %123 = tpu.dynamic_rotate %1 by %c440_i32 dim 1 : vector<8x512xf32>, i32 -> vector<8x512xf32>
    %c25 = arith.constant 25 : index
    %c0_56 = arith.constant 0 : index
    %124 = vector.load %arg2[%c25, %c0_56] : memref<81x512xf32, #tpu.memory_space<vmem>>, vector<1x512xf32>
    %125 = vector.broadcast %124 : vector<1x512xf32> to vector<8x512xf32>
    %126 = arith.mulf %123, %125 : vector<8x512xf32>
    %c200 = arith.constant 200 : index
    %c0_57 = arith.constant 0 : index
    %127 = vector.load %arg10[%c200, %c0_57] : memref<216x512xf32, #tpu.memory_space<vmem>>, vector<8x512xf32>
    tpu.vector_store %arg10[%c200, %c0_57], %126 {strides = array<i32>} : memref<216x512xf32, #tpu.memory_space<vmem>>, vector<8x512xf32>,
    %c439_i32 = arith.constant 439 : i32
    %128 = tpu.dynamic_rotate %1 by %c439_i32 dim 1 : vector<8x512xf32>, i32 -> vector<8x512xf32>
    %c26 = arith.constant 26 : index
    %c0_58 = arith.constant 0 : index
    %129 = vector.load %arg2[%c26, %c0_58] : memref<81x512xf32, #tpu.memory_space<vmem>>, vector<1x512xf32>
    %130 = vector.broadcast %129 : vector<1x512xf32> to vector<8x512xf32>
    %131 = arith.mulf %128, %130 : vector<8x512xf32>
    %c208 = arith.constant 208 : index
    %c0_59 = arith.constant 0 : index
    %132 = vector.load %arg10[%c208, %c0_59] : memref<216x512xf32, #tpu.memory_space<vmem>>, vector<8x512xf32>
    tpu.vector_store %arg10[%c208, %c0_59], %131 {strides = array<i32>} : memref<216x512xf32, #tpu.memory_space<vmem>>, vector<8x512xf32>,
    %c0_60 = arith.constant 0 : index
    %c0_61 = arith.constant 0 : index
    %133 = vector.load %arg3[%c0_60, %c0_61] : memref<8x216xf32, #tpu.memory_space<vmem>>, vector<8x216xf32>
    %c0_62 = arith.constant 0 : index
    %c0_63 = arith.constant 0 : index
    %134 = vector.load %arg10[%c0_62, %c0_63] : memref<216x512xf32, #tpu.memory_space<vmem>>, vector<216x512xf32>
    %cst = arith.constant dense<0.000000e+00> : vector<8x512xf32>
    %135 = tpu.matmul %133, %134, %cst {dimension_numbers = #tpu.dot_dimension_numbers<[1], [0], [0], [1], [0, 0, 1, 1], [], []>} : vector<8x216xf32>, vector<216x512xf32>, vector<8x512xf32> -> vector<8x512xf32>
    %c0_64 = arith.constant 0 : index
    %c0_65 = arith.constant 0 : index
    %136 = vector.load %arg4[%c0_64, %c0_65] : memref<8x1xf32, #tpu.memory_space<vmem>>, vector<8x1xf32>
    %137 = vector.broadcast %136 : vector<8x1xf32> to vector<8x512xf32>
    %138 = arith.addf %135, %137 : vector<8x512xf32>
    %cst_66 = arith.constant 0.000000e+00 : f32
    %139 = vector.broadcast %cst_66 : f32 to vector<8x512xf32>
    %140 = arith.maximumf %138, %139 : vector<8x512xf32>
    %c146_i32 = arith.constant 146 : i32
    %141 = tpu.dynamic_rotate %140 by %c146_i32 dim 1 : vector<8x512xf32>, i32 -> vector<8x512xf32>
    %c27 = arith.constant 27 : index
    %c0_67 = arith.constant 0 : index
    %142 = vector.load %arg2[%c27, %c0_67] : memref<81x512xf32, #tpu.memory_space<vmem>>, vector<1x512xf32>
    %143 = vector.broadcast %142 : vector<1x512xf32> to vector<8x512xf32>
    %144 = arith.mulf %141, %143 : vector<8x512xf32>
    %c0_68 = arith.constant 0 : index
    %c0_69 = arith.constant 0 : index
    %145 = vector.load %arg10[%c0_68, %c0_69] : memref<216x512xf32, #tpu.memory_space<vmem>>, vector<8x512xf32>
    tpu.vector_store %arg10[%c0_68, %c0_69], %144 {strides = array<i32>} : memref<216x512xf32, #tpu.memory_space<vmem>>, vector<8x512xf32>,
    %c144_i32 = arith.constant 144 : i32
    %146 = tpu.dynamic_rotate %140 by %c144_i32 dim 1 : vector<8x512xf32>, i32 -> vector<8x512xf32>
    %c28 = arith.constant 28 : index
    %c0_70 = arith.constant 0 : index
    %147 = vector.load %arg2[%c28, %c0_70] : memref<81x512xf32, #tpu.memory_space<vmem>>, vector<1x512xf32>
    %148 = vector.broadcast %147 : vector<1x512xf32> to vector<8x512xf32>
    %149 = arith.mulf %146, %148 : vector<8x512xf32>
    %c8_71 = arith.constant 8 : index
    %c0_72 = arith.constant 0 : index
    %150 = vector.load %arg10[%c8_71, %c0_72] : memref<216x512xf32, #tpu.memory_space<vmem>>, vector<8x512xf32>
    tpu.vector_store %arg10[%c8_71, %c0_72], %149 {strides = array<i32>} : memref<216x512xf32, #tpu.memory_space<vmem>>, vector<8x512xf32>,
    %c142_i32 = arith.constant 142 : i32
    %151 = tpu.dynamic_rotate %140 by %c142_i32 dim 1 : vector<8x512xf32>, i32 -> vector<8x512xf32>
    %c29 = arith.constant 29 : index
    %c0_73 = arith.constant 0 : index
    %152 = vector.load %arg2[%c29, %c0_73] : memref<81x512xf32, #tpu.memory_space<vmem>>, vector<1x512xf32>
    %153 = vector.broadcast %152 : vector<1x512xf32> to vector<8x512xf32>
    %154 = arith.mulf %151, %153 : vector<8x512xf32>
    %c16_74 = arith.constant 16 : index
    %c0_75 = arith.constant 0 : index
    %155 = vector.load %arg10[%c16_74, %c0_75] : memref<216x512xf32, #tpu.memory_space<vmem>>, vector<8x512xf32>
    tpu.vector_store %arg10[%c16_74, %c0_75], %154 {strides = array<i32>} : memref<216x512xf32, #tpu.memory_space<vmem>>, vector<8x512xf32>,
    %c130_i32 = arith.constant 130 : i32
    %156 = tpu.dynamic_rotate %140 by %c130_i32 dim 1 : vector<8x512xf32>, i32 -> vector<8x512xf32>
    %c30 = arith.constant 30 : index
    %c0_76 = arith.constant 0 : index
    %157 = vector.load %arg2[%c30, %c0_76] : memref<81x512xf32, #tpu.memory_space<vmem>>, vector<1x512xf32>
    %158 = vector.broadcast %157 : vector<1x512xf32> to vector<8x512xf32>
    %159 = arith.mulf %156, %158 : vector<8x512xf32>
    %c24_77 = arith.constant 24 : index
    %c0_78 = arith.constant 0 : index
    %160 = vector.load %arg10[%c24_77, %c0_78] : memref<216x512xf32, #tpu.memory_space<vmem>>, vector<8x512xf32>
    tpu.vector_store %arg10[%c24_77, %c0_78], %159 {strides = array<i32>} : memref<216x512xf32, #tpu.memory_space<vmem>>, vector<8x512xf32>,
    %c128_i32 = arith.constant 128 : i32
    %161 = tpu.dynamic_rotate %140 by %c128_i32 dim 1 : vector<8x512xf32>, i32 -> vector<8x512xf32>
    %c31 = arith.constant 31 : index
    %c0_79 = arith.constant 0 : index
    %162 = vector.load %arg2[%c31, %c0_79] : memref<81x512xf32, #tpu.memory_space<vmem>>, vector<1x512xf32>
    %163 = vector.broadcast %162 : vector<1x512xf32> to vector<8x512xf32>
    %164 = arith.mulf %161, %163 : vector<8x512xf32>
    %c32_80 = arith.constant 32 : index
    %c0_81 = arith.constant 0 : index
    %165 = vector.load %arg10[%c32_80, %c0_81] : memref<216x512xf32, #tpu.memory_space<vmem>>, vector<8x512xf32>
    tpu.vector_store %arg10[%c32_80, %c0_81], %164 {strides = array<i32>} : memref<216x512xf32, #tpu.memory_space<vmem>>, vector<8x512xf32>,
    %c126_i32 = arith.constant 126 : i32
    %166 = tpu.dynamic_rotate %140 by %c126_i32 dim 1 : vector<8x512xf32>, i32 -> vector<8x512xf32>
    %c32_82 = arith.constant 32 : index
    %c0_83 = arith.constant 0 : index
    %167 = vector.load %arg2[%c32_82, %c0_83] : memref<81x512xf32, #tpu.memory_space<vmem>>, vector<1x512xf32>
    %168 = vector.broadcast %167 : vector<1x512xf32> to vector<8x512xf32>
    %169 = arith.mulf %166, %168 : vector<8x512xf32>
    %c40_84 = arith.constant 40 : index
    %c0_85 = arith.constant 0 : index
    %170 = vector.load %arg10[%c40_84, %c0_85] : memref<216x512xf32, #tpu.memory_space<vmem>>, vector<8x512xf32>
    tpu.vector_store %arg10[%c40_84, %c0_85], %169 {strides = array<i32>} : memref<216x512xf32, #tpu.memory_space<vmem>>, vector<8x512xf32>,
    %c114_i32 = arith.constant 114 : i32
    %171 = tpu.dynamic_rotate %140 by %c114_i32 dim 1 : vector<8x512xf32>, i32 -> vector<8x512xf32>
    %c33 = arith.constant 33 : index
    %c0_86 = arith.constant 0 : index
    %172 = vector.load %arg2[%c33, %c0_86] : memref<81x512xf32, #tpu.memory_space<vmem>>, vector<1x512xf32>
    %173 = vector.broadcast %172 : vector<1x512xf32> to vector<8x512xf32>
    %174 = arith.mulf %171, %173 : vector<8x512xf32>
    %c48_87 = arith.constant 48 : index
    %c0_88 = arith.constant 0 : index
    %175 = vector.load %arg10[%c48_87, %c0_88] : memref<216x512xf32, #tpu.memory_space<vmem>>, vector<8x512xf32>
    tpu.vector_store %arg10[%c48_87, %c0_88], %174 {strides = array<i32>} : memref<216x512xf32, #tpu.memory_space<vmem>>, vector<8x512xf32>,
    %c112_i32 = arith.constant 112 : i32
    %176 = tpu.dynamic_rotate %140 by %c112_i32 dim 1 : vector<8x512xf32>, i32 -> vector<8x512xf32>
    %c34 = arith.constant 34 : index
    %c0_89 = arith.constant 0 : index
    %177 = vector.load %arg2[%c34, %c0_89] : memref<81x512xf32, #tpu.memory_space<vmem>>, vector<1x512xf32>
    %178 = vector.broadcast %177 : vector<1x512xf32> to vector<8x512xf32>
    %179 = arith.mulf %176, %178 : vector<8x512xf32>
    %c56_90 = arith.constant 56 : index
    %c0_91 = arith.constant 0 : index
    %180 = vector.load %arg10[%c56_90, %c0_91] : memref<216x512xf32, #tpu.memory_space<vmem>>, vector<8x512xf32>
    tpu.vector_store %arg10[%c56_90, %c0_91], %179 {strides = array<i32>} : memref<216x512xf32, #tpu.memory_space<vmem>>, vector<8x512xf32>,
    %c110_i32 = arith.constant 110 : i32
    %181 = tpu.dynamic_rotate %140 by %c110_i32 dim 1 : vector<8x512xf32>, i32 -> vector<8x512xf32>
    %c35 = arith.constant 35 : index
    %c0_92 = arith.constant 0 : index
    %182 = vector.load %arg2[%c35, %c0_92] : memref<81x512xf32, #tpu.memory_space<vmem>>, vector<1x512xf32>
    %183 = vector.broadcast %182 : vector<1x512xf32> to vector<8x512xf32>
    %184 = arith.mulf %181, %183 : vector<8x512xf32>
    %c64_93 = arith.constant 64 : index
    %c0_94 = arith.constant 0 : index
    %185 = vector.load %arg10[%c64_93, %c0_94] : memref<216x512xf32, #tpu.memory_space<vmem>>, vector<8x512xf32>
    tpu.vector_store %arg10[%c64_93, %c0_94], %184 {strides = array<i32>} : memref<216x512xf32, #tpu.memory_space<vmem>>, vector<8x512xf32>,
    %c18_i32 = arith.constant 18 : i32
    %186 = tpu.dynamic_rotate %140 by %c18_i32 dim 1 : vector<8x512xf32>, i32 -> vector<8x512xf32>
    %c36 = arith.constant 36 : index
    %c0_95 = arith.constant 0 : index
    %187 = vector.load %arg2[%c36, %c0_95] : memref<81x512xf32, #tpu.memory_space<vmem>>, vector<1x512xf32>
    %188 = vector.broadcast %187 : vector<1x512xf32> to vector<8x512xf32>
    %189 = arith.mulf %186, %188 : vector<8x512xf32>
    %c72_96 = arith.constant 72 : index
    %c0_97 = arith.constant 0 : index
    %190 = vector.load %arg10[%c72_96, %c0_97] : memref<216x512xf32, #tpu.memory_space<vmem>>, vector<8x512xf32>
    tpu.vector_store %arg10[%c72_96, %c0_97], %189 {strides = array<i32>} : memref<216x512xf32, #tpu.memory_space<vmem>>, vector<8x512xf32>,
    %c16_i32 = arith.constant 16 : i32
    %191 = tpu.dynamic_rotate %140 by %c16_i32 dim 1 : vector<8x512xf32>, i32 -> vector<8x512xf32>
    %c37 = arith.constant 37 : index
    %c0_98 = arith.constant 0 : index
    %192 = vector.load %arg2[%c37, %c0_98] : memref<81x512xf32, #tpu.memory_space<vmem>>, vector<1x512xf32>
    %193 = vector.broadcast %192 : vector<1x512xf32> to vector<8x512xf32>
    %194 = arith.mulf %191, %193 : vector<8x512xf32>
    %c80_99 = arith.constant 80 : index
    %c0_100 = arith.constant 0 : index
    %195 = vector.load %arg10[%c80_99, %c0_100] : memref<216x512xf32, #tpu.memory_space<vmem>>, vector<8x512xf32>
    tpu.vector_store %arg10[%c80_99, %c0_100], %194 {strides = array<i32>} : memref<216x512xf32, #tpu.memory_space<vmem>>, vector<8x512xf32>,
    %c14_i32 = arith.constant 14 : i32
    %196 = tpu.dynamic_rotate %140 by %c14_i32 dim 1 : vector<8x512xf32>, i32 -> vector<8x512xf32>
    %c38 = arith.constant 38 : index
    %c0_101 = arith.constant 0 : index
    %197 = vector.load %arg2[%c38, %c0_101] : memref<81x512xf32, #tpu.memory_space<vmem>>, vector<1x512xf32>
    %198 = vector.broadcast %197 : vector<1x512xf32> to vector<8x512xf32>
    %199 = arith.mulf %196, %198 : vector<8x512xf32>
    %c88_102 = arith.constant 88 : index
    %c0_103 = arith.constant 0 : index
    %200 = vector.load %arg10[%c88_102, %c0_103] : memref<216x512xf32, #tpu.memory_space<vmem>>, vector<8x512xf32>
    tpu.vector_store %arg10[%c88_102, %c0_103], %199 {strides = array<i32>} : memref<216x512xf32, #tpu.memory_space<vmem>>, vector<8x512xf32>,
    %c2_i32 = arith.constant 2 : i32
    %201 = tpu.dynamic_rotate %140 by %c2_i32 dim 1 : vector<8x512xf32>, i32 -> vector<8x512xf32>
    %c39 = arith.constant 39 : index
    %c0_104 = arith.constant 0 : index
    %202 = vector.load %arg2[%c39, %c0_104] : memref<81x512xf32, #tpu.memory_space<vmem>>, vector<1x512xf32>
    %203 = vector.broadcast %202 : vector<1x512xf32> to vector<8x512xf32>
    %204 = arith.mulf %201, %203 : vector<8x512xf32>
    %c96_105 = arith.constant 96 : index
    %c0_106 = arith.constant 0 : index
    %205 = vector.load %arg10[%c96_105, %c0_106] : memref<216x512xf32, #tpu.memory_space<vmem>>, vector<8x512xf32>
    tpu.vector_store %arg10[%c96_105, %c0_106], %204 {strides = array<i32>} : memref<216x512xf32, #tpu.memory_space<vmem>>, vector<8x512xf32>,
    %c104_107 = arith.constant 104 : index
    %c0_108 = arith.constant 0 : index
    %206 = vector.load %arg10[%c104_107, %c0_108] : memref<216x512xf32, #tpu.memory_space<vmem>>, vector<8x512xf32>
    tpu.vector_store %arg10[%c104_107, %c0_108], %140 {strides = array<i32>} : memref<216x512xf32, #tpu.memory_space<vmem>>, vector<8x512xf32>,
    %c510_i32 = arith.constant 510 : i32
    %207 = tpu.dynamic_rotate %140 by %c510_i32 dim 1 : vector<8x512xf32>, i32 -> vector<8x512xf32>
    %c41 = arith.constant 41 : index
    %c0_109 = arith.constant 0 : index
    %208 = vector.load %arg2[%c41, %c0_109] : memref<81x512xf32, #tpu.memory_space<vmem>>, vector<1x512xf32>
    %209 = vector.broadcast %208 : vector<1x512xf32> to vector<8x512xf32>
    %210 = arith.mulf %207, %209 : vector<8x512xf32>
    %c112_110 = arith.constant 112 : index
    %c0_111 = arith.constant 0 : index
    %211 = vector.load %arg10[%c112_110, %c0_111] : memref<216x512xf32, #tpu.memory_space<vmem>>, vector<8x512xf32>
    tpu.vector_store %arg10[%c112_110, %c0_111], %210 {strides = array<i32>} : memref<216x512xf32, #tpu.memory_space<vmem>>, vector<8x512xf32>,
    %c498_i32 = arith.constant 498 : i32
    %212 = tpu.dynamic_rotate %140 by %c498_i32 dim 1 : vector<8x512xf32>, i32 -> vector<8x512xf32>
    %c42 = arith.constant 42 : index
    %c0_112 = arith.constant 0 : index
    %213 = vector.load %arg2[%c42, %c0_112] : memref<81x512xf32, #tpu.memory_space<vmem>>, vector<1x512xf32>
    %214 = vector.broadcast %213 : vector<1x512xf32> to vector<8x512xf32>
    %215 = arith.mulf %212, %214 : vector<8x512xf32>
    %c120_113 = arith.constant 120 : index
    %c0_114 = arith.constant 0 : index
    %216 = vector.load %arg10[%c120_113, %c0_114] : memref<216x512xf32, #tpu.memory_space<vmem>>, vector<8x512xf32>
    tpu.vector_store %arg10[%c120_113, %c0_114], %215 {strides = array<i32>} : memref<216x512xf32, #tpu.memory_space<vmem>>, vector<8x512xf32>,
    %c496_i32 = arith.constant 496 : i32
    %217 = tpu.dynamic_rotate %140 by %c496_i32 dim 1 : vector<8x512xf32>, i32 -> vector<8x512xf32>
    %c43 = arith.constant 43 : index
    %c0_115 = arith.constant 0 : index
    %218 = vector.load %arg2[%c43, %c0_115] : memref<81x512xf32, #tpu.memory_space<vmem>>, vector<1x512xf32>
    %219 = vector.broadcast %218 : vector<1x512xf32> to vector<8x512xf32>
    %220 = arith.mulf %217, %219 : vector<8x512xf32>
    %c128_116 = arith.constant 128 : index
    %c0_117 = arith.constant 0 : index
    %221 = vector.load %arg10[%c128_116, %c0_117] : memref<216x512xf32, #tpu.memory_space<vmem>>, vector<8x512xf32>
    tpu.vector_store %arg10[%c128_116, %c0_117], %220 {strides = array<i32>} : memref<216x512xf32, #tpu.memory_space<vmem>>, vector<8x512xf32>,
    %c494_i32 = arith.constant 494 : i32
    %222 = tpu.dynamic_rotate %140 by %c494_i32 dim 1 : vector<8x512xf32>, i32 -> vector<8x512xf32>
    %c44 = arith.constant 44 : index
    %c0_118 = arith.constant 0 : index
    %223 = vector.load %arg2[%c44, %c0_118] : memref<81x512xf32, #tpu.memory_space<vmem>>, vector<1x512xf32>
    %224 = vector.broadcast %223 : vector<1x512xf32> to vector<8x512xf32>
    %225 = arith.mulf %222, %224 : vector<8x512xf32>
    %c136_119 = arith.constant 136 : index
    %c0_120 = arith.constant 0 : index
    %226 = vector.load %arg10[%c136_119, %c0_120] : memref<216x512xf32, #tpu.memory_space<vmem>>, vector<8x512xf32>
    tpu.vector_store %arg10[%c136_119, %c0_120], %225 {strides = array<i32>} : memref<216x512xf32, #tpu.memory_space<vmem>>, vector<8x512xf32>,
    %c402_i32 = arith.constant 402 : i32
    %227 = tpu.dynamic_rotate %140 by %c402_i32 dim 1 : vector<8x512xf32>, i32 -> vector<8x512xf32>
    %c45 = arith.constant 45 : index
    %c0_121 = arith.constant 0 : index
    %228 = vector.load %arg2[%c45, %c0_121] : memref<81x512xf32, #tpu.memory_space<vmem>>, vector<1x512xf32>
    %229 = vector.broadcast %228 : vector<1x512xf32> to vector<8x512xf32>
    %230 = arith.mulf %227, %229 : vector<8x512xf32>
    %c144_122 = arith.constant 144 : index
    %c0_123 = arith.constant 0 : index
    %231 = vector.load %arg10[%c144_122, %c0_123] : memref<216x512xf32, #tpu.memory_space<vmem>>, vector<8x512xf32>
    tpu.vector_store %arg10[%c144_122, %c0_123], %230 {strides = array<i32>} : memref<216x512xf32, #tpu.memory_space<vmem>>, vector<8x512xf32>,
    %c400_i32 = arith.constant 400 : i32
    %232 = tpu.dynamic_rotate %140 by %c400_i32 dim 1 : vector<8x512xf32>, i32 -> vector<8x512xf32>
    %c46 = arith.constant 46 : index
    %c0_124 = arith.constant 0 : index
    %233 = vector.load %arg2[%c46, %c0_124] : memref<81x512xf32, #tpu.memory_space<vmem>>, vector<1x512xf32>
    %234 = vector.broadcast %233 : vector<1x512xf32> to vector<8x512xf32>
    %235 = arith.mulf %232, %234 : vector<8x512xf32>
    %c152_125 = arith.constant 152 : index
    %c0_126 = arith.constant 0 : index
    %236 = vector.load %arg10[%c152_125, %c0_126] : memref<216x512xf32, #tpu.memory_space<vmem>>, vector<8x512xf32>
    tpu.vector_store %arg10[%c152_125, %c0_126], %235 {strides = array<i32>} : memref<216x512xf32, #tpu.memory_space<vmem>>, vector<8x512xf32>,
    %c398_i32 = arith.constant 398 : i32
    %237 = tpu.dynamic_rotate %140 by %c398_i32 dim 1 : vector<8x512xf32>, i32 -> vector<8x512xf32>
    %c47 = arith.constant 47 : index
    %c0_127 = arith.constant 0 : index
    %238 = vector.load %arg2[%c47, %c0_127] : memref<81x512xf32, #tpu.memory_space<vmem>>, vector<1x512xf32>
    %239 = vector.broadcast %238 : vector<1x512xf32> to vector<8x512xf32>
    %240 = arith.mulf %237, %239 : vector<8x512xf32>
    %c160_128 = arith.constant 160 : index
    %c0_129 = arith.constant 0 : index
    %241 = vector.load %arg10[%c160_128, %c0_129] : memref<216x512xf32, #tpu.memory_space<vmem>>, vector<8x512xf32>
    tpu.vector_store %arg10[%c160_128, %c0_129], %240 {strides = array<i32>} : memref<216x512xf32, #tpu.memory_space<vmem>>, vector<8x512xf32>,
    %c386_i32 = arith.constant 386 : i32
    %242 = tpu.dynamic_rotate %140 by %c386_i32 dim 1 : vector<8x512xf32>, i32 -> vector<8x512xf32>
    %c48_130 = arith.constant 48 : index
    %c0_131 = arith.constant 0 : index
    %243 = vector.load %arg2[%c48_130, %c0_131] : memref<81x512xf32, #tpu.memory_space<vmem>>, vector<1x512xf32>
    %244 = vector.broadcast %243 : vector<1x512xf32> to vector<8x512xf32>
    %245 = arith.mulf %242, %244 : vector<8x512xf32>
    %c168_132 = arith.constant 168 : index
    %c0_133 = arith.constant 0 : index
    %246 = vector.load %arg10[%c168_132, %c0_133] : memref<216x512xf32, #tpu.memory_space<vmem>>, vector<8x512xf32>
    tpu.vector_store %arg10[%c168_132, %c0_133], %245 {strides = array<i32>} : memref<216x512xf32, #tpu.memory_space<vmem>>, vector<8x512xf32>,
    %c384_i32 = arith.constant 384 : i32
    %247 = tpu.dynamic_rotate %140 by %c384_i32 dim 1 : vector<8x512xf32>, i32 -> vector<8x512xf32>
    %c49 = arith.constant 49 : index
    %c0_134 = arith.constant 0 : index
    %248 = vector.load %arg2[%c49, %c0_134] : memref<81x512xf32, #tpu.memory_space<vmem>>, vector<1x512xf32>
    %249 = vector.broadcast %248 : vector<1x512xf32> to vector<8x512xf32>
    %250 = arith.mulf %247, %249 : vector<8x512xf32>
    %c176_135 = arith.constant 176 : index
    %c0_136 = arith.constant 0 : index
    %251 = vector.load %arg10[%c176_135, %c0_136] : memref<216x512xf32, #tpu.memory_space<vmem>>, vector<8x512xf32>
    tpu.vector_store %arg10[%c176_135, %c0_136], %250 {strides = array<i32>} : memref<216x512xf32, #tpu.memory_space<vmem>>, vector<8x512xf32>,
    %c382_i32 = arith.constant 382 : i32
    %252 = tpu.dynamic_rotate %140 by %c382_i32 dim 1 : vector<8x512xf32>, i32 -> vector<8x512xf32>
    %c50 = arith.constant 50 : index
    %c0_137 = arith.constant 0 : index
    %253 = vector.load %arg2[%c50, %c0_137] : memref<81x512xf32, #tpu.memory_space<vmem>>, vector<1x512xf32>
    %254 = vector.broadcast %253 : vector<1x512xf32> to vector<8x512xf32>
    %255 = arith.mulf %252, %254 : vector<8x512xf32>
    %c184_138 = arith.constant 184 : index
    %c0_139 = arith.constant 0 : index
    %256 = vector.load %arg10[%c184_138, %c0_139] : memref<216x512xf32, #tpu.memory_space<vmem>>, vector<8x512xf32>
    tpu.vector_store %arg10[%c184_138, %c0_139], %255 {strides = array<i32>} : memref<216x512xf32, #tpu.memory_space<vmem>>, vector<8x512xf32>,
    %c370_i32 = arith.constant 370 : i32
    %257 = tpu.dynamic_rotate %140 by %c370_i32 dim 1 : vector<8x512xf32>, i32 -> vector<8x512xf32>
    %c51 = arith.constant 51 : index
    %c0_140 = arith.constant 0 : index
    %258 = vector.load %arg2[%c51, %c0_140] : memref<81x512xf32, #tpu.memory_space<vmem>>, vector<1x512xf32>
    %259 = vector.broadcast %258 : vector<1x512xf32> to vector<8x512xf32>
    %260 = arith.mulf %257, %259 : vector<8x512xf32>
    %c192_141 = arith.constant 192 : index
    %c0_142 = arith.constant 0 : index
    %261 = vector.load %arg10[%c192_141, %c0_142] : memref<216x512xf32, #tpu.memory_space<vmem>>, vector<8x512xf32>
    tpu.vector_store %arg10[%c192_141, %c0_142], %260 {strides = array<i32>} : memref<216x512xf32, #tpu.memory_space<vmem>>, vector<8x512xf32>,
    %c368_i32 = arith.constant 368 : i32
    %262 = tpu.dynamic_rotate %140 by %c368_i32 dim 1 : vector<8x512xf32>, i32 -> vector<8x512xf32>
    %c52 = arith.constant 52 : index
    %c0_143 = arith.constant 0 : index
    %263 = vector.load %arg2[%c52, %c0_143] : memref<81x512xf32, #tpu.memory_space<vmem>>, vector<1x512xf32>
    %264 = vector.broadcast %263 : vector<1x512xf32> to vector<8x512xf32>
    %265 = arith.mulf %262, %264 : vector<8x512xf32>
    %c200_144 = arith.constant 200 : index
    %c0_145 = arith.constant 0 : index
    %266 = vector.load %arg10[%c200_144, %c0_145] : memref<216x512xf32, #tpu.memory_space<vmem>>, vector<8x512xf32>
    tpu.vector_store %arg10[%c200_144, %c0_145], %265 {strides = array<i32>} : memref<216x512xf32, #tpu.memory_space<vmem>>, vector<8x512xf32>,
    %c366_i32 = arith.constant 366 : i32
    %267 = tpu.dynamic_rotate %140 by %c366_i32 dim 1 : vector<8x512xf32>, i32 -> vector<8x512xf32>
    %c53 = arith.constant 53 : index
    %c0_146 = arith.constant 0 : index
    %268 = vector.load %arg2[%c53, %c0_146] : memref<81x512xf32, #tpu.memory_space<vmem>>, vector<1x512xf32>
    %269 = vector.broadcast %268 : vector<1x512xf32> to vector<8x512xf32>
    %270 = arith.mulf %267, %269 : vector<8x512xf32>
    %c208_147 = arith.constant 208 : index
    %c0_148 = arith.constant 0 : index
    %271 = vector.load %arg10[%c208_147, %c0_148] : memref<216x512xf32, #tpu.memory_space<vmem>>, vector<8x512xf32>
    tpu.vector_store %arg10[%c208_147, %c0_148], %270 {strides = array<i32>} : memref<216x512xf32, #tpu.memory_space<vmem>>, vector<8x512xf32>,
    %c0_149 = arith.constant 0 : index
    %c0_150 = arith.constant 0 : index
    %272 = vector.load %arg5[%c0_149, %c0_150] : memref<8x216xf32, #tpu.memory_space<vmem>>, vector<8x216xf32>
    %c0_151 = arith.constant 0 : index
    %c0_152 = arith.constant 0 : index
    %273 = vector.load %arg10[%c0_151, %c0_152] : memref<216x512xf32, #tpu.memory_space<vmem>>, vector<216x512xf32>
    %cst_153 = arith.constant dense<0.000000e+00> : vector<8x512xf32>
    %274 = tpu.matmul %272, %273, %cst_153 {dimension_numbers = #tpu.dot_dimension_numbers<[1], [0], [0], [1], [0, 0, 1, 1], [], []>} : vector<8x216xf32>, vector<216x512xf32>, vector<8x512xf32> -> vector<8x512xf32>
    %c0_154 = arith.constant 0 : index
    %c0_155 = arith.constant 0 : index
    %275 = vector.load %arg6[%c0_154, %c0_155] : memref<8x1xf32, #tpu.memory_space<vmem>>, vector<8x1xf32>
    %276 = vector.broadcast %275 : vector<8x1xf32> to vector<8x512xf32>
    %277 = arith.addf %274, %276 : vector<8x512xf32>
    %cst_156 = arith.constant 0.000000e+00 : f32
    %278 = vector.broadcast %cst_156 : f32 to vector<8x512xf32>
    %279 = arith.maximumf %277, %278 : vector<8x512xf32>
    %c365_i32 = arith.constant 365 : i32
    %280 = tpu.dynamic_rotate %279 by %c365_i32 dim 1 : vector<8x512xf32>, i32 -> vector<8x512xf32>
    %c54 = arith.constant 54 : index
    %c0_157 = arith.constant 0 : index
    %281 = vector.load %arg2[%c54, %c0_157] : memref<81x512xf32, #tpu.memory_space<vmem>>, vector<1x512xf32>
    %282 = vector.broadcast %281 : vector<1x512xf32> to vector<8x512xf32>
    %283 = arith.mulf %280, %282 : vector<8x512xf32>
    %c0_158 = arith.constant 0 : index
    %c0_159 = arith.constant 0 : index
    %284 = vector.load %arg10[%c0_158, %c0_159] : memref<216x512xf32, #tpu.memory_space<vmem>>, vector<8x512xf32>
    tpu.vector_store %arg10[%c0_158, %c0_159], %283 {strides = array<i32>} : memref<216x512xf32, #tpu.memory_space<vmem>>, vector<8x512xf32>,
    %c360_i32 = arith.constant 360 : i32
    %285 = tpu.dynamic_rotate %279 by %c360_i32 dim 1 : vector<8x512xf32>, i32 -> vector<8x512xf32>
    %c55 = arith.constant 55 : index
    %c0_160 = arith.constant 0 : index
    %286 = vector.load %arg2[%c55, %c0_160] : memref<81x512xf32, #tpu.memory_space<vmem>>, vector<1x512xf32>
    %287 = vector.broadcast %286 : vector<1x512xf32> to vector<8x512xf32>
    %288 = arith.mulf %285, %287 : vector<8x512xf32>
    %c8_161 = arith.constant 8 : index
    %c0_162 = arith.constant 0 : index
    %289 = vector.load %arg10[%c8_161, %c0_162] : memref<216x512xf32, #tpu.memory_space<vmem>>, vector<8x512xf32>
    tpu.vector_store %arg10[%c8_161, %c0_162], %288 {strides = array<i32>} : memref<216x512xf32, #tpu.memory_space<vmem>>, vector<8x512xf32>,
    %c355_i32 = arith.constant 355 : i32
    %290 = tpu.dynamic_rotate %279 by %c355_i32 dim 1 : vector<8x512xf32>, i32 -> vector<8x512xf32>
    %c56_163 = arith.constant 56 : index
    %c0_164 = arith.constant 0 : index
    %291 = vector.load %arg2[%c56_163, %c0_164] : memref<81x512xf32, #tpu.memory_space<vmem>>, vector<1x512xf32>
    %292 = vector.broadcast %291 : vector<1x512xf32> to vector<8x512xf32>
    %293 = arith.mulf %290, %292 : vector<8x512xf32>
    %c16_165 = arith.constant 16 : index
    %c0_166 = arith.constant 0 : index
    %294 = vector.load %arg10[%c16_165, %c0_166] : memref<216x512xf32, #tpu.memory_space<vmem>>, vector<8x512xf32>
    tpu.vector_store %arg10[%c16_165, %c0_166], %293 {strides = array<i32>} : memref<216x512xf32, #tpu.memory_space<vmem>>, vector<8x512xf32>,
    %c325_i32 = arith.constant 325 : i32
    %295 = tpu.dynamic_rotate %279 by %c325_i32 dim 1 : vector<8x512xf32>, i32 -> vector<8x512xf32>
    %c57 = arith.constant 57 : index
    %c0_167 = arith.constant 0 : index
    %296 = vector.load %arg2[%c57, %c0_167] : memref<81x512xf32, #tpu.memory_space<vmem>>, vector<1x512xf32>
    %297 = vector.broadcast %296 : vector<1x512xf32> to vector<8x512xf32>
    %298 = arith.mulf %295, %297 : vector<8x512xf32>
    %c24_168 = arith.constant 24 : index
    %c0_169 = arith.constant 0 : index
    %299 = vector.load %arg10[%c24_168, %c0_169] : memref<216x512xf32, #tpu.memory_space<vmem>>, vector<8x512xf32>
    tpu.vector_store %arg10[%c24_168, %c0_169], %298 {strides = array<i32>} : memref<216x512xf32, #tpu.memory_space<vmem>>, vector<8x512xf32>,
    %c320_i32 = arith.constant 320 : i32
    %300 = tpu.dynamic_rotate %279 by %c320_i32 dim 1 : vector<8x512xf32>, i32 -> vector<8x512xf32>
    %c58 = arith.constant 58 : index
    %c0_170 = arith.constant 0 : index
    %301 = vector.load %arg2[%c58, %c0_170] : memref<81x512xf32, #tpu.memory_space<vmem>>, vector<1x512xf32>
    %302 = vector.broadcast %301 : vector<1x512xf32> to vector<8x512xf32>
    %303 = arith.mulf %300, %302 : vector<8x512xf32>
    %c32_171 = arith.constant 32 : index
    %c0_172 = arith.constant 0 : index
    %304 = vector.load %arg10[%c32_171, %c0_172] : memref<216x512xf32, #tpu.memory_space<vmem>>, vector<8x512xf32>
    tpu.vector_store %arg10[%c32_171, %c0_172], %303 {strides = array<i32>} : memref<216x512xf32, #tpu.memory_space<vmem>>, vector<8x512xf32>,
    %c315_i32 = arith.constant 315 : i32
    %305 = tpu.dynamic_rotate %279 by %c315_i32 dim 1 : vector<8x512xf32>, i32 -> vector<8x512xf32>
    %c59 = arith.constant 59 : index
    %c0_173 = arith.constant 0 : index
    %306 = vector.load %arg2[%c59, %c0_173] : memref<81x512xf32, #tpu.memory_space<vmem>>, vector<1x512xf32>
    %307 = vector.broadcast %306 : vector<1x512xf32> to vector<8x512xf32>
    %308 = arith.mulf %305, %307 : vector<8x512xf32>
    %c40_174 = arith.constant 40 : index
    %c0_175 = arith.constant 0 : index
    %309 = vector.load %arg10[%c40_174, %c0_175] : memref<216x512xf32, #tpu.memory_space<vmem>>, vector<8x512xf32>
    tpu.vector_store %arg10[%c40_174, %c0_175], %308 {strides = array<i32>} : memref<216x512xf32, #tpu.memory_space<vmem>>, vector<8x512xf32>,
    %c285_i32 = arith.constant 285 : i32
    %310 = tpu.dynamic_rotate %279 by %c285_i32 dim 1 : vector<8x512xf32>, i32 -> vector<8x512xf32>
    %c60 = arith.constant 60 : index
    %c0_176 = arith.constant 0 : index
    %311 = vector.load %arg2[%c60, %c0_176] : memref<81x512xf32, #tpu.memory_space<vmem>>, vector<1x512xf32>
    %312 = vector.broadcast %311 : vector<1x512xf32> to vector<8x512xf32>
    %313 = arith.mulf %310, %312 : vector<8x512xf32>
    %c48_177 = arith.constant 48 : index
    %c0_178 = arith.constant 0 : index
    %314 = vector.load %arg10[%c48_177, %c0_178] : memref<216x512xf32, #tpu.memory_space<vmem>>, vector<8x512xf32>
    tpu.vector_store %arg10[%c48_177, %c0_178], %313 {strides = array<i32>} : memref<216x512xf32, #tpu.memory_space<vmem>>, vector<8x512xf32>,
    %c280_i32 = arith.constant 280 : i32
    %315 = tpu.dynamic_rotate %279 by %c280_i32 dim 1 : vector<8x512xf32>, i32 -> vector<8x512xf32>
    %c61 = arith.constant 61 : index
    %c0_179 = arith.constant 0 : index
    %316 = vector.load %arg2[%c61, %c0_179] : memref<81x512xf32, #tpu.memory_space<vmem>>, vector<1x512xf32>
    %317 = vector.broadcast %316 : vector<1x512xf32> to vector<8x512xf32>
    %318 = arith.mulf %315, %317 : vector<8x512xf32>
    %c56_180 = arith.constant 56 : index
    %c0_181 = arith.constant 0 : index
    %319 = vector.load %arg10[%c56_180, %c0_181] : memref<216x512xf32, #tpu.memory_space<vmem>>, vector<8x512xf32>
    tpu.vector_store %arg10[%c56_180, %c0_181], %318 {strides = array<i32>} : memref<216x512xf32, #tpu.memory_space<vmem>>, vector<8x512xf32>,
    %c275_i32 = arith.constant 275 : i32
    %320 = tpu.dynamic_rotate %279 by %c275_i32 dim 1 : vector<8x512xf32>, i32 -> vector<8x512xf32>
    %c62 = arith.constant 62 : index
    %c0_182 = arith.constant 0 : index
    %321 = vector.load %arg2[%c62, %c0_182] : memref<81x512xf32, #tpu.memory_space<vmem>>, vector<1x512xf32>
    %322 = vector.broadcast %321 : vector<1x512xf32> to vector<8x512xf32>
    %323 = arith.mulf %320, %322 : vector<8x512xf32>
    %c64_183 = arith.constant 64 : index
    %c0_184 = arith.constant 0 : index
    %324 = vector.load %arg10[%c64_183, %c0_184] : memref<216x512xf32, #tpu.memory_space<vmem>>, vector<8x512xf32>
    tpu.vector_store %arg10[%c64_183, %c0_184], %323 {strides = array<i32>} : memref<216x512xf32, #tpu.memory_space<vmem>>, vector<8x512xf32>,
    %c45_i32 = arith.constant 45 : i32
    %325 = tpu.dynamic_rotate %279 by %c45_i32 dim 1 : vector<8x512xf32>, i32 -> vector<8x512xf32>
    %c63 = arith.constant 63 : index
    %c0_185 = arith.constant 0 : index
    %326 = vector.load %arg2[%c63, %c0_185] : memref<81x512xf32, #tpu.memory_space<vmem>>, vector<1x512xf32>
    %327 = vector.broadcast %326 : vector<1x512xf32> to vector<8x512xf32>
    %328 = arith.mulf %325, %327 : vector<8x512xf32>
    %c72_186 = arith.constant 72 : index
    %c0_187 = arith.constant 0 : index
    %329 = vector.load %arg10[%c72_186, %c0_187] : memref<216x512xf32, #tpu.memory_space<vmem>>, vector<8x512xf32>
    tpu.vector_store %arg10[%c72_186, %c0_187], %328 {strides = array<i32>} : memref<216x512xf32, #tpu.memory_space<vmem>>, vector<8x512xf32>,
    %c40_i32 = arith.constant 40 : i32
    %330 = tpu.dynamic_rotate %279 by %c40_i32 dim 1 : vector<8x512xf32>, i32 -> vector<8x512xf32>
    %c64_188 = arith.constant 64 : index
    %c0_189 = arith.constant 0 : index
    %331 = vector.load %arg2[%c64_188, %c0_189] : memref<81x512xf32, #tpu.memory_space<vmem>>, vector<1x512xf32>
    %332 = vector.broadcast %331 : vector<1x512xf32> to vector<8x512xf32>
    %333 = arith.mulf %330, %332 : vector<8x512xf32>
    %c80_190 = arith.constant 80 : index
    %c0_191 = arith.constant 0 : index
    %334 = vector.load %arg10[%c80_190, %c0_191] : memref<216x512xf32, #tpu.memory_space<vmem>>, vector<8x512xf32>
    tpu.vector_store %arg10[%c80_190, %c0_191], %333 {strides = array<i32>} : memref<216x512xf32, #tpu.memory_space<vmem>>, vector<8x512xf32>,
    %c35_i32 = arith.constant 35 : i32
    %335 = tpu.dynamic_rotate %279 by %c35_i32 dim 1 : vector<8x512xf32>, i32 -> vector<8x512xf32>
    %c65 = arith.constant 65 : index
    %c0_192 = arith.constant 0 : index
    %336 = vector.load %arg2[%c65, %c0_192] : memref<81x512xf32, #tpu.memory_space<vmem>>, vector<1x512xf32>
    %337 = vector.broadcast %336 : vector<1x512xf32> to vector<8x512xf32>
    %338 = arith.mulf %335, %337 : vector<8x512xf32>
    %c88_193 = arith.constant 88 : index
    %c0_194 = arith.constant 0 : index
    %339 = vector.load %arg10[%c88_193, %c0_194] : memref<216x512xf32, #tpu.memory_space<vmem>>, vector<8x512xf32>
    tpu.vector_store %arg10[%c88_193, %c0_194], %338 {strides = array<i32>} : memref<216x512xf32, #tpu.memory_space<vmem>>, vector<8x512xf32>,
    %c5_i32 = arith.constant 5 : i32
    %340 = tpu.dynamic_rotate %279 by %c5_i32 dim 1 : vector<8x512xf32>, i32 -> vector<8x512xf32>
    %c66 = arith.constant 66 : index
    %c0_195 = arith.constant 0 : index
    %341 = vector.load %arg2[%c66, %c0_195] : memref<81x512xf32, #tpu.memory_space<vmem>>, vector<1x512xf32>
    %342 = vector.broadcast %341 : vector<1x512xf32> to vector<8x512xf32>
    %343 = arith.mulf %340, %342 : vector<8x512xf32>
    %c96_196 = arith.constant 96 : index
    %c0_197 = arith.constant 0 : index
    %344 = vector.load %arg10[%c96_196, %c0_197] : memref<216x512xf32, #tpu.memory_space<vmem>>, vector<8x512xf32>
    tpu.vector_store %arg10[%c96_196, %c0_197], %343 {strides = array<i32>} : memref<216x512xf32, #tpu.memory_space<vmem>>, vector<8x512xf32>,
    %c104_198 = arith.constant 104 : index
    %c0_199 = arith.constant 0 : index
    %345 = vector.load %arg10[%c104_198, %c0_199] : memref<216x512xf32, #tpu.memory_space<vmem>>, vector<8x512xf32>
    tpu.vector_store %arg10[%c104_198, %c0_199], %279 {strides = array<i32>} : memref<216x512xf32, #tpu.memory_space<vmem>>, vector<8x512xf32>,
    %c507_i32 = arith.constant 507 : i32
    %346 = tpu.dynamic_rotate %279 by %c507_i32 dim 1 : vector<8x512xf32>, i32 -> vector<8x512xf32>
    %c68 = arith.constant 68 : index
    %c0_200 = arith.constant 0 : index
    %347 = vector.load %arg2[%c68, %c0_200] : memref<81x512xf32, #tpu.memory_space<vmem>>, vector<1x512xf32>
    %348 = vector.broadcast %347 : vector<1x512xf32> to vector<8x512xf32>
    %349 = arith.mulf %346, %348 : vector<8x512xf32>
    %c112_201 = arith.constant 112 : index
    %c0_202 = arith.constant 0 : index
    %350 = vector.load %arg10[%c112_201, %c0_202] : memref<216x512xf32, #tpu.memory_space<vmem>>, vector<8x512xf32>
    tpu.vector_store %arg10[%c112_201, %c0_202], %349 {strides = array<i32>} : memref<216x512xf32, #tpu.memory_space<vmem>>, vector<8x512xf32>,
    %c477_i32 = arith.constant 477 : i32
    %351 = tpu.dynamic_rotate %279 by %c477_i32 dim 1 : vector<8x512xf32>, i32 -> vector<8x512xf32>
    %c69 = arith.constant 69 : index
    %c0_203 = arith.constant 0 : index
    %352 = vector.load %arg2[%c69, %c0_203] : memref<81x512xf32, #tpu.memory_space<vmem>>, vector<1x512xf32>
    %353 = vector.broadcast %352 : vector<1x512xf32> to vector<8x512xf32>
    %354 = arith.mulf %351, %353 : vector<8x512xf32>
    %c120_204 = arith.constant 120 : index
    %c0_205 = arith.constant 0 : index
    %355 = vector.load %arg10[%c120_204, %c0_205] : memref<216x512xf32, #tpu.memory_space<vmem>>, vector<8x512xf32>
    tpu.vector_store %arg10[%c120_204, %c0_205], %354 {strides = array<i32>} : memref<216x512xf32, #tpu.memory_space<vmem>>, vector<8x512xf32>,
    %c472_i32 = arith.constant 472 : i32
    %356 = tpu.dynamic_rotate %279 by %c472_i32 dim 1 : vector<8x512xf32>, i32 -> vector<8x512xf32>
    %c70 = arith.constant 70 : index
    %c0_206 = arith.constant 0 : index
    %357 = vector.load %arg2[%c70, %c0_206] : memref<81x512xf32, #tpu.memory_space<vmem>>, vector<1x512xf32>
    %358 = vector.broadcast %357 : vector<1x512xf32> to vector<8x512xf32>
    %359 = arith.mulf %356, %358 : vector<8x512xf32>
    %c128_207 = arith.constant 128 : index
    %c0_208 = arith.constant 0 : index
    %360 = vector.load %arg10[%c128_207, %c0_208] : memref<216x512xf32, #tpu.memory_space<vmem>>, vector<8x512xf32>
    tpu.vector_store %arg10[%c128_207, %c0_208], %359 {strides = array<i32>} : memref<216x512xf32, #tpu.memory_space<vmem>>, vector<8x512xf32>,
    %c467_i32 = arith.constant 467 : i32
    %361 = tpu.dynamic_rotate %279 by %c467_i32 dim 1 : vector<8x512xf32>, i32 -> vector<8x512xf32>
    %c71 = arith.constant 71 : index
    %c0_209 = arith.constant 0 : index
    %362 = vector.load %arg2[%c71, %c0_209] : memref<81x512xf32, #tpu.memory_space<vmem>>, vector<1x512xf32>
    %363 = vector.broadcast %362 : vector<1x512xf32> to vector<8x512xf32>
    %364 = arith.mulf %361, %363 : vector<8x512xf32>
    %c136_210 = arith.constant 136 : index
    %c0_211 = arith.constant 0 : index
    %365 = vector.load %arg10[%c136_210, %c0_211] : memref<216x512xf32, #tpu.memory_space<vmem>>, vector<8x512xf32>
    tpu.vector_store %arg10[%c136_210, %c0_211], %364 {strides = array<i32>} : memref<216x512xf32, #tpu.memory_space<vmem>>, vector<8x512xf32>,
    %c237_i32 = arith.constant 237 : i32
    %366 = tpu.dynamic_rotate %279 by %c237_i32 dim 1 : vector<8x512xf32>, i32 -> vector<8x512xf32>
    %c72_212 = arith.constant 72 : index
    %c0_213 = arith.constant 0 : index
    %367 = vector.load %arg2[%c72_212, %c0_213] : memref<81x512xf32, #tpu.memory_space<vmem>>, vector<1x512xf32>
    %368 = vector.broadcast %367 : vector<1x512xf32> to vector<8x512xf32>
    %369 = arith.mulf %366, %368 : vector<8x512xf32>
    %c144_214 = arith.constant 144 : index
    %c0_215 = arith.constant 0 : index
    %370 = vector.load %arg10[%c144_214, %c0_215] : memref<216x512xf32, #tpu.memory_space<vmem>>, vector<8x512xf32>
    tpu.vector_store %arg10[%c144_214, %c0_215], %369 {strides = array<i32>} : memref<216x512xf32, #tpu.memory_space<vmem>>, vector<8x512xf32>,
    %c232_i32 = arith.constant 232 : i32
    %371 = tpu.dynamic_rotate %279 by %c232_i32 dim 1 : vector<8x512xf32>, i32 -> vector<8x512xf32>
    %c73 = arith.constant 73 : index
    %c0_216 = arith.constant 0 : index
    %372 = vector.load %arg2[%c73, %c0_216] : memref<81x512xf32, #tpu.memory_space<vmem>>, vector<1x512xf32>
    %373 = vector.broadcast %372 : vector<1x512xf32> to vector<8x512xf32>
    %374 = arith.mulf %371, %373 : vector<8x512xf32>
    %c152_217 = arith.constant 152 : index
    %c0_218 = arith.constant 0 : index
    %375 = vector.load %arg10[%c152_217, %c0_218] : memref<216x512xf32, #tpu.memory_space<vmem>>, vector<8x512xf32>
    tpu.vector_store %arg10[%c152_217, %c0_218], %374 {strides = array<i32>} : memref<216x512xf32, #tpu.memory_space<vmem>>, vector<8x512xf32>,
    %c227_i32 = arith.constant 227 : i32
    %376 = tpu.dynamic_rotate %279 by %c227_i32 dim 1 : vector<8x512xf32>, i32 -> vector<8x512xf32>
    %c74 = arith.constant 74 : index
    %c0_219 = arith.constant 0 : index
    %377 = vector.load %arg2[%c74, %c0_219] : memref<81x512xf32, #tpu.memory_space<vmem>>, vector<1x512xf32>
    %378 = vector.broadcast %377 : vector<1x512xf32> to vector<8x512xf32>
    %379 = arith.mulf %376, %378 : vector<8x512xf32>
    %c160_220 = arith.constant 160 : index
    %c0_221 = arith.constant 0 : index
    %380 = vector.load %arg10[%c160_220, %c0_221] : memref<216x512xf32, #tpu.memory_space<vmem>>, vector<8x512xf32>
    tpu.vector_store %arg10[%c160_220, %c0_221], %379 {strides = array<i32>} : memref<216x512xf32, #tpu.memory_space<vmem>>, vector<8x512xf32>,
    %c197_i32 = arith.constant 197 : i32
    %381 = tpu.dynamic_rotate %279 by %c197_i32 dim 1 : vector<8x512xf32>, i32 -> vector<8x512xf32>
    %c75 = arith.constant 75 : index
    %c0_222 = arith.constant 0 : index
    %382 = vector.load %arg2[%c75, %c0_222] : memref<81x512xf32, #tpu.memory_space<vmem>>, vector<1x512xf32>
    %383 = vector.broadcast %382 : vector<1x512xf32> to vector<8x512xf32>
    %384 = arith.mulf %381, %383 : vector<8x512xf32>
    %c168_223 = arith.constant 168 : index
    %c0_224 = arith.constant 0 : index
    %385 = vector.load %arg10[%c168_223, %c0_224] : memref<216x512xf32, #tpu.memory_space<vmem>>, vector<8x512xf32>
    tpu.vector_store %arg10[%c168_223, %c0_224], %384 {strides = array<i32>} : memref<216x512xf32, #tpu.memory_space<vmem>>, vector<8x512xf32>,
    %c192_i32 = arith.constant 192 : i32
    %386 = tpu.dynamic_rotate %279 by %c192_i32 dim 1 : vector<8x512xf32>, i32 -> vector<8x512xf32>
    %c76 = arith.constant 76 : index
    %c0_225 = arith.constant 0 : index
    %387 = vector.load %arg2[%c76, %c0_225] : memref<81x512xf32, #tpu.memory_space<vmem>>, vector<1x512xf32>
    %388 = vector.broadcast %387 : vector<1x512xf32> to vector<8x512xf32>
    %389 = arith.mulf %386, %388 : vector<8x512xf32>
    %c176_226 = arith.constant 176 : index
    %c0_227 = arith.constant 0 : index
    %390 = vector.load %arg10[%c176_226, %c0_227] : memref<216x512xf32, #tpu.memory_space<vmem>>, vector<8x512xf32>
    tpu.vector_store %arg10[%c176_226, %c0_227], %389 {strides = array<i32>} : memref<216x512xf32, #tpu.memory_space<vmem>>, vector<8x512xf32>,
    %c187_i32 = arith.constant 187 : i32
    %391 = tpu.dynamic_rotate %279 by %c187_i32 dim 1 : vector<8x512xf32>, i32 -> vector<8x512xf32>
    %c77 = arith.constant 77 : index
    %c0_228 = arith.constant 0 : index
    %392 = vector.load %arg2[%c77, %c0_228] : memref<81x512xf32, #tpu.memory_space<vmem>>, vector<1x512xf32>
    %393 = vector.broadcast %392 : vector<1x512xf32> to vector<8x512xf32>
    %394 = arith.mulf %391, %393 : vector<8x512xf32>
    %c184_229 = arith.constant 184 : index
    %c0_230 = arith.constant 0 : index
    %395 = vector.load %arg10[%c184_229, %c0_230] : memref<216x512xf32, #tpu.memory_space<vmem>>, vector<8x512xf32>
    tpu.vector_store %arg10[%c184_229, %c0_230], %394 {strides = array<i32>} : memref<216x512xf32, #tpu.memory_space<vmem>>, vector<8x512xf32>,
    %c157_i32 = arith.constant 157 : i32
    %396 = tpu.dynamic_rotate %279 by %c157_i32 dim 1 : vector<8x512xf32>, i32 -> vector<8x512xf32>
    %c78 = arith.constant 78 : index
    %c0_231 = arith.constant 0 : index
    %397 = vector.load %arg2[%c78, %c0_231] : memref<81x512xf32, #tpu.memory_space<vmem>>, vector<1x512xf32>
    %398 = vector.broadcast %397 : vector<1x512xf32> to vector<8x512xf32>
    %399 = arith.mulf %396, %398 : vector<8x512xf32>
    %c192_232 = arith.constant 192 : index
    %c0_233 = arith.constant 0 : index
    %400 = vector.load %arg10[%c192_232, %c0_233] : memref<216x512xf32, #tpu.memory_space<vmem>>, vector<8x512xf32>
    tpu.vector_store %arg10[%c192_232, %c0_233], %399 {strides = array<i32>} : memref<216x512xf32, #tpu.memory_space<vmem>>, vector<8x512xf32>,
    %c152_i32 = arith.constant 152 : i32
    %401 = tpu.dynamic_rotate %279 by %c152_i32 dim 1 : vector<8x512xf32>, i32 -> vector<8x512xf32>
    %c79 = arith.constant 79 : index
    %c0_234 = arith.constant 0 : index
    %402 = vector.load %arg2[%c79, %c0_234] : memref<81x512xf32, #tpu.memory_space<vmem>>, vector<1x512xf32>
    %403 = vector.broadcast %402 : vector<1x512xf32> to vector<8x512xf32>
    %404 = arith.mulf %401, %403 : vector<8x512xf32>
    %c200_235 = arith.constant 200 : index
    %c0_236 = arith.constant 0 : index
    %405 = vector.load %arg10[%c200_235, %c0_236] : memref<216x512xf32, #tpu.memory_space<vmem>>, vector<8x512xf32>
    tpu.vector_store %arg10[%c200_235, %c0_236], %404 {strides = array<i32>} : memref<216x512xf32, #tpu.memory_space<vmem>>, vector<8x512xf32>,
    %c147_i32 = arith.constant 147 : i32
    %406 = tpu.dynamic_rotate %279 by %c147_i32 dim 1 : vector<8x512xf32>, i32 -> vector<8x512xf32>
    %c80_237 = arith.constant 80 : index
    %c0_238 = arith.constant 0 : index
    %407 = vector.load %arg2[%c80_237, %c0_238] : memref<81x512xf32, #tpu.memory_space<vmem>>, vector<1x512xf32>
    %408 = vector.broadcast %407 : vector<1x512xf32> to vector<8x512xf32>
    %409 = arith.mulf %406, %408 : vector<8x512xf32>
    %c208_239 = arith.constant 208 : index
    %c0_240 = arith.constant 0 : index
    %410 = vector.load %arg10[%c208_239, %c0_240] : memref<216x512xf32, #tpu.memory_space<vmem>>, vector<8x512xf32>
    tpu.vector_store %arg10[%c208_239, %c0_240], %409 {strides = array<i32>} : memref<216x512xf32, #tpu.memory_space<vmem>>, vector<8x512xf32>,
    %c0_241 = arith.constant 0 : index
    %c0_242 = arith.constant 0 : index
    %411 = vector.load %arg7[%c0_241, %c0_242] : memref<16x216xf32, #tpu.memory_space<vmem>>, vector<16x216xf32>
    %c0_243 = arith.constant 0 : index
    %c0_244 = arith.constant 0 : index
    %412 = vector.load %arg10[%c0_243, %c0_244] : memref<216x512xf32, #tpu.memory_space<vmem>>, vector<216x512xf32>
    %cst_245 = arith.constant dense<0.000000e+00> : vector<16x512xf32>
    %413 = tpu.matmul %411, %412, %cst_245 {dimension_numbers = #tpu.dot_dimension_numbers<[1], [0], [0], [1], [0, 0, 1, 1], [], []>} : vector<16x216xf32>, vector<216x512xf32>, vector<16x512xf32> -> vector<16x512xf32>
    %c0_246 = arith.constant 0 : index
    %c0_247 = arith.constant 0 : index
    %414 = vector.load %arg8[%c0_246, %c0_247] : memref<16x1xf32, #tpu.memory_space<vmem>>, vector<16x1xf32>
    %415 = vector.broadcast %414 : vector<16x1xf32> to vector<16x512xf32>
    %416 = arith.addf %413, %415 : vector<16x512xf32>
    %cst_248 = arith.constant 0.000000e+00 : f32
    %417 = vector.broadcast %cst_248 : f32 to vector<16x512xf32>
    %418 = arith.maximumf %416, %417 : vector<16x512xf32>
    %c0_249 = arith.constant 0 : index
    %c0_250 = arith.constant 0 : index
    %c0_251 = arith.constant 0 : index
    %419 = vector.load %arg9[%c0_249, %c0_250, %c0_251] : memref<1x16x512xf32, #tpu.memory_space<vmem>>, vector<1x16x512xf32>
    %420 = vector.shape_cast %419 : vector<1x16x512xf32> to vector<16x512xf32>
    %421 = vector.shape_cast %418 : vector<16x512xf32> to vector<1x16x512xf32>
    tpu.vector_store %arg9[%c0_249, %c0_250, %c0_251], %421 {strides = array<i32>} : memref<1x16x512xf32, #tpu.memory_space<vmem>>, vector<1x16x512xf32>,
    return
  }
  func.func @transform_0(%arg0: i32) -> (i32, i32, i32) {
    %c0_i32 = arith.constant 0 : i32
    %c0_i32_0 = arith.constant 0 : i32
    %c0_i32_1 = arith.constant 0 : i32
    return %arg0, %c0_i32, %c0_i32_0 : i32, i32, i32
  }
  func.func @transform_1(%arg0: i32) -> (i32, i32) {
    %c0_i32 = arith.constant 0 : i32
    %c0_i32_0 = arith.constant 0 : i32
    %c0_i32_1 = arith.constant 0 : i32
    return %c0_i32, %c0_i32_0 : i32, i32
  }
  func.func @transform_2(%arg0: i32) -> (i32, i32) {
    %c0_i32 = arith.constant 0 : i32
    %c0_i32_0 = arith.constant 0 : i32
    %c0_i32_1 = arith.constant 0 : i32
    return %c0_i32, %c0_i32_0 : i32, i32
  }
  func.func @transform_3(%arg0: i32) -> (i32, i32) {
    %c0_i32 = arith.constant 0 : i32
    %c0_i32_0 = arith.constant 0 : i32
    %c0_i32_1 = arith.constant 0 : i32
    return %c0_i32, %c0_i32_0 : i32, i32
  }
  func.func @transform_4(%arg0: i32) -> (i32, i32) {
    %c0_i32 = arith.constant 0 : i32
    %c0_i32_0 = arith.constant 0 : i32
    %c0_i32_1 = arith.constant 0 : i32
    return %c0_i32, %c0_i32_0 : i32, i32
  }
  func.func @transform_5(%arg0: i32) -> (i32, i32) {
    %c0_i32 = arith.constant 0 : i32
    %c0_i32_0 = arith.constant 0 : i32
    %c0_i32_1 = arith.constant 0 : i32
    return %c0_i32, %c0_i32_0 : i32, i32
  }
  func.func @transform_6(%arg0: i32) -> (i32, i32) {
    %c0_i32 = arith.constant 0 : i32
    %c0_i32_0 = arith.constant 0 : i32
    %c0_i32_1 = arith.constant 0 : i32
    return %c0_i32, %c0_i32_0 : i32, i32
  }
  func.func @transform_7(%arg0: i32) -> (i32, i32) {
    %c0_i32 = arith.constant 0 : i32
    %c0_i32_0 = arith.constant 0 : i32
    %c0_i32_1 = arith.constant 0 : i32
    return %c0_i32, %c0_i32_0 : i32, i32
  }
  func.func @transform_8(%arg0: i32) -> (i32, i32, i32) {
    %c0_i32 = arith.constant 0 : i32
    %c0_i32_0 = arith.constant 0 : i32
    %c0_i32_1 = arith.constant 0 : i32
    return %arg0, %c0_i32, %c0_i32_0 : i32, i32, i32
  }
}

</mosaic_0001>

<llo_original>
// kernel: tpu_custom_call.1
$region0: #{tpu_custom_call.1}
  #allocation0 [shape = 'u32[]', space=smem, size = 0x4, offset = 0x4, fixed_abs, tag = 'smem constant byte address 0x4 - core index']
  #allocation1 [shape = 'u32[72,128]{1,0:T(1,128)}', space=vmem, size = 0x9000, scoped, tag = 'internal scratch']
  #allocation2 [shape = 'f32[216,512]{1,0:T(8,128)}', space=vmem, size = 0x6c000, scoped, tag = 'scratch operand']
  %s0 = inlined_call_operand.hbm [shape: f32[2,8,512], index: 0, kind: input, shape index: {}]
  %s1 = inlined_call_operand.hbm [shape: f32[81,512], index: 1, kind: input, shape index: {}]
  %s2 = inlined_call_operand.vmem [shape: f32[8,216], index: 2, kind: input, shape index: {}]
  %s3 = inlined_call_operand.vmem [shape: f32[8,1], index: 3, kind: input, shape index: {}]
  %s4 = inlined_call_operand.vmem [shape: f32[8,216], index: 4, kind: input, shape index: {}]
  %s5 = inlined_call_operand.vmem [shape: f32[8,1], index: 5, kind: input, shape index: {}]
  %s6 = inlined_call_operand.hbm [shape: f32[16,216], index: 6, kind: input, shape index: {}]
  %s7 = inlined_call_operand.vmem [shape: f32[16,1], index: 7, kind: input, shape index: {}]
  %s8 = inlined_call_operand.hbm [shape: f32[2,16,512], index: 8, kind: output, shape index: {}]
  %s9 = sld [smem:[#allocation0]]
  $region77: #{tpu_custom_call.1} parent=0
    _
  %s11 = ssub.s32 1, %s9
  %s12 = scalar_select 0, %s11, %s9
  $region1: #{tpu_custom_call.1} parent=0
    #allocation3 [shape = 'u8[32768]{0}', space=vmem, size = 0x8000, scoped, tag = 'input window, operand 0']
    #allocation4 [shape = 's32[2]{0}', space=sflag, size = 0x8, scoped, tag = 'scoped memory for tpu_custom_call.1']
    #allocation5 [shape = 's32[2]{0}', space=sflag, size = 0x8, scoped, tag = 'scoped memory for tpu_custom_call.1']
    #allocation6 [shape = 'u8[180224]{0}', space=vmem, size = 0x2c000, scoped, tag = 'input window, operand 1, single buffered']
    #allocation7 [shape = 's32[1]{0}', space=sflag, size = 0x4, scoped, tag = 'scoped memory for tpu_custom_call.1']
    #allocation8 [shape = 'u8[16384]{0}', space=vmem, size = 0x4000, scoped, tag = 'input window, operand 6, single buffered']
    #allocation9 [shape = 'u8[65536]{0}', space=vmem, size = 0x10000, scoped, tag = 'output window, operand 0']
    %13 = vsyncpa [#allocation4], 0
    %s14 = scalar_lea.sflag [#allocation4], 1
    %15 = vsyncpa %s14, 0
    %16 = vsyncpa [#allocation7], 0
    %17 = vsyncpa [#allocation5], 0
    %s18 = scalar_lea.sflag [#allocation5], 1
    %19 = vsyncpa %s18, 0
    loop: start=0, step=1, limit=4
    $region2: #{tpu_custom_call.1} parent=1 // loop_pre_header
      _
    $region3: #{tpu_custom_call.1} parent=1 // loop_header
      %s21 = sphi 0, %s25
      %p22 = scmp.ge.s32.totalorder %s21, 4
      %s31 = sphi 0, %s33
      %s34 = sphi 0, %s31
      %s35 = sphi 0, %s34
      %s51 = sphi 0, %s35
      %s55 = sphi 0, %s55
      %s57 = sphi 0, %s55
      %s58 = sphi 0, %s57
      %s72 = sphi 0, %s58
      %s76 = sphi 0, %s76
      %s78 = sphi 0, %s76
      %s79 = sphi 0, %s78
      %s93 = sphi 0, %s79
      %s97 = sphi 0, %s97
      %s99 = sphi 0, %s97
      %s100 = sphi 0, %s99
      %s114 = sphi 0, %s100
      %s118 = sphi 0, %s118
      %s120 = sphi 0, %s118
      %s121 = sphi 0, %s120
      %s135 = sphi 0, %s121
      %s139 = sphi 0, %s139
      %s141 = sphi 0, %s139
      %s142 = sphi 0, %s141
      %s156 = sphi 0, %s142
      %s160 = sphi 0, %s160
      %s162 = sphi 0, %s160
      %s163 = sphi 0, %s162
      %s177 = sphi 0, %s163
      %s181 = sphi 0, %s181
      %s183 = sphi 0, %s181
      %s184 = sphi 0, %s183
      %s198 = sphi 0, %s184
      %s204 = sphi 0, %s206
      %s207 = sphi 0, %s204
      %s208 = sphi 0, %s207
      %s224 = sphi 0, %s208
    $region4: #{tpu_custom_call.1} parent=1 // loop_header_branch
      %24 = sbr.rel (%p22) target = $region8
    $region5: #{tpu_custom_call.1} parent=1 // loop_body
      %s26 = ssub.s32 %s21, 1
      %s27 = ssub.s32 %s21, 2
      %s28 = sadd.s32 %s21, 1
      %s29 = ssub.s32 %s21, %s28
      %p30 = scmp.eq.s32.totalorder %s29, 0
      %s32 = sadd.s32 %s31, 1
      %s33 = scalar_select %p30, %s31, %s32
      %p36 = pneg %p30
      %p37 = scmp.eq.s32.totalorder %s21, 1
      %p38 = por %p36, %p37
      %p39 = scmp.ne.s32.totalorder %s31, %s34
      %p40 = scmp.eq.s32.totalorder %s21, 0
      %p41 = por %p39, %p40
      %p42 = scmp.ne.s32.totalorder %s31, %s34
      %p43 = scmp.eq.s32.totalorder %s26, 1
      %p44 = por %p42, %p43
      %p45 = scmp.ne.s32.totalorder %s34, %s35
      %p46 = scmp.eq.s32.totalorder %s26, 0
      %p47 = por %p45, %p46
      %p48 = scmp.ne.s32.totalorder %s34, %s35
      %p49 = scmp.eq.s32.totalorder %s27, 1
      %p50 = por %p48, %p49
      %p52 = scmp.ne.s32.totalorder %s35, %s51
      %p53 = scmp.eq.s32.totalorder %s27, 0
      %p54 = por %p52, %p53
      %s56 = sadd.s32 %s55, 1
      %p59 = scmp.eq.s32.totalorder %s21, 1
      %p60 = scmp.ne.s32.totalorder %s55, %s57
      %p61 = scmp.eq.s32.totalorder %s21, 0
      %p62 = por %p60, %p61
      %p63 = scmp.ne.s32.totalorder %s55, %s57
      %p64 = scmp.eq.s32.totalorder %s26, 1
      %p65 = por %p63, %p64
      %p66 = scmp.ne.s32.totalorder %s57, %s58
      %p67 = scmp.eq.s32.totalorder %s26, 0
      %p68 = por %p66, %p67
      %p69 = scmp.ne.s32.totalorder %s57, %s58
      %p70 = scmp.eq.s32.totalorder %s27, 1
      %p71 = por %p69, %p70
      %p73 = scmp.ne.s32.totalorder %s58, %s72
      %p74 = scmp.eq.s32.totalorder %s27, 0
      %p75 = por %p73, %p74
      %s77 = sadd.s32 %s76, 1
      %p80 = scmp.eq.s32.totalorder %s21, 1
      %p81 = scmp.ne.s32.totalorder %s76, %s78
      %p82 = scmp.eq.s32.totalorder %s21, 0
      %p83 = por %p81, %p82
      %p84 = scmp.ne.s32.totalorder %s76, %s78
      %p85 = scmp.eq.s32.totalorder %s26, 1
      %p86 = por %p84, %p85
      %p87 = scmp.ne.s32.totalorder %s78, %s79
      %p88 = scmp.eq.s32.totalorder %s26, 0
      %p89 = por %p87, %p88
      %p90 = scmp.ne.s32.totalorder %s78, %s79
      %p91 = scmp.eq.s32.totalorder %s27, 1
      %p92 = por %p90, %p91
      %p94 = scmp.ne.s32.totalorder %s79, %s93
      %p95 = scmp.eq.s32.totalorder %s27, 0
      %p96 = por %p94, %p95
      %s98 = sadd.s32 %s97, 1
      %p101 = scmp.eq.s32.totalorder %s21, 1
      %p102 = scmp.ne.s32.totalorder %s97, %s99
      %p103 = scmp.eq.s32.totalorder %s21, 0
      %p104 = por %p102, %p103
      %p105 = scmp.ne.s32.totalorder %s97, %s99
      %p106 = scmp.eq.s32.totalorder %s26, 1
      %p107 = por %p105, %p106
      %p108 = scmp.ne.s32.totalorder %s99, %s100
      %p109 = scmp.eq.s32.totalorder %s26, 0
      %p110 = por %p108, %p109
      %p111 = scmp.ne.s32.totalorder %s99, %s100
      %p112 = scmp.eq.s32.totalorder %s27, 1
      %p113 = por %p111, %p112
      %p115 = scmp.ne.s32.totalorder %s100, %s114
      %p116 = scmp.eq.s32.totalorder %s27, 0
      %p117 = por %p115, %p116
      %s119 = sadd.s32 %s118, 1
      %p122 = scmp.eq.s32.totalorder %s21, 1
      %p123 = scmp.ne.s32.totalorder %s118, %s120
      %p124 = scmp.eq.s32.totalorder %s21, 0
      %p125 = por %p123, %p124
      %p126 = scmp.ne.s32.totalorder %s118, %s120
      %p127 = scmp.eq.s32.totalorder %s26, 1
      %p128 = por %p126, %p127
      %p129 = scmp.ne.s32.totalorder %s120, %s121
      %p130 = scmp.eq.s32.totalorder %s26, 0
      %p131 = por %p129, %p130
      %p132 = scmp.ne.s32.totalorder %s120, %s121
      %p133 = scmp.eq.s32.totalorder %s27, 1
      %p134 = por %p132, %p133
      %p136 = scmp.ne.s32.totalorder %s121, %s135
      %p137 = scmp.eq.s32.totalorder %s27, 0
      %p138 = por %p136, %p137
      %s140 = sadd.s32 %s139, 1
      %p143 = scmp.eq.s32.totalorder %s21, 1
      %p144 = scmp.ne.s32.totalorder %s139, %s141
      %p145 = scmp.eq.s32.totalorder %s21, 0
      %p146 = por %p144, %p145
      %p147 = scmp.ne.s32.totalorder %s139, %s141
      %p148 = scmp.eq.s32.totalorder %s26, 1
      %p149 = por %p147, %p148
      %p150 = scmp.ne.s32.totalorder %s141, %s142
      %p151 = scmp.eq.s32.totalorder %s26, 0
      %p152 = por %p150, %p151
      %p153 = scmp.ne.s32.totalorder %s141, %s142
      %p154 = scmp.eq.s32.totalorder %s27, 1
      %p155 = por %p153, %p154
      %p157 = scmp.ne.s32.totalorder %s142, %s156
      %p158 = scmp.eq.s32.totalorder %s27, 0
      %p159 = por %p157, %p158
      %s161 = sadd.s32 %s160, 1
      %p164 = scmp.eq.s32.totalorder %s21, 1
      %p165 = scmp.ne.s32.totalorder %s160, %s162
      %p166 = scmp.eq.s32.totalorder %s21, 0
      %p167 = por %p165, %p166
      %p168 = scmp.ne.s32.totalorder %s160, %s162
      %p169 = scmp.eq.s32.totalorder %s26, 1
      %p170 = por %p168, %p169
      %p171 = scmp.ne.s32.totalorder %s162, %s163
      %p172 = scmp.eq.s32.totalorder %s26, 0
      %p173 = por %p171, %p172
      %p174 = scmp.ne.s32.totalorder %s162, %s163
      %p175 = scmp.eq.s32.totalorder %s27, 1
      %p176 = por %p174, %p175
      %p178 = scmp.ne.s32.totalorder %s163, %s177
      %p179 = scmp.eq.s32.totalorder %s27, 0
      %p180 = por %p178, %p179
      %s182 = sadd.s32 %s181, 1
      %p185 = scmp.eq.s32.totalorder %s21, 1
      %p186 = scmp.ne.s32.totalorder %s181, %s183
      %p187 = scmp.eq.s32.totalorder %s21, 0
      %p188 = por %p186, %p187
      %p189 = scmp.ne.s32.totalorder %s181, %s183
      %p190 = scmp.eq.s32.totalorder %s26, 1
      %p191 = por %p189, %p190
      %p192 = scmp.ne.s32.totalorder %s183, %s184
      %p193 = scmp.eq.s32.totalorder %s26, 0
      %p194 = por %p192, %p193
      %p195 = scmp.ne.s32.totalorder %s183, %s184
      %p196 = scmp.eq.s32.totalorder %s27, 1
      %p197 = por %p195, %p196
      %p199 = scmp.ne.s32.totalorder %s184, %s198
      %p200 = scmp.eq.s32.totalorder %s27, 0
      %p201 = por %p199, %p200
      %s202 = ssub.s32 %s21, %s28
      %p203 = scmp.eq.s32.totalorder %s202, 0
      %s205 = sadd.s32 %s204, 1
      %s206 = scalar_select %p203, %s204, %s205
      %p209 = pneg %p203
      %p210 = scmp.eq.s32.totalorder %s21, 1
      %p211 = por %p209, %p210
      %p212 = scmp.ne.s32.totalorder %s204, %s207
      %p213 = scmp.eq.s32.totalorder %s21, 0
      %p214 = por %p212, %p213
      %p215 = scmp.ne.s32.totalorder %s204, %s207
      %p216 = scmp.eq.s32.totalorder %s26, 1
      %p217 = por %p215, %p216
      %p218 = scmp.ne.s32.totalorder %s207, %s208
      %p219 = scmp.eq.s32.totalorder %s26, 0
      %p220 = por %p218, %p219
      %p221 = scmp.ne.s32.totalorder %s207, %s208
      %p222 = scmp.eq.s32.totalorder %s27, 1
      %p223 = por %p221, %p222
      %p225 = scmp.ne.s32.totalorder %s208, %s224
      %p226 = scmp.eq.s32.totalorder %s27, 0
      %p227 = por %p225, %p226
      %p228 = scmp.le.s32.totalorder 1, %s21
      %p229 = scmp.lt.s32.totalorder %s21, 3
      %p230 = pnand %p228, %p229
      %p231 = pneg %p230
      // Predicated region
      $region9: #{tpu_custom_call.1} parent=5 // pred_check
        _
      $region10: #{tpu_custom_call.1} parent=5 // pred_check_branch
        %233 = sbr.rel (%p230) target = $region12
      $region11: #{tpu_custom_call.1} parent=5 // pred_region
        %s234 = ssub.s32 %s21, 1
        // Predicated region
        $region13: #{tpu_custom_call.1} parent=11 // pred_check
          %p235 = pneg %p68
        $region14: #{tpu_custom_call.1} parent=11 // pred_check_branch
          %237 = sbr.rel (%p235) target = $region16
        $region15: #{tpu_custom_call.1} parent=11 // pred_region
          %239 = vsyncadd [#allocation7], 0
          %s240 = sshll.u32 %s1, 4
          %s241 = int_to_ptr.hbm [resolvable:$true] %s240
          %s242 = sshll.u32 [#allocation6], 4
          %s243 = int_to_ptr.vmem [resolvable:$true] %s242
          %248 = dma.hbm_to_vmem [thread:$0]  %s241, 5632, %s243, [#allocation7], 512, 512, 32
        $region16: #{tpu_custom_call.1} parent=11 // pred_fallthru
          _
        // Predicated region
        $region17: #{tpu_custom_call.1} parent=11 // pred_check
          %p249 = pneg %p89
        $region18: #{tpu_custom_call.1} parent=11 // pred_check_branch
          %251 = sbr.rel (%p249) target = $region20
        $region19: #{tpu_custom_call.1} parent=11 // pred_region
          _
        $region20: #{tpu_custom_call.1} parent=11 // pred_fallthru
          _
        // Predicated region
        $region21: #{tpu_custom_call.1} parent=11 // pred_check
          %p252 = pneg %p110
        $region22: #{tpu_custom_call.1} parent=11 // pred_check_branch
          %254 = sbr.rel (%p252) target = $region24
        $region23: #{tpu_custom_call.1} parent=11 // pred_region
          _
        $region24: #{tpu_custom_call.1} parent=11 // pred_fallthru
          _
        // Predicated region
        $region25: #{tpu_custom_call.1} parent=11 // pred_check
          %p255 = pneg %p131
        $region26: #{tpu_custom_call.1} parent=11 // pred_check_branch
          %257 = sbr.rel (%p255) target = $region28
        $region27: #{tpu_custom_call.1} parent=11 // pred_region
          _
        $region28: #{tpu_custom_call.1} parent=11 // pred_fallthru
          _
        // Predicated region
        $region29: #{tpu_custom_call.1} parent=11 // pred_check
          %p258 = pneg %p152
        $region30: #{tpu_custom_call.1} parent=11 // pred_check_branch
          %260 = sbr.rel (%p258) target = $region32
        $region31: #{tpu_custom_call.1} parent=11 // pred_region
          _
        $region32: #{tpu_custom_call.1} parent=11 // pred_fallthru
          _
        // Predicated region
        $region33: #{tpu_custom_call.1} parent=11 // pred_check
          %p261 = pneg %p173
        $region34: #{tpu_custom_call.1} parent=11 // pred_check_branch
          %263 = sbr.rel (%p261) target = $region36
        $region35: #{tpu_custom_call.1} parent=11 // pred_region
          %265 = vsyncadd [#allocation7], 0
          %s266 = sshll.u32 %s6, 4
          %s267 = int_to_ptr.hbm [resolvable:$true] %s266
          %s268 = sshll.u32 [#allocation8], 4
          %s269 = int_to_ptr.vmem [resolvable:$true] %s268
          %274 = dma.hbm_to_vmem [thread:$0]  %s267, 512, %s269, [#allocation7], 256, 256, 16
        $region36: #{tpu_custom_call.1} parent=11 // pred_fallthru
          _
        // Predicated region
        $region37: #{tpu_custom_call.1} parent=11 // pred_check
          %p275 = pneg %p194
        $region38: #{tpu_custom_call.1} parent=11 // pred_check_branch
          %277 = sbr.rel (%p275) target = $region40
        $region39: #{tpu_custom_call.1} parent=11 // pred_region
          _
        $region40: #{tpu_custom_call.1} parent=11 // pred_fallthru
          _
      $region12: #{tpu_custom_call.1} parent=5 // pred_fallthru
        _
      %p278 = scmp.lt.s32.totalorder %s21, 2
      // Predicated region
      $region41: #{tpu_custom_call.1} parent=5 // pred_check
        %p279 = pneg %p278
      $region42: #{tpu_custom_call.1} parent=5 // pred_check_branch
        %281 = sbr.rel (%p279) target = $region44
      $region43: #{tpu_custom_call.1} parent=5 // pred_region
        // Predicated region
        $region45: #{tpu_custom_call.1} parent=43 // pred_check
          %p282 = pneg %p41
        $region46: #{tpu_custom_call.1} parent=43 // pred_check_branch
          %284 = sbr.rel (%p282) target = $region48
        $region47: #{tpu_custom_call.1} parent=43 // pred_region
          %s285 = sand.u32 %s31, 1
          %s286 = scalar_lea.sflag [#allocation4], %s285
          %s287 = sand.u32 %s31, 1
          %s288 = smul.addr %s287, 32
          %s289 = scalar_lea.vmem [#allocation3], %s288
          %291 = vsyncadd %s286, 0
          %s292 = smul.addr %s21, 4
          %s293 = smul.addr %s292, 8
          %s294 = scalar_lea.hbm %s0, %s293
          %s296 = sshll.u32 %s294, 4
          %s297 = int_to_ptr.hbm [resolvable:$true] %s296
          %s298 = sshll.u32 %s289, 4
          %s299 = int_to_ptr.vmem [resolvable:$true] %s298
          %301 = dma.hbm_to_vmem [thread:$0]  %s297, 512, %s299, %s286
        $region48: #{tpu_custom_call.1} parent=43 // pred_fallthru
          _
      $region44: #{tpu_custom_call.1} parent=5 // pred_fallthru
        _
      %p302 = scmp.le.s32.totalorder 1, %s21
      %p303 = scmp.lt.s32.totalorder %s21, 3
      %p304 = pnand %p302, %p303
      %p305 = pneg %p304
      // Predicated region
      $region49: #{tpu_custom_call.1} parent=5 // pred_check
        _
      $region50: #{tpu_custom_call.1} parent=5 // pred_check_branch
        %307 = sbr.rel (%p304) target = $region52
      $region51: #{tpu_custom_call.1} parent=5 // pred_region
        %s308 = ssub.s32 %s21, 1
        %s309 = sand.u32 %s34, 1
        %s310 = scalar_lea.sflag [#allocation4], %s309
        %s311 = sand.u32 %s34, 1
        %s312 = smul.addr %s311, 32
        %s313 = scalar_lea.vmem [#allocation3], %s312
        // Predicated region
        $region53: #{tpu_custom_call.1} parent=51 // pred_check
          %p314 = pneg %p47
        $region54: #{tpu_custom_call.1} parent=51 // pred_check_branch
          %316 = sbr.rel (%p314) target = $region56
        $region55: #{tpu_custom_call.1} parent=51 // pred_region
          %318 = dma.done %s310, 512
        $region56: #{tpu_custom_call.1} parent=51 // pred_fallthru
          _
        // Predicated region
        $region57: #{tpu_custom_call.1} parent=51 // pred_check
          %p319 = pneg %p68
        $region58: #{tpu_custom_call.1} parent=51 // pred_check_branch
          %321 = sbr.rel (%p319) target = $region60
        $region59: #{tpu_custom_call.1} parent=51 // pred_region
          %323 = dma.done [#allocation7], 5632
        $region60: #{tpu_custom_call.1} parent=51 // pred_fallthru
          _
        // Predicated region
        $region61: #{tpu_custom_call.1} parent=51 // pred_check
          %p324 = pneg %p173
        $region62: #{tpu_custom_call.1} parent=51 // pred_check_branch
          %326 = sbr.rel (%p324) target = $region64
        $region63: #{tpu_custom_call.1} parent=51 // pred_region
          %328 = dma.done [#allocation7], 512
        $region64: #{tpu_custom_call.1} parent=51 // pred_fallthru
          _
        %s329 = sand.u32 %s34, 1
        %s330 = scalar_lea.sflag [#allocation4], %s329
        %s331 = sand.u32 %s34, 1
        %s332 = smul.addr %s331, 32
        %s333 = scalar_lea.vmem [#allocation3], %s332
        %p334 = pneg %p47
        %p335 = pneg %p44
        %p336 = pneg %p68
        %p337 = pneg %p65
        %p338 = pneg %p89
        %p339 = pneg %p86
        %p340 = pneg %p110
        %p341 = pneg %p107
        %p342 = pneg %p131
        %p343 = pneg %p128
        %p344 = pneg %p152
        %p345 = pneg %p149
        %p346 = pneg %p173
        %p347 = pneg %p170
        %p348 = pneg %p194
        %p349 = pneg %p191
        %p350 = pneg %p220
        %p351 = pneg %p217
        %s352 = sand.u32 %s207, 1
        %s353 = scalar_lea.sflag [#allocation5], %s352
        %s354 = sand.u32 %s207, 1
        %s355 = smul.addr %s354, 64
        %s356 = scalar_lea.vmem [#allocation9], %s355
        %v357 = vld [vmem:[%s313] sm:$0xff]
        %v358 = vld [vmem:[%s313 + $0x8] sm:$0xff]
        %v359 = vld [vmem:[%s313 + $0x10] sm:$0xff]
        %v360 = vld [vmem:[%s313 + $0x18] sm:$0xff]
        %361 = vrot.lane.b32.xlu0 %v357, 73
        %v362 = vpop.permute.xlu0 %361
        %363 = vrot.lane.b32.xlu0 %v358, 73
        %v364 = vpop.permute.xlu0 %363
        %365 = vrot.lane.b32.xlu0 %v359, 73
        %v366 = vpop.permute.xlu0 %365
        %367 = vrot.lane.b32.xlu0 %v360, 73
        %v368 = vpop.permute.xlu0 %367
        %v369 = vlaneseq
        %v370 = vand.u32 %v369, 127
        %vm371 = vcmp.lt.s32.totalorder %v370, 73
        %v372 = vsel %vm371, %v366, %v368
        %v373 = vsel %vm371, %v364, %v366
        %v374 = vsel %vm371, %v362, %v364
        %v375 = vsel %vm371, %v368, %v362
        %v376 = vld [vmem:[#allocation6] ss:$8 sm:$0xf]
        %v378 = vperm.slane %v376, 0
        %v379 = vperm.slane %v376, 1
        %v380 = vperm.slane %v376, 2
        %v381 = vperm.slane %v376, 3
        %v386 = vmul.f32 %v375, %v378
        %v387 = vmul.f32 %v374, %v379
        %v388 = vmul.f32 %v373, %v380
        %v389 = vmul.f32 %v372, %v381
        %390 = vst [vmem:[#allocation2] sm:$0xff] %v386
        %391 = vst [vmem:[#allocation2 + $0x8] sm:$0xff] %v387
        %392 = vst [vmem:[#allocation2 + $0x10] sm:$0xff] %v388
        %393 = vst [vmem:[#allocation2 + $0x18] sm:$0xff] %v389
        %394 = vrot.lane.b32.xlu0 %v357, 72
        %v395 = vpop.permute.xlu0 %394
        %396 = vrot.lane.b32.xlu0 %v358, 72
        %v397 = vpop.permute.xlu0 %396
        %398 = vrot.lane.b32.xlu0 %v359, 72
        %v399 = vpop.permute.xlu0 %398
        %400 = vrot.lane.b32.xlu0 %v360, 72
        %v401 = vpop.permute.xlu0 %400
        %vm402 = vcmp.lt.s32.totalorder %v370, 72
        %v403 = vsel %vm402, %v399, %v401
        %v404 = vsel %vm402, %v397, %v399
        %v405 = vsel %vm402, %v395, %v397
        %v406 = vsel %vm402, %v401, %v395
        %s407 = scalar_lea.vmem [#allocation6], 1
        %v408 = vld [vmem:[%s407] ss:$8 sm:$0xf]
        %v410 = vperm.slane %v408, 0
        %v411 = vperm.slane %v408, 1
        %v412 = vperm.slane %v408, 2
        %v413 = vperm.slane %v408, 3
        %v418 = vmul.f32 %v406, %v410
        %v419 = vmul.f32 %v405, %v411
        %v420 = vmul.f32 %v404, %v412
        %v421 = vmul.f32 %v403, %v413
        %422 = vst [vmem:[#allocation2 + $0x20] sm:$0xff] %v418
        %423 = vst [vmem:[#allocation2 + $0x28] sm:$0xff] %v419
        %424 = vst [vmem:[#allocation2 + $0x30] sm:$0xff] %v420
        %425 = vst [vmem:[#allocation2 + $0x38] sm:$0xff] %v421
        %426 = vrot.lane.b32.xlu0 %v357, 71
        %v427 = vpop.permute.xlu0 %426
        %428 = vrot.lane.b32.xlu0 %v358, 71
        %v429 = vpop.permute.xlu0 %428
        %430 = vrot.lane.b32.xlu0 %v359, 71
        %v431 = vpop.permute.xlu0 %430
        %432 = vrot.lane.b32.xlu0 %v360, 71
        %v433 = vpop.permute.xlu0 %432
        %vm434 = vcmp.lt.s32.totalorder %v370, 71
        %v435 = vsel %vm434, %v431, %v433
        %v436 = vsel %vm434, %v429, %v431
        %v437 = vsel %vm434, %v427, %v429
        %v438 = vsel %vm434, %v433, %v427
        %s439 = scalar_lea.vmem [#allocation6], 2
        %v440 = vld [vmem:[%s439] ss:$8 sm:$0xf]
        %v442 = vperm.slane %v440, 0
        %v443 = vperm.slane %v440, 1
        %v444 = vperm.slane %v440, 2
        %v445 = vperm.slane %v440, 3
        %v450 = vmul.f32 %v438, %v442
        %v451 = vmul.f32 %v437, %v443
        %v452 = vmul.f32 %v436, %v444
        %v453 = vmul.f32 %v435, %v445
        %454 = vst [vmem:[#allocation2 + $0x40] sm:$0xff] %v450
        %455 = vst [vmem:[#allocation2 + $0x48] sm:$0xff] %v451
        %456 = vst [vmem:[#allocation2 + $0x50] sm:$0xff] %v452
        %457 = vst [vmem:[#allocation2 + $0x58] sm:$0xff] %v453
        %458 = vrot.lane.b32.xlu0 %v357, 65
        %v459 = vpop.permute.xlu0 %458
        %460 = vrot.lane.b32.xlu0 %v358, 65
        %v461 = vpop.permute.xlu0 %460
        %462 = vrot.lane.b32.xlu0 %v359, 65
        %v463 = vpop.permute.xlu0 %462
        %464 = vrot.lane.b32.xlu0 %v360, 65
        %v465 = vpop.permute.xlu0 %464
        %vm466 = vcmp.lt.s32.totalorder %v370, 65
        %v467 = vsel %vm466, %v463, %v465
        %v468 = vsel %vm466, %v461, %v463
        %v469 = vsel %vm466, %v459, %v461
        %v470 = vsel %vm466, %v465, %v459
        %s471 = scalar_lea.vmem [#allocation6], 3
        %v472 = vld [vmem:[%s471] ss:$8 sm:$0xf]
        %v474 = vperm.slane %v472, 0
        %v475 = vperm.slane %v472, 1
        %v476 = vperm.slane %v472, 2
        %v477 = vperm.slane %v472, 3
        %v482 = vmul.f32 %v470, %v474
        %v483 = vmul.f32 %v469, %v475
        %v484 = vmul.f32 %v468, %v476
        %v485 = vmul.f32 %v467, %v477
        %486 = vst [vmem:[#allocation2 + $0x60] sm:$0xff] %v482
        %487 = vst [vmem:[#allocation2 + $0x68] sm:$0xff] %v483
        %488 = vst [vmem:[#allocation2 + $0x70] sm:$0xff] %v484
        %489 = vst [vmem:[#allocation2 + $0x78] sm:$0xff] %v485
        %490 = vrot.lane.b32.xlu0 %v357, 64
        %v491 = vpop.permute.xlu0 %490
        %492 = vrot.lane.b32.xlu0 %v358, 64
        %v493 = vpop.permute.xlu0 %492
        %494 = vrot.lane.b32.xlu0 %v359, 64
        %v495 = vpop.permute.xlu0 %494
        %496 = vrot.lane.b32.xlu0 %v360, 64
        %v497 = vpop.permute.xlu0 %496
        %vm498 = vcmp.lt.s32.totalorder %v370, 64
        %v499 = vsel %vm498, %v495, %v497
        %v500 = vsel %vm498, %v493, %v495
        %v501 = vsel %vm498, %v491, %v493
        %v502 = vsel %vm498, %v497, %v491
        %s503 = scalar_lea.vmem [#allocation6], 4
        %v504 = vld [vmem:[%s503] ss:$8 sm:$0xf]
        %v506 = vperm.slane %v504, 0
        %v507 = vperm.slane %v504, 1
        %v508 = vperm.slane %v504, 2
        %v509 = vperm.slane %v504, 3
        %v514 = vmul.f32 %v502, %v506
        %v515 = vmul.f32 %v501, %v507
        %v516 = vmul.f32 %v500, %v508
        %v517 = vmul.f32 %v499, %v509
        %518 = vst [vmem:[#allocation2 + $0x80] sm:$0xff] %v514
        %519 = vst [vmem:[#allocation2 + $0x88] sm:$0xff] %v515
        %520 = vst [vmem:[#allocation2 + $0x90] sm:$0xff] %v516
        %521 = vst [vmem:[#allocation2 + $0x98] sm:$0xff] %v517
        %522 = vrot.lane.b32.xlu0 %v357, 63
        %v523 = vpop.permute.xlu0 %522
        %524 = vrot.lane.b32.xlu0 %v358, 63
        %v525 = vpop.permute.xlu0 %524
        %526 = vrot.lane.b32.xlu0 %v359, 63
        %v527 = vpop.permute.xlu0 %526
        %528 = vrot.lane.b32.xlu0 %v360, 63
        %v529 = vpop.permute.xlu0 %528
        %vm530 = vcmp.lt.s32.totalorder %v370, 63
        %v531 = vsel %vm530, %v527, %v529
        %v532 = vsel %vm530, %v525, %v527
        %v533 = vsel %vm530, %v523, %v525
        %v534 = vsel %vm530, %v529, %v523
        %s535 = scalar_lea.vmem [#allocation6], 5
        %v536 = vld [vmem:[%s535] ss:$8 sm:$0xf]
        %v538 = vperm.slane %v536, 0
        %v539 = vperm.slane %v536, 1
        %v540 = vperm.slane %v536, 2
        %v541 = vperm.slane %v536, 3
        %v546 = vmul.f32 %v534, %v538
        %v547 = vmul.f32 %v533, %v539
        %v548 = vmul.f32 %v532, %v540
        %v549 = vmul.f32 %v531, %v541
        %550 = vst [vmem:[#allocation2 + $0xa0] sm:$0xff] %v546
        %551 = vst [vmem:[#allocation2 + $0xa8] sm:$0xff] %v547
        %552 = vst [vmem:[#allocation2 + $0xb0] sm:$0xff] %v548
        %553 = vst [vmem:[#allocation2 + $0xb8] sm:$0xff] %v549
        %554 = vrot.lane.b32.xlu0 %v357, 57
        %v555 = vpop.permute.xlu0 %554
        %556 = vrot.lane.b32.xlu0 %v358, 57
        %v557 = vpop.permute.xlu0 %556
        %558 = vrot.lane.b32.xlu0 %v359, 57
        %v559 = vpop.permute.xlu0 %558
        %560 = vrot.lane.b32.xlu0 %v360, 57
        %v561 = vpop.permute.xlu0 %560
        %vm562 = vcmp.lt.s32.totalorder %v370, 57
        %v563 = vsel %vm562, %v559, %v561
        %v564 = vsel %vm562, %v557, %v559
        %v565 = vsel %vm562, %v555, %v557
        %v566 = vsel %vm562, %v561, %v555
        %s567 = scalar_lea.vmem [#allocation6], 6
        %v568 = vld [vmem:[%s567] ss:$8 sm:$0xf]
        %v570 = vperm.slane %v568, 0
        %v571 = vperm.slane %v568, 1
        %v572 = vperm.slane %v568, 2
        %v573 = vperm.slane %v568, 3
        %v578 = vmul.f32 %v566, %v570
        %v579 = vmul.f32 %v565, %v571
        %v580 = vmul.f32 %v564, %v572
        %v581 = vmul.f32 %v563, %v573
        %582 = vst [vmem:[#allocation2 + $0xc0] sm:$0xff] %v578
        %583 = vst [vmem:[#allocation2 + $0xc8] sm:$0xff] %v579
        %584 = vst [vmem:[#allocation2 + $0xd0] sm:$0xff] %v580
        %585 = vst [vmem:[#allocation2 + $0xd8] sm:$0xff] %v581
        %586 = vrot.lane.b32.xlu0 %v357, 56
        %v587 = vpop.permute.xlu0 %586
        %588 = vrot.lane.b32.xlu0 %v358, 56
        %v589 = vpop.permute.xlu0 %588
        %590 = vrot.lane.b32.xlu0 %v359, 56
        %v591 = vpop.permute.xlu0 %590
        %592 = vrot.lane.b32.xlu0 %v360, 56
        %v593 = vpop.permute.xlu0 %592
        %vm594 = vcmp.lt.s32.totalorder %v370, 56
        %v595 = vsel %vm594, %v591, %v593
        %v596 = vsel %vm594, %v589, %v591
        %v597 = vsel %vm594, %v587, %v589
        %v598 = vsel %vm594, %v593, %v587
        %s599 = scalar_lea.vmem [#allocation6], 7
        %v600 = vld [vmem:[%s599] ss:$8 sm:$0xf]
        %v602 = vperm.slane %v600, 0
        %v603 = vperm.slane %v600, 1
        %v604 = vperm.slane %v600, 2
        %v605 = vperm.slane %v600, 3
        %v610 = vmul.f32 %v598, %v602
        %v611 = vmul.f32 %v597, %v603
        %v612 = vmul.f32 %v596, %v604
        %v613 = vmul.f32 %v595, %v605
        %614 = vst [vmem:[#allocation2 + $0xe0] sm:$0xff] %v610
        %615 = vst [vmem:[#allocation2 + $0xe8] sm:$0xff] %v611
        %616 = vst [vmem:[#allocation2 + $0xf0] sm:$0xff] %v612
        %617 = vst [vmem:[#allocation2 + $0xf8] sm:$0xff] %v613
        %618 = vrot.lane.b32.xlu0 %v357, 55
        %v619 = vpop.permute.xlu0 %618
        %620 = vrot.lane.b32.xlu0 %v358, 55
        %v621 = vpop.permute.xlu0 %620
        %622 = vrot.lane.b32.xlu0 %v359, 55
        %v623 = vpop.permute.xlu0 %622
        %624 = vrot.lane.b32.xlu0 %v360, 55
        %v625 = vpop.permute.xlu0 %624
        %vm626 = vcmp.lt.s32.totalorder %v370, 55
        %v627 = vsel %vm626, %v623, %v625
        %v628 = vsel %vm626, %v621, %v623
        %v629 = vsel %vm626, %v619, %v621
        %v630 = vsel %vm626, %v625, %v619
        %s631 = scalar_lea.vmem [#allocation6], 32
        %v632 = vld [vmem:[%s631] ss:$8 sm:$0xf]
        %v634 = vperm.slane %v632, 0
        %v635 = vperm.slane %v632, 1
        %v636 = vperm.slane %v632, 2
        %v637 = vperm.slane %v632, 3
        %v642 = vmul.f32 %v630, %v634
        %v643 = vmul.f32 %v629, %v635
        %v644 = vmul.f32 %v628, %v636
        %v645 = vmul.f32 %v627, %v637
        %646 = vst [vmem:[#allocation2 + $0x100] sm:$0xff] %v642
        %647 = vst [vmem:[#allocation2 + $0x108] sm:$0xff] %v643
        %648 = vst [vmem:[#allocation2 + $0x110] sm:$0xff] %v644
        %649 = vst [vmem:[#allocation2 + $0x118] sm:$0xff] %v645
        %650 = vrot.lane.b32.xlu0 %v357, 9
        %v651 = vpop.permute.xlu0 %650
        %652 = vrot.lane.b32.xlu0 %v358, 9
        %v653 = vpop.permute.xlu0 %652
        %654 = vrot.lane.b32.xlu0 %v359, 9
        %v655 = vpop.permute.xlu0 %654
        %656 = vrot.lane.b32.xlu0 %v360, 9
        %v657 = vpop.permute.xlu0 %656
        %vm658 = vcmp.lt.s32.totalorder %v370, 9
        %v659 = vsel %vm658, %v655, %v657
        %v660 = vsel %vm658, %v653, %v655
        %v661 = vsel %vm658, %v651, %v653
        %v662 = vsel %vm658, %v657, %v651
        %s663 = scalar_lea.vmem [#allocation6], 33
        %v664 = vld [vmem:[%s663] ss:$8 sm:$0xf]
        %v666 = vperm.slane %v664, 0
        %v667 = vperm.slane %v664, 1
        %v668 = vperm.slane %v664, 2
        %v669 = vperm.slane %v664, 3
        %v674 = vmul.f32 %v662, %v666
        %v675 = vmul.f32 %v661, %v667
        %v676 = vmul.f32 %v660, %v668
        %v677 = vmul.f32 %v659, %v669
        %678 = vst [vmem:[#allocation2 + $0x120] sm:$0xff] %v674
        %679 = vst [vmem:[#allocation2 + $0x128] sm:$0xff] %v675
        %680 = vst [vmem:[#allocation2 + $0x130] sm:$0xff] %v676
        %681 = vst [vmem:[#allocation2 + $0x138] sm:$0xff] %v677
        %682 = vrot.lane.b32.xlu0 %v357, 8
        %v683 = vpop.permute.xlu0 %682
        %684 = vrot.lane.b32.xlu0 %v358, 8
        %v685 = vpop.permute.xlu0 %684
        %686 = vrot.lane.b32.xlu0 %v359, 8
        %v687 = vpop.permute.xlu0 %686
        %688 = vrot.lane.b32.xlu0 %v360, 8
        %v689 = vpop.permute.xlu0 %688
        %vm690 = vcmp.lt.s32.totalorder %v370, 8
        %v691 = vsel %vm690, %v687, %v689
        %v692 = vsel %vm690, %v685, %v687
        %v693 = vsel %vm690, %v683, %v685
        %v694 = vsel %vm690, %v689, %v683
        %s695 = scalar_lea.vmem [#allocation6], 34
        %v696 = vld [vmem:[%s695] ss:$8 sm:$0xf]
        %v698 = vperm.slane %v696, 0
        %v699 = vperm.slane %v696, 1
        %v700 = vperm.slane %v696, 2
        %v701 = vperm.slane %v696, 3
        %v706 = vmul.f32 %v694, %v698
        %v707 = vmul.f32 %v693, %v699
        %v708 = vmul.f32 %v692, %v700
        %v709 = vmul.f32 %v691, %v701
        %710 = vst [vmem:[#allocation2 + $0x140] sm:$0xff] %v706
        %711 = vst [vmem:[#allocation2 + $0x148] sm:$0xff] %v707
        %712 = vst [vmem:[#allocation2 + $0x150] sm:$0xff] %v708
        %713 = vst [vmem:[#allocation2 + $0x158] sm:$0xff] %v709
        %714 = vrot.lane.b32.xlu0 %v357, 7
        %v715 = vpop.permute.xlu0 %714
        %716 = vrot.lane.b32.xlu0 %v358, 7
        %v717 = vpop.permute.xlu0 %716
        %718 = vrot.lane.b32.xlu0 %v359, 7
        %v719 = vpop.permute.xlu0 %718
        %720 = vrot.lane.b32.xlu0 %v360, 7
        %v721 = vpop.permute.xlu0 %720
        %vm722 = vcmp.lt.s32.totalorder %v370, 7
        %v723 = vsel %vm722, %v719, %v721
        %v724 = vsel %vm722, %v717, %v719
        %v725 = vsel %vm722, %v715, %v717
        %v726 = vsel %vm722, %v721, %v715
        %s727 = scalar_lea.vmem [#allocation6], 35
        %v728 = vld [vmem:[%s727] ss:$8 sm:$0xf]
        %v730 = vperm.slane %v728, 0
        %v731 = vperm.slane %v728, 1
        %v732 = vperm.slane %v728, 2
        %v733 = vperm.slane %v728, 3
        %v738 = vmul.f32 %v726, %v730
        %v739 = vmul.f32 %v725, %v731
        %v740 = vmul.f32 %v724, %v732
        %v741 = vmul.f32 %v723, %v733
        %742 = vst [vmem:[#allocation2 + $0x160] sm:$0xff] %v738
        %743 = vst [vmem:[#allocation2 + $0x168] sm:$0xff] %v739
        %744 = vst [vmem:[#allocation2 + $0x170] sm:$0xff] %v740
        %745 = vst [vmem:[#allocation2 + $0x178] sm:$0xff] %v741
        %746 = vrot.lane.b32.xlu0 %v357, 1
        %v747 = vpop.permute.xlu0 %746
        %748 = vrot.lane.b32.xlu0 %v358, 1
        %v749 = vpop.permute.xlu0 %748
        %750 = vrot.lane.b32.xlu0 %v359, 1
        %v751 = vpop.permute.xlu0 %750
        %752 = vrot.lane.b32.xlu0 %v360, 1
        %v753 = vpop.permute.xlu0 %752
        %vm754 = vcmp.lt.s32.totalorder %v370, 1
        %v755 = vsel %vm754, %v751, %v753
        %v756 = vsel %vm754, %v749, %v751
        %v757 = vsel %vm754, %v747, %v749
        %v758 = vsel %vm754, %v753, %v747
        %s759 = scalar_lea.vmem [#allocation6], 36
        %v760 = vld [vmem:[%s759] ss:$8 sm:$0xf]
        %v762 = vperm.slane %v760, 0
        %v763 = vperm.slane %v760, 1
        %v764 = vperm.slane %v760, 2
        %v765 = vperm.slane %v760, 3
        %v770 = vmul.f32 %v758, %v762
        %v771 = vmul.f32 %v757, %v763
        %v772 = vmul.f32 %v756, %v764
        %v773 = vmul.f32 %v755, %v765
        %774 = vst [vmem:[#allocation2 + $0x180] sm:$0xff] %v770
        %775 = vst [vmem:[#allocation2 + $0x188] sm:$0xff] %v771
        %776 = vst [vmem:[#allocation2 + $0x190] sm:$0xff] %v772
        %777 = vst [vmem:[#allocation2 + $0x198] sm:$0xff] %v773
        %778 = vst [vmem:[#allocation2 + $0x1a0] sm:$0xff] %v357
        %779 = vst [vmem:[#allocation2 + $0x1a8] sm:$0xff] %v358
        %780 = vst [vmem:[#allocation2 + $0x1b0] sm:$0xff] %v359
        %781 = vst [vmem:[#allocation2 + $0x1b8] sm:$0xff] %v360
        %782 = vrot.lane.b32.xlu0 %v357, 127
        %v783 = vpop.permute.xlu0 %782
        %784 = vrot.lane.b32.xlu0 %v358, 127
        %v785 = vpop.permute.xlu0 %784
        %786 = vrot.lane.b32.xlu0 %v359, 127
        %v787 = vpop.permute.xlu0 %786
        %788 = vrot.lane.b32.xlu0 %v360, 127
        %v789 = vpop.permute.xlu0 %788
        %vm790 = vcmp.lt.s32.totalorder %v370, 127
        %v791 = vsel %vm790, %v787, %v789
        %v792 = vsel %vm790, %v785, %v787
        %v793 = vsel %vm790, %v783, %v785
        %v794 = vsel %vm790, %v789, %v783
        %s795 = scalar_lea.vmem [#allocation6], 38
        %v796 = vld [vmem:[%s795] ss:$8 sm:$0xf]
        %v798 = vperm.slane %v796, 0
        %v799 = vperm.slane %v796, 1
        %v800 = vperm.slane %v796, 2
        %v801 = vperm.slane %v796, 3
        %v806 = vmul.f32 %v793, %v798
        %v807 = vmul.f32 %v792, %v799
        %v808 = vmul.f32 %v791, %v800
        %v809 = vmul.f32 %v794, %v801
        %810 = vst [vmem:[#allocation2 + $0x1c0] sm:$0xff] %v806
        %811 = vst [vmem:[#allocation2 + $0x1c8] sm:$0xff] %v807
        %812 = vst [vmem:[#allocation2 + $0x1d0] sm:$0xff] %v808
        %813 = vst [vmem:[#allocation2 + $0x1d8] sm:$0xff] %v809
        %814 = vrot.lane.b32.xlu0 %v357, 121
        %v815 = vpop.permute.xlu0 %814
        %816 = vrot.lane.b32.xlu0 %v358, 121
        %v817 = vpop.permute.xlu0 %816
        %818 = vrot.lane.b32.xlu0 %v359, 121
        %v819 = vpop.permute.xlu0 %818
        %820 = vrot.lane.b32.xlu0 %v360, 121
        %v821 = vpop.permute.xlu0 %820
        %vm822 = vcmp.lt.s32.totalorder %v370, 121
        %v823 = vsel %vm822, %v819, %v821
        %v824 = vsel %vm822, %v817, %v819
        %v825 = vsel %vm822, %v815, %v817
        %v826 = vsel %vm822, %v821, %v815
        %s827 = scalar_lea.vmem [#allocation6], 39
        %v828 = vld [vmem:[%s827] ss:$8 sm:$0xf]
        %v830 = vperm.slane %v828, 0
        %v831 = vperm.slane %v828, 1
        %v832 = vperm.slane %v828, 2
        %v833 = vperm.slane %v828, 3
        %v838 = vmul.f32 %v825, %v830
        %v839 = vmul.f32 %v824, %v831
        %v840 = vmul.f32 %v823, %v832
        %v841 = vmul.f32 %v826, %v833
        %842 = vst [vmem:[#allocation2 + $0x1e0] sm:$0xff] %v838
        %843 = vst [vmem:[#allocation2 + $0x1e8] sm:$0xff] %v839
        %844 = vst [vmem:[#allocation2 + $0x1f0] sm:$0xff] %v840
        %845 = vst [vmem:[#allocation2 + $0x1f8] sm:$0xff] %v841
        %846 = vrot.lane.b32.xlu0 %v357, 120
        %v847 = vpop.permute.xlu0 %846
        %848 = vrot.lane.b32.xlu0 %v358, 120
        %v849 = vpop.permute.xlu0 %848
        %850 = vrot.lane.b32.xlu0 %v359, 120
        %v851 = vpop.permute.xlu0 %850
        %852 = vrot.lane.b32.xlu0 %v360, 120
        %v853 = vpop.permute.xlu0 %852
        %vm854 = vcmp.lt.s32.totalorder %v370, 120
        %v855 = vsel %vm854, %v851, %v853
        %v856 = vsel %vm854, %v849, %v851
        %v857 = vsel %vm854, %v847, %v849
        %v858 = vsel %vm854, %v853, %v847
        %s859 = scalar_lea.vmem [#allocation6], 64
        %v860 = vld [vmem:[%s859] ss:$8 sm:$0xf]
        %v862 = vperm.slane %v860, 0
        %v863 = vperm.slane %v860, 1
        %v864 = vperm.slane %v860, 2
        %v865 = vperm.slane %v860, 3
        %v870 = vmul.f32 %v857, %v862
        %v871 = vmul.f32 %v856, %v863
        %v872 = vmul.f32 %v855, %v864
        %v873 = vmul.f32 %v858, %v865
        %874 = vst [vmem:[#allocation2 + $0x200] sm:$0xff] %v870
        %875 = vst [vmem:[#allocation2 + $0x208] sm:$0xff] %v871
        %876 = vst [vmem:[#allocation2 + $0x210] sm:$0xff] %v872
        %877 = vst [vmem:[#allocation2 + $0x218] sm:$0xff] %v873
        %878 = vrot.lane.b32.xlu0 %v357, 119
        %v879 = vpop.permute.xlu0 %878
        %880 = vrot.lane.b32.xlu0 %v358, 119
        %v881 = vpop.permute.xlu0 %880
        %882 = vrot.lane.b32.xlu0 %v359, 119
        %v883 = vpop.permute.xlu0 %882
        %884 = vrot.lane.b32.xlu0 %v360, 119
        %v885 = vpop.permute.xlu0 %884
        %vm886 = vcmp.lt.s32.totalorder %v370, 119
        %v887 = vsel %vm886, %v883, %v885
        %v888 = vsel %vm886, %v881, %v883
        %v889 = vsel %vm886, %v879, %v881
        %v890 = vsel %vm886, %v885, %v879
        %s891 = scalar_lea.vmem [#allocation6], 65
        %v892 = vld [vmem:[%s891] ss:$8 sm:$0xf]
        %v894 = vperm.slane %v892, 0
        %v895 = vperm.slane %v892, 1
        %v896 = vperm.slane %v892, 2
        %v897 = vperm.slane %v892, 3
        %v902 = vmul.f32 %v889, %v894
        %v903 = vmul.f32 %v888, %v895
        %v904 = vmul.f32 %v887, %v896
        %v905 = vmul.f32 %v890, %v897
        %906 = vst [vmem:[#allocation2 + $0x220] sm:$0xff] %v902
        %907 = vst [vmem:[#allocation2 + $0x228] sm:$0xff] %v903
        %908 = vst [vmem:[#allocation2 + $0x230] sm:$0xff] %v904
        %909 = vst [vmem:[#allocation2 + $0x238] sm:$0xff] %v905
        %s910 = scalar_lea.vmem [#allocation6], 66
        %v911 = vld [vmem:[%s910] ss:$8 sm:$0xf]
        %v913 = vperm.slane %v911, 0
        %v914 = vperm.slane %v911, 1
        %v915 = vperm.slane %v911, 2
        %v916 = vperm.slane %v911, 3
        %v921 = vmul.f32 %v374, %v913
        %v922 = vmul.f32 %v373, %v914
        %v923 = vmul.f32 %v372, %v915
        %v924 = vmul.f32 %v375, %v916
        %925 = vst [vmem:[#allocation2 + $0x240] sm:$0xff] %v921
        %926 = vst [vmem:[#allocation2 + $0x248] sm:$0xff] %v922
        %927 = vst [vmem:[#allocation2 + $0x250] sm:$0xff] %v923
        %928 = vst [vmem:[#allocation2 + $0x258] sm:$0xff] %v924
        %s929 = scalar_lea.vmem [#allocation6], 67
        %v930 = vld [vmem:[%s929] ss:$8 sm:$0xf]
        %v932 = vperm.slane %v930, 0
        %v933 = vperm.slane %v930, 1
        %v934 = vperm.slane %v930, 2
        %v935 = vperm.slane %v930, 3
        %v940 = vmul.f32 %v405, %v932
        %v941 = vmul.f32 %v404, %v933
        %v942 = vmul.f32 %v403, %v934
        %v943 = vmul.f32 %v406, %v935
        %944 = vst [vmem:[#allocation2 + $0x260] sm:$0xff] %v940
        %945 = vst [vmem:[#allocation2 + $0x268] sm:$0xff] %v941
        %946 = vst [vmem:[#allocation2 + $0x270] sm:$0xff] %v942
        %947 = vst [vmem:[#allocation2 + $0x278] sm:$0xff] %v943
        %s948 = scalar_lea.vmem [#allocation6], 68
        %v949 = vld [vmem:[%s948] ss:$8 sm:$0xf]
        %v951 = vperm.slane %v949, 0
        %v952 = vperm.slane %v949, 1
        %v953 = vperm.slane %v949, 2
        %v954 = vperm.slane %v949, 3
        %v959 = vmul.f32 %v437, %v951
        %v960 = vmul.f32 %v436, %v952
        %v961 = vmul.f32 %v435, %v953
        %v962 = vmul.f32 %v438, %v954
        %963 = vst [vmem:[#allocation2 + $0x280] sm:$0xff] %v959
        %964 = vst [vmem:[#allocation2 + $0x288] sm:$0xff] %v960
        %965 = vst [vmem:[#allocation2 + $0x290] sm:$0xff] %v961
        %966 = vst [vmem:[#allocation2 + $0x298] sm:$0xff] %v962
        %s967 = scalar_lea.vmem [#allocation6], 69
        %v968 = vld [vmem:[%s967] ss:$8 sm:$0xf]
        %v970 = vperm.slane %v968, 0
        %v971 = vperm.slane %v968, 1
        %v972 = vperm.slane %v968, 2
        %v973 = vperm.slane %v968, 3
        %v978 = vmul.f32 %v469, %v970
        %v979 = vmul.f32 %v468, %v971
        %v980 = vmul.f32 %v467, %v972
        %v981 = vmul.f32 %v470, %v973
        %982 = vst [vmem:[#allocation2 + $0x2a0] sm:$0xff] %v978
        %983 = vst [vmem:[#allocation2 + $0x2a8] sm:$0xff] %v979
        %984 = vst [vmem:[#allocation2 + $0x2b0] sm:$0xff] %v980
        %985 = vst [vmem:[#allocation2 + $0x2b8] sm:$0xff] %v981
        %s986 = scalar_lea.vmem [#allocation6], 70
        %v987 = vld [vmem:[%s986] ss:$8 sm:$0xf]
        %v989 = vperm.slane %v987, 0
        %v990 = vperm.slane %v987, 1
        %v991 = vperm.slane %v987, 2
        %v992 = vperm.slane %v987, 3
        %v997 = vmul.f32 %v501, %v989
        %v998 = vmul.f32 %v500, %v990
        %v999 = vmul.f32 %v499, %v991
        %v1000 = vmul.f32 %v502, %v992
        %1001 = vst [vmem:[#allocation2 + $0x2c0] sm:$0xff] %v997
        %1002 = vst [vmem:[#allocation2 + $0x2c8] sm:$0xff] %v998
        %1003 = vst [vmem:[#allocation2 + $0x2d0] sm:$0xff] %v999
        %1004 = vst [vmem:[#allocation2 + $0x2d8] sm:$0xff] %v1000
        %s1005 = scalar_lea.vmem [#allocation6], 71
        %v1006 = vld [vmem:[%s1005] ss:$8 sm:$0xf]
        %v1008 = vperm.slane %v1006, 0
        %v1009 = vperm.slane %v1006, 1
        %v1010 = vperm.slane %v1006, 2
        %v1011 = vperm.slane %v1006, 3
        %v1016 = vmul.f32 %v533, %v1008
        %v1017 = vmul.f32 %v532, %v1009
        %v1018 = vmul.f32 %v531, %v1010
        %v1019 = vmul.f32 %v534, %v1011
        %1020 = vst [vmem:[#allocation2 + $0x2e0] sm:$0xff] %v1016
        %1021 = vst [vmem:[#allocation2 + $0x2e8] sm:$0xff] %v1017
        %1022 = vst [vmem:[#allocation2 + $0x2f0] sm:$0xff] %v1018
        %1023 = vst [vmem:[#allocation2 + $0x2f8] sm:$0xff] %v1019
        %s1024 = scalar_lea.vmem [#allocation6], 96
        %v1025 = vld [vmem:[%s1024] ss:$8 sm:$0xf]
        %v1027 = vperm.slane %v1025, 0
        %v1028 = vperm.slane %v1025, 1
        %v1029 = vperm.slane %v1025, 2
        %v1030 = vperm.slane %v1025, 3
        %v1035 = vmul.f32 %v565, %v1027
        %v1036 = vmul.f32 %v564, %v1028
        %v1037 = vmul.f32 %v563, %v1029
        %v1038 = vmul.f32 %v566, %v1030
        %1039 = vst [vmem:[#allocation2 + $0x300] sm:$0xff] %v1035
        %1040 = vst [vmem:[#allocation2 + $0x308] sm:$0xff] %v1036
        %1041 = vst [vmem:[#allocation2 + $0x310] sm:$0xff] %v1037
        %1042 = vst [vmem:[#allocation2 + $0x318] sm:$0xff] %v1038
        %s1043 = scalar_lea.vmem [#allocation6], 97
        %v1044 = vld [vmem:[%s1043] ss:$8 sm:$0xf]
        %v1046 = vperm.slane %v1044, 0
        %v1047 = vperm.slane %v1044, 1
        %v1048 = vperm.slane %v1044, 2
        %v1049 = vperm.slane %v1044, 3
        %v1054 = vmul.f32 %v597, %v1046
        %v1055 = vmul.f32 %v596, %v1047
        %v1056 = vmul.f32 %v595, %v1048
        %v1057 = vmul.f32 %v598, %v1049
        %1058 = vst [vmem:[#allocation2 + $0x320] sm:$0xff] %v1054
        %1059 = vst [vmem:[#allocation2 + $0x328] sm:$0xff] %v1055
        %1060 = vst [vmem:[#allocation2 + $0x330] sm:$0xff] %v1056
        %1061 = vst [vmem:[#allocation2 + $0x338] sm:$0xff] %v1057
        %s1062 = scalar_lea.vmem [#allocation6], 98
        %v1063 = vld [vmem:[%s1062] ss:$8 sm:$0xf]
        %v1065 = vperm.slane %v1063, 0
        %v1066 = vperm.slane %v1063, 1
        %v1067 = vperm.slane %v1063, 2
        %v1068 = vperm.slane %v1063, 3
        %v1073 = vmul.f32 %v629, %v1065
        %v1074 = vmul.f32 %v628, %v1066
        %v1075 = vmul.f32 %v627, %v1067
        %v1076 = vmul.f32 %v630, %v1068
        %1077 = vst [vmem:[#allocation2 + $0x340] sm:$0xff] %v1073
        %1078 = vst [vmem:[#allocation2 + $0x348] sm:$0xff] %v1074
        %1079 = vst [vmem:[#allocation2 + $0x350] sm:$0xff] %v1075
        %1080 = vst [vmem:[#allocation2 + $0x358] sm:$0xff] %v1076
        %v1081 = vld [vmem:[%s2] sm:$0xff]
        %v1082 = vld [vmem:[%s2 + $0x8] sm:$0xff]
        %v1083 = vld [vmem:[#allocation2] sm:$0xff]
        %v1084 = vld [vmem:[#allocation2 + $0x8] sm:$0xff]
        %v1085 = vld [vmem:[#allocation2 + $0x10] sm:$0xff]
        %v1086 = vld [vmem:[#allocation2 + $0x18] sm:$0xff]
        %v1087 = vld [vmem:[#allocation2 + $0x20] sm:$0xff]
        %v1088 = vld [vmem:[#allocation2 + $0x28] sm:$0xff]
        %v1089 = vld [vmem:[#allocation2 + $0x30] sm:$0xff]
        %v1090 = vld [vmem:[#allocation2 + $0x38] sm:$0xff]
        %v1091 = vld [vmem:[#allocation2 + $0x40] sm:$0xff]
        %v1092 = vld [vmem:[#allocation2 + $0x48] sm:$0xff]
        %v1093 = vld [vmem:[#allocation2 + $0x50] sm:$0xff]
        %v1094 = vld [vmem:[#allocation2 + $0x58] sm:$0xff]
        %v1095 = vld [vmem:[#allocation2 + $0x60] sm:$0xff]
        %v1096 = vld [vmem:[#allocation2 + $0x68] sm:$0xff]
        %v1097 = vld [vmem:[#allocation2 + $0x70] sm:$0xff]
        %v1098 = vld [vmem:[#allocation2 + $0x78] sm:$0xff]
        %v1099 = vld [vmem:[#allocation2 + $0x80] sm:$0xff]
        %v1100 = vld [vmem:[#allocation2 + $0x88] sm:$0xff]
        %v1101 = vld [vmem:[#allocation2 + $0x90] sm:$0xff]
        %v1102 = vld [vmem:[#allocation2 + $0x98] sm:$0xff]
        %v1103 = vld [vmem:[#allocation2 + $0xa0] sm:$0xff]
        %v1104 = vld [vmem:[#allocation2 + $0xa8] sm:$0xff]
        %v1105 = vld [vmem:[#allocation2 + $0xb0] sm:$0xff]
        %v1106 = vld [vmem:[#allocation2 + $0xb8] sm:$0xff]
        %v1107 = vld [vmem:[#allocation2 + $0xc0] sm:$0xff]
        %v1108 = vld [vmem:[#allocation2 + $0xc8] sm:$0xff]
        %v1109 = vld [vmem:[#allocation2 + $0xd0] sm:$0xff]
        %v1110 = vld [vmem:[#allocation2 + $0xd8] sm:$0xff]
        %v1111 = vld [vmem:[#allocation2 + $0xe0] sm:$0xff]
        %v1112 = vld [vmem:[#allocation2 + $0xe8] sm:$0xff]
        %v1113 = vld [vmem:[#allocation2 + $0xf0] sm:$0xff]
        %v1114 = vld [vmem:[#allocation2 + $0xf8] sm:$0xff]
        %v1115 = vld [vmem:[#allocation2 + $0x100] sm:$0xff]
        %v1116 = vld [vmem:[#allocation2 + $0x108] sm:$0xff]
        %v1117 = vld [vmem:[#allocation2 + $0x110] sm:$0xff]
        %v1118 = vld [vmem:[#allocation2 + $0x118] sm:$0xff]
        %v1119 = vld [vmem:[#allocation2 + $0x120] sm:$0xff]
        %v1120 = vld [vmem:[#allocation2 + $0x128] sm:$0xff]
        %v1121 = vld [vmem:[#allocation2 + $0x130] sm:$0xff]
        %v1122 = vld [vmem:[#allocation2 + $0x138] sm:$0xff]
        %v1123 = vld [vmem:[#allocation2 + $0x140] sm:$0xff]
        %v1124 = vld [vmem:[#allocation2 + $0x148] sm:$0xff]
        %v1125 = vld [vmem:[#allocation2 + $0x150] sm:$0xff]
        %v1126 = vld [vmem:[#allocation2 + $0x158] sm:$0xff]
        %v1127 = vld [vmem:[#allocation2 + $0x160] sm:$0xff]
        %v1128 = vld [vmem:[#allocation2 + $0x168] sm:$0xff]
        %v1129 = vld [vmem:[#allocation2 + $0x170] sm:$0xff]
        %v1130 = vld [vmem:[#allocation2 + $0x178] sm:$0xff]
        %v1131 = vld [vmem:[#allocation2 + $0x180] sm:$0xff]
        %v1132 = vld [vmem:[#allocation2 + $0x188] sm:$0xff]
        %v1133 = vld [vmem:[#allocation2 + $0x190] sm:$0xff]
        %v1134 = vld [vmem:[#allocation2 + $0x198] sm:$0xff]
        %v1135 = vld [vmem:[#allocation2 + $0x1a0] sm:$0xff]
        %v1136 = vld [vmem:[#allocation2 + $0x1a8] sm:$0xff]
        %v1137 = vld [vmem:[#allocation2 + $0x1b0] sm:$0xff]
        %v1138 = vld [vmem:[#allocation2 + $0x1b8] sm:$0xff]
        %v1139 = vld [vmem:[#allocation2 + $0x1c0] sm:$0xff]
        %v1140 = vld [vmem:[#allocation2 + $0x1c8] sm:$0xff]
        %v1141 = vld [vmem:[#allocation2 + $0x1d0] sm:$0xff]
        %v1142 = vld [vmem:[#allocation2 + $0x1d8] sm:$0xff]
        %v1143 = vld [vmem:[#allocation2 + $0x1e0] sm:$0xff]
        %v1144 = vld [vmem:[#allocation2 + $0x1e8] sm:$0xff]
        %v1145 = vld [vmem:[#allocation2 + $0x1f0] sm:$0xff]
        %v1146 = vld [vmem:[#allocation2 + $0x1f8] sm:$0xff]
        %v1147 = vld [vmem:[#allocation2 + $0x200] sm:$0xff]
        %v1148 = vld [vmem:[#allocation2 + $0x208] sm:$0xff]
        %v1149 = vld [vmem:[#allocation2 + $0x210] sm:$0xff]
        %v1150 = vld [vmem:[#allocation2 + $0x218] sm:$0xff]
        %v1151 = vld [vmem:[#allocation2 + $0x220] sm:$0xff]
        %v1152 = vld [vmem:[#allocation2 + $0x228] sm:$0xff]
        %v1153 = vld [vmem:[#allocation2 + $0x230] sm:$0xff]
        %v1154 = vld [vmem:[#allocation2 + $0x238] sm:$0xff]
        %v1155 = vld [vmem:[#allocation2 + $0x240] sm:$0xff]
        %v1156 = vld [vmem:[#allocation2 + $0x248] sm:$0xff]
        %v1157 = vld [vmem:[#allocation2 + $0x250] sm:$0xff]
        %v1158 = vld [vmem:[#allocation2 + $0x258] sm:$0xff]
        %v1159 = vld [vmem:[#allocation2 + $0x260] sm:$0xff]
        %v1160 = vld [vmem:[#allocation2 + $0x268] sm:$0xff]
        %v1161 = vld [vmem:[#allocation2 + $0x270] sm:$0xff]
        %v1162 = vld [vmem:[#allocation2 + $0x278] sm:$0xff]
        %v1163 = vld [vmem:[#allocation2 + $0x280] sm:$0xff]
        %v1164 = vld [vmem:[#allocation2 + $0x288] sm:$0xff]
        %v1165 = vld [vmem:[#allocation2 + $0x290] sm:$0xff]
        %v1166 = vld [vmem:[#allocation2 + $0x298] sm:$0xff]
        %v1167 = vld [vmem:[#allocation2 + $0x2a0] sm:$0xff]
        %v1168 = vld [vmem:[#allocation2 + $0x2a8] sm:$0xff]
        %v1169 = vld [vmem:[#allocation2 + $0x2b0] sm:$0xff]
        %v1170 = vld [vmem:[#allocation2 + $0x2b8] sm:$0xff]
        %v1171 = vld [vmem:[#allocation2 + $0x2c0] sm:$0xff]
        %v1172 = vld [vmem:[#allocation2 + $0x2c8] sm:$0xff]
        %v1173 = vld [vmem:[#allocation2 + $0x2d0] sm:$0xff]
        %v1174 = vld [vmem:[#allocation2 + $0x2d8] sm:$0xff]
        %v1175 = vld [vmem:[#allocation2 + $0x2e0] sm:$0xff]
        %v1176 = vld [vmem:[#allocation2 + $0x2e8] sm:$0xff]
        %v1177 = vld [vmem:[#allocation2 + $0x2f0] sm:$0xff]
        %v1178 = vld [vmem:[#allocation2 + $0x2f8] sm:$0xff]
        %v1179 = vld [vmem:[#allocation2 + $0x300] sm:$0xff]
        %v1180 = vld [vmem:[#allocation2 + $0x308] sm:$0xff]
        %v1181 = vld [vmem:[#allocation2 + $0x310] sm:$0xff]
        %v1182 = vld [vmem:[#allocation2 + $0x318] sm:$0xff]
        %v1183 = vld [vmem:[#allocation2 + $0x320] sm:$0xff]
        %v1184 = vld [vmem:[#allocation2 + $0x328] sm:$0xff]
        %v1185 = vld [vmem:[#allocation2 + $0x330] sm:$0xff]
        %v1186 = vld [vmem:[#allocation2 + $0x338] sm:$0xff]
        %v1187 = vld [vmem:[#allocation2 + $0x340] sm:$0xff]
        %v1188 = vld [vmem:[#allocation2 + $0x348] sm:$0xff]
        %v1189 = vld [vmem:[#allocation2 + $0x350] sm:$0xff]
        %v1190 = vld [vmem:[#allocation2 + $0x358] sm:$0xff]
        %v1191 = vld [vmem:[%s3] sm:$0xff]
        %1193 = vset.pattern.permute.xlu0 0
        %1194 = vperm.xlu0 %1193, %v1191
        %v1195 = vpop.permute.xlu0 %1194
        %vm1197 = vcmask 719872
        %v1199 = vsel %vm1197, %v1082, 0
        %1201 = vmatpush.msra.mxu0 %v1143
        %1202 = vmatpush.msra.mxu0 %v1139
        %1203 = vmatpush.msra.mxu0 %v1135
        %1204 = vmatpush.msra.mxu0 %v1131
        %1205 = vmatpush.msra.mxu0 %v1127
        %1206 = vmatpush.msra.mxu0 %v1123
        %1207 = vmatpush.msra.mxu0 %v1119
        %1208 = vmatpush.msra.mxu0 %v1115
        %1209 = vmatpush.msra.mxu0 %v1111
        %1210 = vmatpush.msra.mxu0 %v1107
        %1211 = vmatpush.msra.mxu0 %v1103
        %1212 = vmatpush.msra.mxu0 %v1099
        %1213 = vmatpush.msra.mxu0 %v1095
        %1214 = vmatpush.msra.mxu0 %v1091
        %1215 = vmatpush.msra.mxu0 %v1087
        %1216 = vmatpush.msra.mxu0 %v1083
        %1217 = vmatmul.f32.gmra.mxu0 %v1081
        %v1218 = vpop.f32.mrf.mxu0
        %v1219 = vadd.f32 %v1195, %v1218
        %1220 = vdwg.mxu0
        %1221 = vmatpush.msra.mxu0 0.0
        %1222 = vmatpush.msra.mxu0 0.0
        %1223 = vmatpush.msra.mxu0 0.0
        %1224 = vmatpush.msra.mxu0 0.0
        %1225 = vmatpush.msra.mxu0 0.0
        %1226 = vmatpush.msra.mxu0 %v1187
        %1227 = vmatpush.msra.mxu0 %v1183
        %1228 = vmatpush.msra.mxu0 %v1179
        %1229 = vmatpush.msra.mxu0 %v1175
        %1230 = vmatpush.msra.mxu0 %v1171
        %1231 = vmatpush.msra.mxu0 %v1167
        %1232 = vmatpush.msra.mxu0 %v1163
        %1233 = vmatpush.msra.mxu0 %v1159
        %1234 = vmatpush.msra.mxu0 %v1155
        %1235 = vmatpush.msra.mxu0 %v1151
        %1236 = vmatpush.msra.mxu0 %v1147
        %1237 = vmatmul.f32.gmra.mxu0 %v1199
        %v1238 = vpop.f32.mrf.mxu0
        %v1239 = vadd.f32 %v1219, %v1238
        %1240 = vdwg.mxu0
        %1241 = vmatpush.msra.mxu0 %v1144
        %1242 = vmatpush.msra.mxu0 %v1140
        %1243 = vmatpush.msra.mxu0 %v1136
        %1244 = vmatpush.msra.mxu0 %v1132
        %1245 = vmatpush.msra.mxu0 %v1128
        %1246 = vmatpush.msra.mxu0 %v1124
        %1247 = vmatpush.msra.mxu0 %v1120
        %1248 = vmatpush.msra.mxu0 %v1116
        %1249 = vmatpush.msra.mxu0 %v1112
        %1250 = vmatpush.msra.mxu0 %v1108
        %1251 = vmatpush.msra.mxu0 %v1104
        %1252 = vmatpush.msra.mxu0 %v1100
        %1253 = vmatpush.msra.mxu0 %v1096
        %1254 = vmatpush.msra.mxu0 %v1092
        %1255 = vmatpush.msra.mxu0 %v1088
        %1256 = vmatpush.msra.mxu0 %v1084
        %1257 = vmatmul.f32.gmra.mxu0 %v1081
        %v1258 = vpop.f32.mrf.mxu0
        %v1259 = vadd.f32 %v1195, %v1258
        %1260 = vdwg.mxu0
        %1261 = vmatpush.msra.mxu0 0.0
        %1262 = vmatpush.msra.mxu0 0.0
        %1263 = vmatpush.msra.mxu0 0.0
        %1264 = vmatpush.msra.mxu0 0.0
        %1265 = vmatpush.msra.mxu0 0.0
        %1266 = vmatpush.msra.mxu0 %v1188
        %1267 = vmatpush.msra.mxu0 %v1184
        %1268 = vmatpush.msra.mxu0 %v1180
        %1269 = vmatpush.msra.mxu0 %v1176
        %1270 = vmatpush.msra.mxu0 %v1172
        %1271 = vmatpush.msra.mxu0 %v1168
        %1272 = vmatpush.msra.mxu0 %v1164
        %1273 = vmatpush.msra.mxu0 %v1160
        %1274 = vmatpush.msra.mxu0 %v1156
        %1275 = vmatpush.msra.mxu0 %v1152
        %1276 = vmatpush.msra.mxu0 %v1148
        %1277 = vmatmul.f32.gmra.mxu0 %v1199
        %v1278 = vpop.f32.mrf.mxu0
        %v1279 = vadd.f32 %v1259, %v1278
        %1280 = vdwg.mxu0
        %1281 = vmatpush.msra.mxu0 %v1145
        %1282 = vmatpush.msra.mxu0 %v1141
        %1283 = vmatpush.msra.mxu0 %v1137
        %1284 = vmatpush.msra.mxu0 %v1133
        %1285 = vmatpush.msra.mxu0 %v1129
        %1286 = vmatpush.msra.mxu0 %v1125
        %1287 = vmatpush.msra.mxu0 %v1121
        %1288 = vmatpush.msra.mxu0 %v1117
        %1289 = vmatpush.msra.mxu0 %v1113
        %1290 = vmatpush.msra.mxu0 %v1109
        %1291 = vmatpush.msra.mxu0 %v1105
        %1292 = vmatpush.msra.mxu0 %v1101
        %1293 = vmatpush.msra.mxu0 %v1097
        %1294 = vmatpush.msra.mxu0 %v1093
        %1295 = vmatpush.msra.mxu0 %v1089
        %1296 = vmatpush.msra.mxu0 %v1085
        %1297 = vmatmul.f32.gmra.mxu0 %v1081
        %v1298 = vpop.f32.mrf.mxu0
        %v1299 = vadd.f32 %v1195, %v1298
        %1300 = vdwg.mxu0
        %1301 = vmatpush.msra.mxu0 0.0
        %1302 = vmatpush.msra.mxu0 0.0
        %1303 = vmatpush.msra.mxu0 0.0
        %1304 = vmatpush.msra.mxu0 0.0
        %1305 = vmatpush.msra.mxu0 0.0
        %1306 = vmatpush.msra.mxu0 %v1189
        %1307 = vmatpush.msra.mxu0 %v1185
        %1308 = vmatpush.msra.mxu0 %v1181
        %1309 = vmatpush.msra.mxu0 %v1177
        %1310 = vmatpush.msra.mxu0 %v1173
        %1311 = vmatpush.msra.mxu0 %v1169
        %1312 = vmatpush.msra.mxu0 %v1165
        %1313 = vmatpush.msra.mxu0 %v1161
        %1314 = vmatpush.msra.mxu0 %v1157
        %1315 = vmatpush.msra.mxu0 %v1153
        %1316 = vmatpush.msra.mxu0 %v1149
        %1317 = vmatmul.f32.gmra.mxu0 %v1199
        %v1318 = vpop.f32.mrf.mxu0
        %v1319 = vadd.f32 %v1299, %v1318
        %1320 = vdwg.mxu0
        %1321 = vmatpush.msra.mxu0 %v1146
        %1322 = vmatpush.msra.mxu0 %v1142
        %1323 = vmatpush.msra.mxu0 %v1138
        %1324 = vmatpush.msra.mxu0 %v1134
        %1325 = vmatpush.msra.mxu0 %v1130
        %1326 = vmatpush.msra.mxu0 %v1126
        %1327 = vmatpush.msra.mxu0 %v1122
        %1328 = vmatpush.msra.mxu0 %v1118
        %1329 = vmatpush.msra.mxu0 %v1114
        %1330 = vmatpush.msra.mxu0 %v1110
        %1331 = vmatpush.msra.mxu0 %v1106
        %1332 = vmatpush.msra.mxu0 %v1102
        %1333 = vmatpush.msra.mxu0 %v1098
        %1334 = vmatpush.msra.mxu0 %v1094
        %1335 = vmatpush.msra.mxu0 %v1090
        %1336 = vmatpush.msra.mxu0 %v1086
        %1337 = vmatmul.f32.gmra.mxu0 %v1081
        %v1338 = vpop.f32.mrf.mxu0
        %v1339 = vadd.f32 %v1195, %v1338
        %1340 = vdwg.mxu0
        %1341 = vmatpush.msra.mxu0 0.0
        %1342 = vmatpush.msra.mxu0 0.0
        %1343 = vmatpush.msra.mxu0 0.0
        %1344 = vmatpush.msra.mxu0 0.0
        %1345 = vmatpush.msra.mxu0 0.0
        %1346 = vmatpush.msra.mxu0 %v1190
        %1347 = vmatpush.msra.mxu0 %v1186
        %1348 = vmatpush.msra.mxu0 %v1182
        %1349 = vmatpush.msra.mxu0 %v1178
        %1350 = vmatpush.msra.mxu0 %v1174
        %1351 = vmatpush.msra.mxu0 %v1170
        %1352 = vmatpush.msra.mxu0 %v1166
        %1353 = vmatpush.msra.mxu0 %v1162
        %1354 = vmatpush.msra.mxu0 %v1158
        %1355 = vmatpush.msra.mxu0 %v1154
        %1356 = vmatpush.msra.mxu0 %v1150
        %1357 = vmatmul.f32.gmra.mxu0 %v1199
        %v1358 = vpop.f32.mrf.mxu0
        %v1359 = vadd.f32 %v1339, %v1358
        %1360 = vdwg.mxu0
        %v1361 = vmax.f32 %v1239, 0.0
        %v1362 = vmax.f32 %v1279, 0.0
        %v1363 = vmax.f32 %v1319, 0.0
        %v1364 = vmax.f32 %v1359, 0.0
        %1365 = vrot.lane.b32.xlu0 %v1361, 18
        %v1366 = vpop.permute.xlu0 %1365
        %1367 = vrot.lane.b32.xlu0 %v1362, 18
        %v1368 = vpop.permute.xlu0 %1367
        %1369 = vrot.lane.b32.xlu0 %v1363, 18
        %v1370 = vpop.permute.xlu0 %1369
        %1371 = vrot.lane.b32.xlu0 %v1364, 18
        %v1372 = vpop.permute.xlu0 %1371
        %vm1373 = vcmp.lt.s32.totalorder %v370, 18
        %v1374 = vsel %vm1373, %v1370, %v1372
        %v1375 = vsel %vm1373, %v1368, %v1370
        %v1376 = vsel %vm1373, %v1366, %v1368
        %v1377 = vsel %vm1373, %v1372, %v1366
        %s1378 = scalar_lea.vmem [#allocation6], 99
        %v1379 = vld [vmem:[%s1378] ss:$8 sm:$0xf]
        %v1381 = vperm.slane %v1379, 0
        %v1382 = vperm.slane %v1379, 1
        %v1383 = vperm.slane %v1379, 2
        %v1384 = vperm.slane %v1379, 3
        %v1389 = vmul.f32 %v1374, %v1381
        %v1390 = vmul.f32 %v1377, %v1382
        %v1391 = vmul.f32 %v1376, %v1383
        %v1392 = vmul.f32 %v1375, %v1384
        %1393 = vst [vmem:[#allocation2] sm:$0xff] %v1389
        %1394 = vst [vmem:[#allocation2 + $0x8] sm:$0xff] %v1390
        %1395 = vst [vmem:[#allocation2 + $0x10] sm:$0xff] %v1391
        %1396 = vst [vmem:[#allocation2 + $0x18] sm:$0xff] %v1392
        %1397 = vrot.lane.b32.xlu0 %v1361, 16
        %v1398 = vpop.permute.xlu0 %1397
        %1399 = vrot.lane.b32.xlu0 %v1362, 16
        %v1400 = vpop.permute.xlu0 %1399
        %1401 = vrot.lane.b32.xlu0 %v1363, 16
        %v1402 = vpop.permute.xlu0 %1401
        %1403 = vrot.lane.b32.xlu0 %v1364, 16
        %v1404 = vpop.permute.xlu0 %1403
        %vm1405 = vcmp.lt.s32.totalorder %v370, 16
        %v1406 = vsel %vm1405, %v1402, %v1404
        %v1407 = vsel %vm1405, %v1400, %v1402
        %v1408 = vsel %vm1405, %v1398, %v1400
        %v1409 = vsel %vm1405, %v1404, %v1398
        %s1410 = scalar_lea.vmem [#allocation6], 100
        %v1411 = vld [vmem:[%s1410] ss:$8 sm:$0xf]
        %v1413 = vperm.slane %v1411, 0
        %v1414 = vperm.slane %v1411, 1
        %v1415 = vperm.slane %v1411, 2
        %v1416 = vperm.slane %v1411, 3
        %v1421 = vmul.f32 %v1406, %v1413
        %v1422 = vmul.f32 %v1409, %v1414
        %v1423 = vmul.f32 %v1408, %v1415
        %v1424 = vmul.f32 %v1407, %v1416
        %1425 = vst [vmem:[#allocation2 + $0x20] sm:$0xff] %v1421
        %1426 = vst [vmem:[#allocation2 + $0x28] sm:$0xff] %v1422
        %1427 = vst [vmem:[#allocation2 + $0x30] sm:$0xff] %v1423
        %1428 = vst [vmem:[#allocation2 + $0x38] sm:$0xff] %v1424
        %1429 = vrot.lane.b32.xlu0 %v1361, 14
        %v1430 = vpop.permute.xlu0 %1429
        %1431 = vrot.lane.b32.xlu0 %v1362, 14
        %v1432 = vpop.permute.xlu0 %1431
        %1433 = vrot.lane.b32.xlu0 %v1363, 14
        %v1434 = vpop.permute.xlu0 %1433
        %1435 = vrot.lane.b32.xlu0 %v1364, 14
        %v1436 = vpop.permute.xlu0 %1435
        %vm1437 = vcmp.lt.s32.totalorder %v370, 14
        %v1438 = vsel %vm1437, %v1434, %v1436
        %v1439 = vsel %vm1437, %v1432, %v1434
        %v1440 = vsel %vm1437, %v1430, %v1432
        %v1441 = vsel %vm1437, %v1436, %v1430
        %s1442 = scalar_lea.vmem [#allocation6], 101
        %v1443 = vld [vmem:[%s1442] ss:$8 sm:$0xf]
        %v1445 = vperm.slane %v1443, 0
        %v1446 = vperm.slane %v1443, 1
        %v1447 = vperm.slane %v1443, 2
        %v1448 = vperm.slane %v1443, 3
        %v1453 = vmul.f32 %v1438, %v1445
        %v1454 = vmul.f32 %v1441, %v1446
        %v1455 = vmul.f32 %v1440, %v1447
        %v1456 = vmul.f32 %v1439, %v1448
        %1457 = vst [vmem:[#allocation2 + $0x40] sm:$0xff] %v1453
        %1458 = vst [vmem:[#allocation2 + $0x48] sm:$0xff] %v1454
        %1459 = vst [vmem:[#allocation2 + $0x50] sm:$0xff] %v1455
        %1460 = vst [vmem:[#allocation2 + $0x58] sm:$0xff] %v1456
        %1461 = vrot.lane.b32.xlu0 %v1361, 2
        %v1462 = vpop.permute.xlu0 %1461
        %1463 = vrot.lane.b32.xlu0 %v1362, 2
        %v1464 = vpop.permute.xlu0 %1463
        %1465 = vrot.lane.b32.xlu0 %v1363, 2
        %v1466 = vpop.permute.xlu0 %1465
        %1467 = vrot.lane.b32.xlu0 %v1364, 2
        %v1468 = vpop.permute.xlu0 %1467
        %vm1469 = vcmp.lt.s32.totalorder %v370, 2
        %v1470 = vsel %vm1469, %v1466, %v1468
        %v1471 = vsel %vm1469, %v1464, %v1466
        %v1472 = vsel %vm1469, %v1462, %v1464
        %v1473 = vsel %vm1469, %v1468, %v1462
        %s1474 = scalar_lea.vmem [#allocation6], 102
        %v1475 = vld [vmem:[%s1474] ss:$8 sm:$0xf]
        %v1477 = vperm.slane %v1475, 0
        %v1478 = vperm.slane %v1475, 1
        %v1479 = vperm.slane %v1475, 2
        %v1480 = vperm.slane %v1475, 3
        %v1485 = vmul.f32 %v1470, %v1477
        %v1486 = vmul.f32 %v1473, %v1478
        %v1487 = vmul.f32 %v1472, %v1479
        %v1488 = vmul.f32 %v1471, %v1480
        %1489 = vst [vmem:[#allocation2 + $0x60] sm:$0xff] %v1485
        %1490 = vst [vmem:[#allocation2 + $0x68] sm:$0xff] %v1486
        %1491 = vst [vmem:[#allocation2 + $0x70] sm:$0xff] %v1487
        %1492 = vst [vmem:[#allocation2 + $0x78] sm:$0xff] %v1488
        %s1493 = scalar_lea.vmem [#allocation6], 103
        %v1494 = vld [vmem:[%s1493] ss:$8 sm:$0xf]
        %v1496 = vperm.slane %v1494, 0
        %v1497 = vperm.slane %v1494, 1
        %v1498 = vperm.slane %v1494, 2
        %v1499 = vperm.slane %v1494, 3
        %v1504 = vmul.f32 %v1364, %v1496
        %v1505 = vmul.f32 %v1361, %v1497
        %v1506 = vmul.f32 %v1362, %v1498
        %v1507 = vmul.f32 %v1363, %v1499
        %1508 = vst [vmem:[#allocation2 + $0x80] sm:$0xff] %v1504
        %1509 = vst [vmem:[#allocation2 + $0x88] sm:$0xff] %v1505
        %1510 = vst [vmem:[#allocation2 + $0x90] sm:$0xff] %v1506
        %1511 = vst [vmem:[#allocation2 + $0x98] sm:$0xff] %v1507
        %1512 = vrot.lane.b32.xlu0 %v1361, 126
        %v1513 = vpop.permute.xlu0 %1512
        %1514 = vrot.lane.b32.xlu0 %v1362, 126
        %v1515 = vpop.permute.xlu0 %1514
        %1516 = vrot.lane.b32.xlu0 %v1363, 126
        %v1517 = vpop.permute.xlu0 %1516
        %1518 = vrot.lane.b32.xlu0 %v1364, 126
        %v1519 = vpop.permute.xlu0 %1518
        %vm1520 = vcmp.lt.s32.totalorder %v370, 126
        %v1521 = vsel %vm1520, %v1517, %v1519
        %v1522 = vsel %vm1520, %v1515, %v1517
        %v1523 = vsel %vm1520, %v1513, %v1515
        %v1524 = vsel %vm1520, %v1519, %v1513
        %s1525 = scalar_lea.vmem [#allocation6], 128
        %v1526 = vld [vmem:[%s1525] ss:$8 sm:$0xf]
        %v1528 = vperm.slane %v1526, 0
        %v1529 = vperm.slane %v1526, 1
        %v1530 = vperm.slane %v1526, 2
        %v1531 = vperm.slane %v1526, 3
        %v1536 = vmul.f32 %v1524, %v1528
        %v1537 = vmul.f32 %v1523, %v1529
        %v1538 = vmul.f32 %v1522, %v1530
        %v1539 = vmul.f32 %v1521, %v1531
        %1540 = vst [vmem:[#allocation2 + $0xa0] sm:$0xff] %v1536
        %1541 = vst [vmem:[#allocation2 + $0xa8] sm:$0xff] %v1537
        %1542 = vst [vmem:[#allocation2 + $0xb0] sm:$0xff] %v1538
        %1543 = vst [vmem:[#allocation2 + $0xb8] sm:$0xff] %v1539
        %1544 = vrot.lane.b32.xlu0 %v1361, 114
        %v1545 = vpop.permute.xlu0 %1544
        %1546 = vrot.lane.b32.xlu0 %v1362, 114
        %v1547 = vpop.permute.xlu0 %1546
        %1548 = vrot.lane.b32.xlu0 %v1363, 114
        %v1549 = vpop.permute.xlu0 %1548
        %1550 = vrot.lane.b32.xlu0 %v1364, 114
        %v1551 = vpop.permute.xlu0 %1550
        %vm1552 = vcmp.lt.s32.totalorder %v370, 114
        %v1553 = vsel %vm1552, %v1549, %v1551
        %v1554 = vsel %vm1552, %v1547, %v1549
        %v1555 = vsel %vm1552, %v1545, %v1547
        %v1556 = vsel %vm1552, %v1551, %v1545
        %s1557 = scalar_lea.vmem [#allocation6], 129
        %v1558 = vld [vmem:[%s1557] ss:$8 sm:$0xf]
        %v1560 = vperm.slane %v1558, 0
        %v1561 = vperm.slane %v1558, 1
        %v1562 = vperm.slane %v1558, 2
        %v1563 = vperm.slane %v1558, 3
        %v1568 = vmul.f32 %v1556, %v1560
        %v1569 = vmul.f32 %v1555, %v1561
        %v1570 = vmul.f32 %v1554, %v1562
        %v1571 = vmul.f32 %v1553, %v1563
        %1572 = vst [vmem:[#allocation2 + $0xc0] sm:$0xff] %v1568
        %1573 = vst [vmem:[#allocation2 + $0xc8] sm:$0xff] %v1569
        %1574 = vst [vmem:[#allocation2 + $0xd0] sm:$0xff] %v1570
        %1575 = vst [vmem:[#allocation2 + $0xd8] sm:$0xff] %v1571
        %1576 = vrot.lane.b32.xlu0 %v1361, 112
        %v1577 = vpop.permute.xlu0 %1576
        %1578 = vrot.lane.b32.xlu0 %v1362, 112
        %v1579 = vpop.permute.xlu0 %1578
        %1580 = vrot.lane.b32.xlu0 %v1363, 112
        %v1581 = vpop.permute.xlu0 %1580
        %1582 = vrot.lane.b32.xlu0 %v1364, 112
        %v1583 = vpop.permute.xlu0 %1582
        %vm1584 = vcmp.lt.s32.totalorder %v370, 112
        %v1585 = vsel %vm1584, %v1581, %v1583
        %v1586 = vsel %vm1584, %v1579, %v1581
        %v1587 = vsel %vm1584, %v1577, %v1579
        %v1588 = vsel %vm1584, %v1583, %v1577
        %s1589 = scalar_lea.vmem [#allocation6], 130
        %v1590 = vld [vmem:[%s1589] ss:$8 sm:$0xf]
        %v1592 = vperm.slane %v1590, 0
        %v1593 = vperm.slane %v1590, 1
        %v1594 = vperm.slane %v1590, 2
        %v1595 = vperm.slane %v1590, 3
        %v1600 = vmul.f32 %v1588, %v1592
        %v1601 = vmul.f32 %v1587, %v1593
        %v1602 = vmul.f32 %v1586, %v1594
        %v1603 = vmul.f32 %v1585, %v1595
        %1604 = vst [vmem:[#allocation2 + $0xe0] sm:$0xff] %v1600
        %1605 = vst [vmem:[#allocation2 + $0xe8] sm:$0xff] %v1601
        %1606 = vst [vmem:[#allocation2 + $0xf0] sm:$0xff] %v1602
        %1607 = vst [vmem:[#allocation2 + $0xf8] sm:$0xff] %v1603
        %1608 = vrot.lane.b32.xlu0 %v1361, 110
        %v1609 = vpop.permute.xlu0 %1608
        %1610 = vrot.lane.b32.xlu0 %v1362, 110
        %v1611 = vpop.permute.xlu0 %1610
        %1612 = vrot.lane.b32.xlu0 %v1363, 110
        %v1613 = vpop.permute.xlu0 %1612
        %1614 = vrot.lane.b32.xlu0 %v1364, 110
        %v1615 = vpop.permute.xlu0 %1614
        %vm1616 = vcmp.lt.s32.totalorder %v370, 110
        %v1617 = vsel %vm1616, %v1613, %v1615
        %v1618 = vsel %vm1616, %v1611, %v1613
        %v1619 = vsel %vm1616, %v1609, %v1611
        %v1620 = vsel %vm1616, %v1615, %v1609
        %s1621 = scalar_lea.vmem [#allocation6], 131
        %v1622 = vld [vmem:[%s1621] ss:$8 sm:$0xf]
        %v1624 = vperm.slane %v1622, 0
        %v1625 = vperm.slane %v1622, 1
        %v1626 = vperm.slane %v1622, 2
        %v1627 = vperm.slane %v1622, 3
        %v1632 = vmul.f32 %v1620, %v1624
        %v1633 = vmul.f32 %v1619, %v1625
        %v1634 = vmul.f32 %v1618, %v1626
        %v1635 = vmul.f32 %v1617, %v1627
        %1636 = vst [vmem:[#allocation2 + $0x100] sm:$0xff] %v1632
        %1637 = vst [vmem:[#allocation2 + $0x108] sm:$0xff] %v1633
        %1638 = vst [vmem:[#allocation2 + $0x110] sm:$0xff] %v1634
        %1639 = vst [vmem:[#allocation2 + $0x118] sm:$0xff] %v1635
        %s1640 = scalar_lea.vmem [#allocation6], 132
        %v1641 = vld [vmem:[%s1640] ss:$8 sm:$0xf]
        %v1643 = vperm.slane %v1641, 0
        %v1644 = vperm.slane %v1641, 1
        %v1645 = vperm.slane %v1641, 2
        %v1646 = vperm.slane %v1641, 3
        %v1651 = vmul.f32 %v1377, %v1643
        %v1652 = vmul.f32 %v1376, %v1644
        %v1653 = vmul.f32 %v1375, %v1645
        %v1654 = vmul.f32 %v1374, %v1646
        %1655 = vst [vmem:[#allocation2 + $0x120] sm:$0xff] %v1651
        %1656 = vst [vmem:[#allocation2 + $0x128] sm:$0xff] %v1652
        %1657 = vst [vmem:[#allocation2 + $0x130] sm:$0xff] %v1653
        %1658 = vst [vmem:[#allocation2 + $0x138] sm:$0xff] %v1654
        %s1659 = scalar_lea.vmem [#allocation6], 133
        %v1660 = vld [vmem:[%s1659] ss:$8 sm:$0xf]
        %v1662 = vperm.slane %v1660, 0
        %v1663 = vperm.slane %v1660, 1
        %v1664 = vperm.slane %v1660, 2
        %v1665 = vperm.slane %v1660, 3
        %v1670 = vmul.f32 %v1409, %v1662
        %v1671 = vmul.f32 %v1408, %v1663
        %v1672 = vmul.f32 %v1407, %v1664
        %v1673 = vmul.f32 %v1406, %v1665
        %1674 = vst [vmem:[#allocation2 + $0x140] sm:$0xff] %v1670
        %1675 = vst [vmem:[#allocation2 + $0x148] sm:$0xff] %v1671
        %1676 = vst [vmem:[#allocation2 + $0x150] sm:$0xff] %v1672
        %1677 = vst [vmem:[#allocation2 + $0x158] sm:$0xff] %v1673
        %s1678 = scalar_lea.vmem [#allocation6], 134
        %v1679 = vld [vmem:[%s1678] ss:$8 sm:$0xf]
        %v1681 = vperm.slane %v1679, 0
        %v1682 = vperm.slane %v1679, 1
        %v1683 = vperm.slane %v1679, 2
        %v1684 = vperm.slane %v1679, 3
        %v1689 = vmul.f32 %v1441, %v1681
        %v1690 = vmul.f32 %v1440, %v1682
        %v1691 = vmul.f32 %v1439, %v1683
        %v1692 = vmul.f32 %v1438, %v1684
        %1693 = vst [vmem:[#allocation2 + $0x160] sm:$0xff] %v1689
        %1694 = vst [vmem:[#allocation2 + $0x168] sm:$0xff] %v1690
        %1695 = vst [vmem:[#allocation2 + $0x170] sm:$0xff] %v1691
        %1696 = vst [vmem:[#allocation2 + $0x178] sm:$0xff] %v1692
        %s1697 = scalar_lea.vmem [#allocation6], 135
        %v1698 = vld [vmem:[%s1697] ss:$8 sm:$0xf]
        %v1700 = vperm.slane %v1698, 0
        %v1701 = vperm.slane %v1698, 1
        %v1702 = vperm.slane %v1698, 2
        %v1703 = vperm.slane %v1698, 3
        %v1708 = vmul.f32 %v1473, %v1700
        %v1709 = vmul.f32 %v1472, %v1701
        %v1710 = vmul.f32 %v1471, %v1702
        %v1711 = vmul.f32 %v1470, %v1703
        %1712 = vst [vmem:[#allocation2 + $0x180] sm:$0xff] %v1708
        %1713 = vst [vmem:[#allocation2 + $0x188] sm:$0xff] %v1709
        %1714 = vst [vmem:[#allocation2 + $0x190] sm:$0xff] %v1710
        %1715 = vst [vmem:[#allocation2 + $0x198] sm:$0xff] %v1711
        %1716 = vst [vmem:[#allocation2 + $0x1a0] sm:$0xff] %v1361
        %1717 = vst [vmem:[#allocation2 + $0x1a8] sm:$0xff] %v1362
        %1718 = vst [vmem:[#allocation2 + $0x1b0] sm:$0xff] %v1363
        %1719 = vst [vmem:[#allocation2 + $0x1b8] sm:$0xff] %v1364
        %s1720 = scalar_lea.vmem [#allocation6], 161
        %v1721 = vld [vmem:[%s1720] ss:$8 sm:$0xf]
        %v1723 = vperm.slane %v1721, 0
        %v1724 = vperm.slane %v1721, 1
        %v1725 = vperm.slane %v1721, 2
        %v1726 = vperm.slane %v1721, 3
        %v1731 = vmul.f32 %v1523, %v1723
        %v1732 = vmul.f32 %v1522, %v1724
        %v1733 = vmul.f32 %v1521, %v1725
        %v1734 = vmul.f32 %v1524, %v1726
        %1735 = vst [vmem:[#allocation2 + $0x1c0] sm:$0xff] %v1731
        %1736 = vst [vmem:[#allocation2 + $0x1c8] sm:$0xff] %v1732
        %1737 = vst [vmem:[#allocation2 + $0x1d0] sm:$0xff] %v1733
        %1738 = vst [vmem:[#allocation2 + $0x1d8] sm:$0xff] %v1734
        %s1739 = scalar_lea.vmem [#allocation6], 162
        %v1740 = vld [vmem:[%s1739] ss:$8 sm:$0xf]
        %v1742 = vperm.slane %v1740, 0
        %v1743 = vperm.slane %v1740, 1
        %v1744 = vperm.slane %v1740, 2
        %v1745 = vperm.slane %v1740, 3
        %v1750 = vmul.f32 %v1555, %v1742
        %v1751 = vmul.f32 %v1554, %v1743
        %v1752 = vmul.f32 %v1553, %v1744
        %v1753 = vmul.f32 %v1556, %v1745
        %1754 = vst [vmem:[#allocation2 + $0x1e0] sm:$0xff] %v1750
        %1755 = vst [vmem:[#allocation2 + $0x1e8] sm:$0xff] %v1751
        %1756 = vst [vmem:[#allocation2 + $0x1f0] sm:$0xff] %v1752
        %1757 = vst [vmem:[#allocation2 + $0x1f8] sm:$0xff] %v1753
        %s1758 = scalar_lea.vmem [#allocation6], 163
        %v1759 = vld [vmem:[%s1758] ss:$8 sm:$0xf]
        %v1761 = vperm.slane %v1759, 0
        %v1762 = vperm.slane %v1759, 1
        %v1763 = vperm.slane %v1759, 2
        %v1764 = vperm.slane %v1759, 3
        %v1769 = vmul.f32 %v1587, %v1761
        %v1770 = vmul.f32 %v1586, %v1762
        %v1771 = vmul.f32 %v1585, %v1763
        %v1772 = vmul.f32 %v1588, %v1764
        %1773 = vst [vmem:[#allocation2 + $0x200] sm:$0xff] %v1769
        %1774 = vst [vmem:[#allocation2 + $0x208] sm:$0xff] %v1770
        %1775 = vst [vmem:[#allocation2 + $0x210] sm:$0xff] %v1771
        %1776 = vst [vmem:[#allocation2 + $0x218] sm:$0xff] %v1772
        %s1777 = scalar_lea.vmem [#allocation6], 164
        %v1778 = vld [vmem:[%s1777] ss:$8 sm:$0xf]
        %v1780 = vperm.slane %v1778, 0
        %v1781 = vperm.slane %v1778, 1
        %v1782 = vperm.slane %v1778, 2
        %v1783 = vperm.slane %v1778, 3
        %v1788 = vmul.f32 %v1619, %v1780
        %v1789 = vmul.f32 %v1618, %v1781
        %v1790 = vmul.f32 %v1617, %v1782
        %v1791 = vmul.f32 %v1620, %v1783
        %1792 = vst [vmem:[#allocation2 + $0x220] sm:$0xff] %v1788
        %1793 = vst [vmem:[#allocation2 + $0x228] sm:$0xff] %v1789
        %1794 = vst [vmem:[#allocation2 + $0x230] sm:$0xff] %v1790
        %1795 = vst [vmem:[#allocation2 + $0x238] sm:$0xff] %v1791
        %s1796 = scalar_lea.vmem [#allocation6], 165
        %v1797 = vld [vmem:[%s1796] ss:$8 sm:$0xf]
        %v1799 = vperm.slane %v1797, 0
        %v1800 = vperm.slane %v1797, 1
        %v1801 = vperm.slane %v1797, 2
        %v1802 = vperm.slane %v1797, 3
        %v1807 = vmul.f32 %v1376, %v1799
        %v1808 = vmul.f32 %v1375, %v1800
        %v1809 = vmul.f32 %v1374, %v1801
        %v1810 = vmul.f32 %v1377, %v1802
        %1811 = vst [vmem:[#allocation2 + $0x240] sm:$0xff] %v1807
        %1812 = vst [vmem:[#allocation2 + $0x248] sm:$0xff] %v1808
        %1813 = vst [vmem:[#allocation2 + $0x250] sm:$0xff] %v1809
        %1814 = vst [vmem:[#allocation2 + $0x258] sm:$0xff] %v1810
        %s1815 = scalar_lea.vmem [#allocation6], 166
        %v1816 = vld [vmem:[%s1815] ss:$8 sm:$0xf]
        %v1818 = vperm.slane %v1816, 0
        %v1819 = vperm.slane %v1816, 1
        %v1820 = vperm.slane %v1816, 2
        %v1821 = vperm.slane %v1816, 3
        %v1826 = vmul.f32 %v1408, %v1818
        %v1827 = vmul.f32 %v1407, %v1819
        %v1828 = vmul.f32 %v1406, %v1820
        %v1829 = vmul.f32 %v1409, %v1821
        %1830 = vst [vmem:[#allocation2 + $0x260] sm:$0xff] %v1826
        %1831 = vst [vmem:[#allocation2 + $0x268] sm:$0xff] %v1827
        %1832 = vst [vmem:[#allocation2 + $0x270] sm:$0xff] %v1828
        %1833 = vst [vmem:[#allocation2 + $0x278] sm:$0xff] %v1829
        %s1834 = scalar_lea.vmem [#allocation6], 167
        %v1835 = vld [vmem:[%s1834] ss:$8 sm:$0xf]
        %v1837 = vperm.slane %v1835, 0
        %v1838 = vperm.slane %v1835, 1
        %v1839 = vperm.slane %v1835, 2
        %v1840 = vperm.slane %v1835, 3
        %v1845 = vmul.f32 %v1440, %v1837
        %v1846 = vmul.f32 %v1439, %v1838
        %v1847 = vmul.f32 %v1438, %v1839
        %v1848 = vmul.f32 %v1441, %v1840
        %1849 = vst [vmem:[#allocation2 + $0x280] sm:$0xff] %v1845
        %1850 = vst [vmem:[#allocation2 + $0x288] sm:$0xff] %v1846
        %1851 = vst [vmem:[#allocation2 + $0x290] sm:$0xff] %v1847
        %1852 = vst [vmem:[#allocation2 + $0x298] sm:$0xff] %v1848
        %s1853 = scalar_lea.vmem [#allocation6], 192
        %v1854 = vld [vmem:[%s1853] ss:$8 sm:$0xf]
        %v1856 = vperm.slane %v1854, 0
        %v1857 = vperm.slane %v1854, 1
        %v1858 = vperm.slane %v1854, 2
        %v1859 = vperm.slane %v1854, 3
        %v1864 = vmul.f32 %v1472, %v1856
        %v1865 = vmul.f32 %v1471, %v1857
        %v1866 = vmul.f32 %v1470, %v1858
        %v1867 = vmul.f32 %v1473, %v1859
        %1868 = vst [vmem:[#allocation2 + $0x2a0] sm:$0xff] %v1864
        %1869 = vst [vmem:[#allocation2 + $0x2a8] sm:$0xff] %v1865
        %1870 = vst [vmem:[#allocation2 + $0x2b0] sm:$0xff] %v1866
        %1871 = vst [vmem:[#allocation2 + $0x2b8] sm:$0xff] %v1867
        %s1872 = scalar_lea.vmem [#allocation6], 193
        %v1873 = vld [vmem:[%s1872] ss:$8 sm:$0xf]
        %v1875 = vperm.slane %v1873, 0
        %v1876 = vperm.slane %v1873, 1
        %v1877 = vperm.slane %v1873, 2
        %v1878 = vperm.slane %v1873, 3
        %v1883 = vmul.f32 %v1362, %v1875
        %v1884 = vmul.f32 %v1363, %v1876
        %v1885 = vmul.f32 %v1364, %v1877
        %v1886 = vmul.f32 %v1361, %v1878
        %1887 = vst [vmem:[#allocation2 + $0x2c0] sm:$0xff] %v1883
        %1888 = vst [vmem:[#allocation2 + $0x2c8] sm:$0xff] %v1884
        %1889 = vst [vmem:[#allocation2 + $0x2d0] sm:$0xff] %v1885
        %1890 = vst [vmem:[#allocation2 + $0x2d8] sm:$0xff] %v1886
        %s1891 = scalar_lea.vmem [#allocation6], 194
        %v1892 = vld [vmem:[%s1891] ss:$8 sm:$0xf]
        %v1894 = vperm.slane %v1892, 0
        %v1895 = vperm.slane %v1892, 1
        %v1896 = vperm.slane %v1892, 2
        %v1897 = vperm.slane %v1892, 3
        %v1902 = vmul.f32 %v1522, %v1894
        %v1903 = vmul.f32 %v1521, %v1895
        %v1904 = vmul.f32 %v1524, %v1896
        %v1905 = vmul.f32 %v1523, %v1897
        %1906 = vst [vmem:[#allocation2 + $0x2e0] sm:$0xff] %v1902
        %1907 = vst [vmem:[#allocation2 + $0x2e8] sm:$0xff] %v1903
        %1908 = vst [vmem:[#allocation2 + $0x2f0] sm:$0xff] %v1904
        %1909 = vst [vmem:[#allocation2 + $0x2f8] sm:$0xff] %v1905
        %s1910 = scalar_lea.vmem [#allocation6], 195
        %v1911 = vld [vmem:[%s1910] ss:$8 sm:$0xf]
        %v1913 = vperm.slane %v1911, 0
        %v1914 = vperm.slane %v1911, 1
        %v1915 = vperm.slane %v1911, 2
        %v1916 = vperm.slane %v1911, 3
        %v1921 = vmul.f32 %v1554, %v1913
        %v1922 = vmul.f32 %v1553, %v1914
        %v1923 = vmul.f32 %v1556, %v1915
        %v1924 = vmul.f32 %v1555, %v1916
        %1925 = vst [vmem:[#allocation2 + $0x300] sm:$0xff] %v1921
        %1926 = vst [vmem:[#allocation2 + $0x308] sm:$0xff] %v1922
        %1927 = vst [vmem:[#allocation2 + $0x310] sm:$0xff] %v1923
        %1928 = vst [vmem:[#allocation2 + $0x318] sm:$0xff] %v1924
        %s1929 = scalar_lea.vmem [#allocation6], 196
        %v1930 = vld [vmem:[%s1929] ss:$8 sm:$0xf]
        %v1932 = vperm.slane %v1930, 0
        %v1933 = vperm.slane %v1930, 1
        %v1934 = vperm.slane %v1930, 2
        %v1935 = vperm.slane %v1930, 3
        %v1940 = vmul.f32 %v1586, %v1932
        %v1941 = vmul.f32 %v1585, %v1933
        %v1942 = vmul.f32 %v1588, %v1934
        %v1943 = vmul.f32 %v1587, %v1935
        %1944 = vst [vmem:[#allocation2 + $0x320] sm:$0xff] %v1940
        %1945 = vst [vmem:[#allocation2 + $0x328] sm:$0xff] %v1941
        %1946 = vst [vmem:[#allocation2 + $0x330] sm:$0xff] %v1942
        %1947 = vst [vmem:[#allocation2 + $0x338] sm:$0xff] %v1943
        %s1948 = scalar_lea.vmem [#allocation6], 197
        %v1949 = vld [vmem:[%s1948] ss:$8 sm:$0xf]
        %v1951 = vperm.slane %v1949, 0
        %v1952 = vperm.slane %v1949, 1
        %v1953 = vperm.slane %v1949, 2
        %v1954 = vperm.slane %v1949, 3
        %v1959 = vmul.f32 %v1618, %v1951
        %v1960 = vmul.f32 %v1617, %v1952
        %v1961 = vmul.f32 %v1620, %v1953
        %v1962 = vmul.f32 %v1619, %v1954
        %1963 = vst [vmem:[#allocation2 + $0x340] sm:$0xff] %v1959
        %1964 = vst [vmem:[#allocation2 + $0x348] sm:$0xff] %v1960
        %1965 = vst [vmem:[#allocation2 + $0x350] sm:$0xff] %v1961
        %1966 = vst [vmem:[#allocation2 + $0x358] sm:$0xff] %v1962
        %v1967 = vld [vmem:[%s4] sm:$0xff]
        %v1968 = vld [vmem:[%s4 + $0x8] sm:$0xff]
        %v1969 = vld [vmem:[#allocation2] sm:$0xff]
        %v1970 = vld [vmem:[#allocation2 + $0x8] sm:$0xff]
        %v1971 = vld [vmem:[#allocation2 + $0x10] sm:$0xff]
        %v1972 = vld [vmem:[#allocation2 + $0x18] sm:$0xff]
        %v1973 = vld [vmem:[#allocation2 + $0x20] sm:$0xff]
        %v1974 = vld [vmem:[#allocation2 + $0x28] sm:$0xff]
        %v1975 = vld [vmem:[#allocation2 + $0x30] sm:$0xff]
        %v1976 = vld [vmem:[#allocation2 + $0x38] sm:$0xff]
        %v1977 = vld [vmem:[#allocation2 + $0x40] sm:$0xff]
        %v1978 = vld [vmem:[#allocation2 + $0x48] sm:$0xff]
        %v1979 = vld [vmem:[#allocation2 + $0x50] sm:$0xff]
        %v1980 = vld [vmem:[#allocation2 + $0x58] sm:$0xff]
        %v1981 = vld [vmem:[#allocation2 + $0x60] sm:$0xff]
        %v1982 = vld [vmem:[#allocation2 + $0x68] sm:$0xff]
        %v1983 = vld [vmem:[#allocation2 + $0x70] sm:$0xff]
        %v1984 = vld [vmem:[#allocation2 + $0x78] sm:$0xff]
        %v1985 = vld [vmem:[#allocation2 + $0x80] sm:$0xff]
        %v1986 = vld [vmem:[#allocation2 + $0x88] sm:$0xff]
        %v1987 = vld [vmem:[#allocation2 + $0x90] sm:$0xff]
        %v1988 = vld [vmem:[#allocation2 + $0x98] sm:$0xff]
        %v1989 = vld [vmem:[#allocation2 + $0xa0] sm:$0xff]
        %v1990 = vld [vmem:[#allocation2 + $0xa8] sm:$0xff]
        %v1991 = vld [vmem:[#allocation2 + $0xb0] sm:$0xff]
        %v1992 = vld [vmem:[#allocation2 + $0xb8] sm:$0xff]
        %v1993 = vld [vmem:[#allocation2 + $0xc0] sm:$0xff]
        %v1994 = vld [vmem:[#allocation2 + $0xc8] sm:$0xff]
        %v1995 = vld [vmem:[#allocation2 + $0xd0] sm:$0xff]
        %v1996 = vld [vmem:[#allocation2 + $0xd8] sm:$0xff]
        %v1997 = vld [vmem:[#allocation2 + $0xe0] sm:$0xff]
        %v1998 = vld [vmem:[#allocation2 + $0xe8] sm:$0xff]
        %v1999 = vld [vmem:[#allocation2 + $0xf0] sm:$0xff]
        %v2000 = vld [vmem:[#allocation2 + $0xf8] sm:$0xff]
        %v2001 = vld [vmem:[#allocation2 + $0x100] sm:$0xff]
        %v2002 = vld [vmem:[#allocation2 + $0x108] sm:$0xff]
        %v2003 = vld [vmem:[#allocation2 + $0x110] sm:$0xff]
        %v2004 = vld [vmem:[#allocation2 + $0x118] sm:$0xff]
        %v2005 = vld [vmem:[#allocation2 + $0x120] sm:$0xff]
        %v2006 = vld [vmem:[#allocation2 + $0x128] sm:$0xff]
        %v2007 = vld [vmem:[#allocation2 + $0x130] sm:$0xff]
        %v2008 = vld [vmem:[#allocation2 + $0x138] sm:$0xff]
        %v2009 = vld [vmem:[#allocation2 + $0x140] sm:$0xff]
        %v2010 = vld [vmem:[#allocation2 + $0x148] sm:$0xff]
        %v2011 = vld [vmem:[#allocation2 + $0x150] sm:$0xff]
        %v2012 = vld [vmem:[#allocation2 + $0x158] sm:$0xff]
        %v2013 = vld [vmem:[#allocation2 + $0x160] sm:$0xff]
        %v2014 = vld [vmem:[#allocation2 + $0x168] sm:$0xff]
        %v2015 = vld [vmem:[#allocation2 + $0x170] sm:$0xff]
        %v2016 = vld [vmem:[#allocation2 + $0x178] sm:$0xff]
        %v2017 = vld [vmem:[#allocation2 + $0x180] sm:$0xff]
        %v2018 = vld [vmem:[#allocation2 + $0x188] sm:$0xff]
        %v2019 = vld [vmem:[#allocation2 + $0x190] sm:$0xff]
        %v2020 = vld [vmem:[#allocation2 + $0x198] sm:$0xff]
        %v2021 = vld [vmem:[#allocation2 + $0x1a0] sm:$0xff]
        %v2022 = vld [vmem:[#allocation2 + $0x1a8] sm:$0xff]
        %v2023 = vld [vmem:[#allocation2 + $0x1b0] sm:$0xff]
        %v2024 = vld [vmem:[#allocation2 + $0x1b8] sm:$0xff]
        %v2025 = vld [vmem:[#allocation2 + $0x1c0] sm:$0xff]
        %v2026 = vld [vmem:[#allocation2 + $0x1c8] sm:$0xff]
        %v2027 = vld [vmem:[#allocation2 + $0x1d0] sm:$0xff]
        %v2028 = vld [vmem:[#allocation2 + $0x1d8] sm:$0xff]
        %v2029 = vld [vmem:[#allocation2 + $0x1e0] sm:$0xff]
        %v2030 = vld [vmem:[#allocation2 + $0x1e8] sm:$0xff]
        %v2031 = vld [vmem:[#allocation2 + $0x1f0] sm:$0xff]
        %v2032 = vld [vmem:[#allocation2 + $0x1f8] sm:$0xff]
        %v2033 = vld [vmem:[#allocation2 + $0x200] sm:$0xff]
        %v2034 = vld [vmem:[#allocation2 + $0x208] sm:$0xff]
        %v2035 = vld [vmem:[#allocation2 + $0x210] sm:$0xff]
        %v2036 = vld [vmem:[#allocation2 + $0x218] sm:$0xff]
        %v2037 = vld [vmem:[#allocation2 + $0x220] sm:$0xff]
        %v2038 = vld [vmem:[#allocation2 + $0x228] sm:$0xff]
        %v2039 = vld [vmem:[#allocation2 + $0x230] sm:$0xff]
        %v2040 = vld [vmem:[#allocation2 + $0x238] sm:$0xff]
        %v2041 = vld [vmem:[#allocation2 + $0x240] sm:$0xff]
        %v2042 = vld [vmem:[#allocation2 + $0x248] sm:$0xff]
        %v2043 = vld [vmem:[#allocation2 + $0x250] sm:$0xff]
        %v2044 = vld [vmem:[#allocation2 + $0x258] sm:$0xff]
        %v2045 = vld [vmem:[#allocation2 + $0x260] sm:$0xff]
        %v2046 = vld [vmem:[#allocation2 + $0x268] sm:$0xff]
        %v2047 = vld [vmem:[#allocation2 + $0x270] sm:$0xff]
        %v2048 = vld [vmem:[#allocation2 + $0x278] sm:$0xff]
        %v2049 = vld [vmem:[#allocation2 + $0x280] sm:$0xff]
        %v2050 = vld [vmem:[#allocation2 + $0x288] sm:$0xff]
        %v2051 = vld [vmem:[#allocation2 + $0x290] sm:$0xff]
        %v2052 = vld [vmem:[#allocation2 + $0x298] sm:$0xff]
        %v2053 = vld [vmem:[#allocation2 + $0x2a0] sm:$0xff]
        %v2054 = vld [vmem:[#allocation2 + $0x2a8] sm:$0xff]
        %v2055 = vld [vmem:[#allocation2 + $0x2b0] sm:$0xff]
        %v2056 = vld [vmem:[#allocation2 + $0x2b8] sm:$0xff]
        %v2057 = vld [vmem:[#allocation2 + $0x2c0] sm:$0xff]
        %v2058 = vld [vmem:[#allocation2 + $0x2c8] sm:$0xff]
        %v2059 = vld [vmem:[#allocation2 + $0x2d0] sm:$0xff]
        %v2060 = vld [vmem:[#allocation2 + $0x2d8] sm:$0xff]
        %v2061 = vld [vmem:[#allocation2 + $0x2e0] sm:$0xff]
        %v2062 = vld [vmem:[#allocation2 + $0x2e8] sm:$0xff]
        %v2063 = vld [vmem:[#allocation2 + $0x2f0] sm:$0xff]
        %v2064 = vld [vmem:[#allocation2 + $0x2f8] sm:$0xff]
        %v2065 = vld [vmem:[#allocation2 + $0x300] sm:$0xff]
        %v2066 = vld [vmem:[#allocation2 + $0x308] sm:$0xff]
        %v2067 = vld [vmem:[#allocation2 + $0x310] sm:$0xff]
        %v2068 = vld [vmem:[#allocation2 + $0x318] sm:$0xff]
        %v2069 = vld [vmem:[#allocation2 + $0x320] sm:$0xff]
        %v2070 = vld [vmem:[#allocation2 + $0x328] sm:$0xff]
        %v2071 = vld [vmem:[#allocation2 + $0x330] sm:$0xff]
        %v2072 = vld [vmem:[#allocation2 + $0x338] sm:$0xff]
        %v2073 = vld [vmem:[#allocation2 + $0x340] sm:$0xff]
        %v2074 = vld [vmem:[#allocation2 + $0x348] sm:$0xff]
        %v2075 = vld [vmem:[#allocation2 + $0x350] sm:$0xff]
        %v2076 = vld [vmem:[#allocation2 + $0x358] sm:$0xff]
        %v2077 = vld [vmem:[%s5] sm:$0xff]
        %2079 = vset.pattern.permute.xlu0 0
        %2080 = vperm.xlu0 %2079, %v2077
        %v2081 = vpop.permute.xlu0 %2080
        %v2084 = vsel %vm1197, %v1968, 0
        %2086 = vmatpush.msra.mxu0 %v2029
        %2087 = vmatpush.msra.mxu0 %v2025
        %2088 = vmatpush.msra.mxu0 %v2021
        %2089 = vmatpush.msra.mxu0 %v2017
        %2090 = vmatpush.msra.mxu0 %v2013
        %2091 = vmatpush.msra.mxu0 %v2009
        %2092 = vmatpush.msra.mxu0 %v2005
        %2093 = vmatpush.msra.mxu0 %v2001
        %2094 = vmatpush.msra.mxu0 %v1997
        %2095 = vmatpush.msra.mxu0 %v1993
        %2096 = vmatpush.msra.mxu0 %v1989
        %2097 = vmatpush.msra.mxu0 %v1985
        %2098 = vmatpush.msra.mxu0 %v1981
        %2099 = vmatpush.msra.mxu0 %v1977
        %2100 = vmatpush.msra.mxu0 %v1973
        %2101 = vmatpush.msra.mxu0 %v1969
        %2102 = vmatmul.f32.gmra.mxu0 %v1967
        %v2103 = vpop.f32.mrf.mxu0
        %v2104 = vadd.f32 %v2081, %v2103
        %2105 = vdwg.mxu0
        %2106 = vmatpush.msra.mxu0 0.0
        %2107 = vmatpush.msra.mxu0 0.0
        %2108 = vmatpush.msra.mxu0 0.0
        %2109 = vmatpush.msra.mxu0 0.0
        %2110 = vmatpush.msra.mxu0 0.0
        %2111 = vmatpush.msra.mxu0 %v2073
        %2112 = vmatpush.msra.mxu0 %v2069
        %2113 = vmatpush.msra.mxu0 %v2065
        %2114 = vmatpush.msra.mxu0 %v2061
        %2115 = vmatpush.msra.mxu0 %v2057
        %2116 = vmatpush.msra.mxu0 %v2053
        %2117 = vmatpush.msra.mxu0 %v2049
        %2118 = vmatpush.msra.mxu0 %v2045
        %2119 = vmatpush.msra.mxu0 %v2041
        %2120 = vmatpush.msra.mxu0 %v2037
        %2121 = vmatpush.msra.mxu0 %v2033
        %2122 = vmatmul.f32.gmra.mxu0 %v2084
        %v2123 = vpop.f32.mrf.mxu0
        %v2124 = vadd.f32 %v2104, %v2123
        %2125 = vdwg.mxu0
        %2126 = vmatpush.msra.mxu0 %v2030
        %2127 = vmatpush.msra.mxu0 %v2026
        %2128 = vmatpush.msra.mxu0 %v2022
        %2129 = vmatpush.msra.mxu0 %v2018
        %2130 = vmatpush.msra.mxu0 %v2014
        %2131 = vmatpush.msra.mxu0 %v2010
        %2132 = vmatpush.msra.mxu0 %v2006
        %2133 = vmatpush.msra.mxu0 %v2002
        %2134 = vmatpush.msra.mxu0 %v1998
        %2135 = vmatpush.msra.mxu0 %v1994
        %2136 = vmatpush.msra.mxu0 %v1990
        %2137 = vmatpush.msra.mxu0 %v1986
        %2138 = vmatpush.msra.mxu0 %v1982
        %2139 = vmatpush.msra.mxu0 %v1978
        %2140 = vmatpush.msra.mxu0 %v1974
        %2141 = vmatpush.msra.mxu0 %v1970
        %2142 = vmatmul.f32.gmra.mxu0 %v1967
        %v2143 = vpop.f32.mrf.mxu0
        %v2144 = vadd.f32 %v2081, %v2143
        %2145 = vdwg.mxu0
        %2146 = vmatpush.msra.mxu0 0.0
        %2147 = vmatpush.msra.mxu0 0.0
        %2148 = vmatpush.msra.mxu0 0.0
        %2149 = vmatpush.msra.mxu0 0.0
        %2150 = vmatpush.msra.mxu0 0.0
        %2151 = vmatpush.msra.mxu0 %v2074
        %2152 = vmatpush.msra.mxu0 %v2070
        %2153 = vmatpush.msra.mxu0 %v2066
        %2154 = vmatpush.msra.mxu0 %v2062
        %2155 = vmatpush.msra.mxu0 %v2058
        %2156 = vmatpush.msra.mxu0 %v2054
        %2157 = vmatpush.msra.mxu0 %v2050
        %2158 = vmatpush.msra.mxu0 %v2046
        %2159 = vmatpush.msra.mxu0 %v2042
        %2160 = vmatpush.msra.mxu0 %v2038
        %2161 = vmatpush.msra.mxu0 %v2034
        %2162 = vmatmul.f32.gmra.mxu0 %v2084
        %v2163 = vpop.f32.mrf.mxu0
        %v2164 = vadd.f32 %v2144, %v2163
        %2165 = vdwg.mxu0
        %2166 = vmatpush.msra.mxu0 %v2031
        %2167 = vmatpush.msra.mxu0 %v2027
        %2168 = vmatpush.msra.mxu0 %v2023
        %2169 = vmatpush.msra.mxu0 %v2019
        %2170 = vmatpush.msra.mxu0 %v2015
        %2171 = vmatpush.msra.mxu0 %v2011
        %2172 = vmatpush.msra.mxu0 %v2007
        %2173 = vmatpush.msra.mxu0 %v2003
        %2174 = vmatpush.msra.mxu0 %v1999
        %2175 = vmatpush.msra.mxu0 %v1995
        %2176 = vmatpush.msra.mxu0 %v1991
        %2177 = vmatpush.msra.mxu0 %v1987
        %2178 = vmatpush.msra.mxu0 %v1983
        %2179 = vmatpush.msra.mxu0 %v1979
        %2180 = vmatpush.msra.mxu0 %v1975
        %2181 = vmatpush.msra.mxu0 %v1971
        %2182 = vmatmul.f32.gmra.mxu0 %v1967
        %v2183 = vpop.f32.mrf.mxu0
        %v2184 = vadd.f32 %v2081, %v2183
        %2185 = vdwg.mxu0
        %2186 = vmatpush.msra.mxu0 0.0
        %2187 = vmatpush.msra.mxu0 0.0
        %2188 = vmatpush.msra.mxu0 0.0
        %2189 = vmatpush.msra.mxu0 0.0
        %2190 = vmatpush.msra.mxu0 0.0
        %2191 = vmatpush.msra.mxu0 %v2075
        %2192 = vmatpush.msra.mxu0 %v2071
        %2193 = vmatpush.msra.mxu0 %v2067
        %2194 = vmatpush.msra.mxu0 %v2063
        %2195 = vmatpush.msra.mxu0 %v2059
        %2196 = vmatpush.msra.mxu0 %v2055
        %2197 = vmatpush.msra.mxu0 %v2051
        %2198 = vmatpush.msra.mxu0 %v2047
        %2199 = vmatpush.msra.mxu0 %v2043
        %2200 = vmatpush.msra.mxu0 %v2039
        %2201 = vmatpush.msra.mxu0 %v2035
        %2202 = vmatmul.f32.gmra.mxu0 %v2084
        %v2203 = vpop.f32.mrf.mxu0
        %v2204 = vadd.f32 %v2184, %v2203
        %2205 = vdwg.mxu0
        %2206 = vmatpush.msra.mxu0 %v2032
        %2207 = vmatpush.msra.mxu0 %v2028
        %2208 = vmatpush.msra.mxu0 %v2024
        %2209 = vmatpush.msra.mxu0 %v2020
        %2210 = vmatpush.msra.mxu0 %v2016
        %2211 = vmatpush.msra.mxu0 %v2012
        %2212 = vmatpush.msra.mxu0 %v2008
        %2213 = vmatpush.msra.mxu0 %v2004
        %2214 = vmatpush.msra.mxu0 %v2000
        %2215 = vmatpush.msra.mxu0 %v1996
        %2216 = vmatpush.msra.mxu0 %v1992
        %2217 = vmatpush.msra.mxu0 %v1988
        %2218 = vmatpush.msra.mxu0 %v1984
        %2219 = vmatpush.msra.mxu0 %v1980
        %2220 = vmatpush.msra.mxu0 %v1976
        %2221 = vmatpush.msra.mxu0 %v1972
        %2222 = vmatmul.f32.gmra.mxu0 %v1967
        %v2223 = vpop.f32.mrf.mxu0
        %v2224 = vadd.f32 %v2081, %v2223
        %2225 = vdwg.mxu0
        %2226 = vmatpush.msra.mxu0 0.0
        %2227 = vmatpush.msra.mxu0 0.0
        %2228 = vmatpush.msra.mxu0 0.0
        %2229 = vmatpush.msra.mxu0 0.0
        %2230 = vmatpush.msra.mxu0 0.0
        %2231 = vmatpush.msra.mxu0 %v2076
        %2232 = vmatpush.msra.mxu0 %v2072
        %2233 = vmatpush.msra.mxu0 %v2068
        %2234 = vmatpush.msra.mxu0 %v2064
        %2235 = vmatpush.msra.mxu0 %v2060
        %2236 = vmatpush.msra.mxu0 %v2056
        %2237 = vmatpush.msra.mxu0 %v2052
        %2238 = vmatpush.msra.mxu0 %v2048
        %2239 = vmatpush.msra.mxu0 %v2044
        %2240 = vmatpush.msra.mxu0 %v2040
        %2241 = vmatpush.msra.mxu0 %v2036
        %2242 = vmatmul.f32.gmra.mxu0 %v2084
        %v2243 = vpop.f32.mrf.mxu0
        %v2244 = vadd.f32 %v2224, %v2243
        %2245 = vdwg.mxu0
        %v2246 = vmax.f32 %v2124, 0.0
        %v2247 = vmax.f32 %v2164, 0.0
        %v2248 = vmax.f32 %v2204, 0.0
        %v2249 = vmax.f32 %v2244, 0.0
        %2250 = vrot.lane.b32.xlu0 %v2246, 109
        %v2251 = vpop.permute.xlu0 %2250
        %2252 = vrot.lane.b32.xlu0 %v2247, 109
        %v2253 = vpop.permute.xlu0 %2252
        %2254 = vrot.lane.b32.xlu0 %v2248, 109
        %v2255 = vpop.permute.xlu0 %2254
        %2256 = vrot.lane.b32.xlu0 %v2249, 109
        %v2257 = vpop.permute.xlu0 %2256
        %vm2258 = vcmp.lt.s32.totalorder %v370, 109
        %v2259 = vsel %vm2258, %v2255, %v2257
        %v2260 = vsel %vm2258, %v2253, %v2255
        %v2261 = vsel %vm2258, %v2251, %v2253
        %v2262 = vsel %vm2258, %v2257, %v2251
        %s2263 = scalar_lea.vmem [#allocation6], 198
        %v2264 = vld [vmem:[%s2263] ss:$8 sm:$0xf]
        %v2266 = vperm.slane %v2264, 0
        %v2267 = vperm.slane %v2264, 1
        %v2268 = vperm.slane %v2264, 2
        %v2269 = vperm.slane %v2264, 3
        %v2274 = vmul.f32 %v2260, %v2266
        %v2275 = vmul.f32 %v2259, %v2267
        %v2276 = vmul.f32 %v2262, %v2268
        %v2277 = vmul.f32 %v2261, %v2269
        %2278 = vst [vmem:[#allocation2] sm:$0xff] %v2274
        %2279 = vst [vmem:[#allocation2 + $0x8] sm:$0xff] %v2275
        %2280 = vst [vmem:[#allocation2 + $0x10] sm:$0xff] %v2276
        %2281 = vst [vmem:[#allocation2 + $0x18] sm:$0xff] %v2277
        %2282 = vrot.lane.b32.xlu0 %v2246, 104
        %v2283 = vpop.permute.xlu0 %2282
        %2284 = vrot.lane.b32.xlu0 %v2247, 104
        %v2285 = vpop.permute.xlu0 %2284
        %2286 = vrot.lane.b32.xlu0 %v2248, 104
        %v2287 = vpop.permute.xlu0 %2286
        %2288 = vrot.lane.b32.xlu0 %v2249, 104
        %v2289 = vpop.permute.xlu0 %2288
        %vm2290 = vcmp.lt.s32.totalorder %v370, 104
        %v2291 = vsel %vm2290, %v2287, %v2289
        %v2292 = vsel %vm2290, %v2285, %v2287
        %v2293 = vsel %vm2290, %v2283, %v2285
        %v2294 = vsel %vm2290, %v2289, %v2283
        %s2295 = scalar_lea.vmem [#allocation6], 199
        %v2296 = vld [vmem:[%s2295] ss:$8 sm:$0xf]
        %v2298 = vperm.slane %v2296, 0
        %v2299 = vperm.slane %v2296, 1
        %v2300 = vperm.slane %v2296, 2
        %v2301 = vperm.slane %v2296, 3
        %v2306 = vmul.f32 %v2292, %v2298
        %v2307 = vmul.f32 %v2291, %v2299
        %v2308 = vmul.f32 %v2294, %v2300
        %v2309 = vmul.f32 %v2293, %v2301
        %2310 = vst [vmem:[#allocation2 + $0x20] sm:$0xff] %v2306
        %2311 = vst [vmem:[#allocation2 + $0x28] sm:$0xff] %v2307
        %2312 = vst [vmem:[#allocation2 + $0x30] sm:$0xff] %v2308
        %2313 = vst [vmem:[#allocation2 + $0x38] sm:$0xff] %v2309
        %2314 = vrot.lane.b32.xlu0 %v2246, 99
        %v2315 = vpop.permute.xlu0 %2314
        %2316 = vrot.lane.b32.xlu0 %v2247, 99
        %v2317 = vpop.permute.xlu0 %2316
        %2318 = vrot.lane.b32.xlu0 %v2248, 99
        %v2319 = vpop.permute.xlu0 %2318
        %2320 = vrot.lane.b32.xlu0 %v2249, 99
        %v2321 = vpop.permute.xlu0 %2320
        %vm2322 = vcmp.lt.s32.totalorder %v370, 99
        %v2323 = vsel %vm2322, %v2319, %v2321
        %v2324 = vsel %vm2322, %v2317, %v2319
        %v2325 = vsel %vm2322, %v2315, %v2317
        %v2326 = vsel %vm2322, %v2321, %v2315
        %s2327 = scalar_lea.vmem [#allocation6], 224
        %v2328 = vld [vmem:[%s2327] ss:$8 sm:$0xf]
        %v2330 = vperm.slane %v2328, 0
        %v2331 = vperm.slane %v2328, 1
        %v2332 = vperm.slane %v2328, 2
        %v2333 = vperm.slane %v2328, 3
        %v2338 = vmul.f32 %v2324, %v2330
        %v2339 = vmul.f32 %v2323, %v2331
        %v2340 = vmul.f32 %v2326, %v2332
        %v2341 = vmul.f32 %v2325, %v2333
        %2342 = vst [vmem:[#allocation2 + $0x40] sm:$0xff] %v2338
        %2343 = vst [vmem:[#allocation2 + $0x48] sm:$0xff] %v2339
        %2344 = vst [vmem:[#allocation2 + $0x50] sm:$0xff] %v2340
        %2345 = vst [vmem:[#allocation2 + $0x58] sm:$0xff] %v2341
        %2346 = vrot.lane.b32.xlu0 %v2246, 69
        %v2347 = vpop.permute.xlu0 %2346
        %2348 = vrot.lane.b32.xlu0 %v2247, 69
        %v2349 = vpop.permute.xlu0 %2348
        %2350 = vrot.lane.b32.xlu0 %v2248, 69
        %v2351 = vpop.permute.xlu0 %2350
        %2352 = vrot.lane.b32.xlu0 %v2249, 69
        %v2353 = vpop.permute.xlu0 %2352
        %vm2354 = vcmp.lt.s32.totalorder %v370, 69
        %v2355 = vsel %vm2354, %v2351, %v2353
        %v2356 = vsel %vm2354, %v2349, %v2351
        %v2357 = vsel %vm2354, %v2347, %v2349
        %v2358 = vsel %vm2354, %v2353, %v2347
        %s2359 = scalar_lea.vmem [#allocation6], 225
        %v2360 = vld [vmem:[%s2359] ss:$8 sm:$0xf]
        %v2362 = vperm.slane %v2360, 0
        %v2363 = vperm.slane %v2360, 1
        %v2364 = vperm.slane %v2360, 2
        %v2365 = vperm.slane %v2360, 3
        %v2370 = vmul.f32 %v2356, %v2362
        %v2371 = vmul.f32 %v2355, %v2363
        %v2372 = vmul.f32 %v2358, %v2364
        %v2373 = vmul.f32 %v2357, %v2365
        %2374 = vst [vmem:[#allocation2 + $0x60] sm:$0xff] %v2370
        %2375 = vst [vmem:[#allocation2 + $0x68] sm:$0xff] %v2371
        %2376 = vst [vmem:[#allocation2 + $0x70] sm:$0xff] %v2372
        %2377 = vst [vmem:[#allocation2 + $0x78] sm:$0xff] %v2373
        %2378 = vrot.lane.b32.xlu0 %v2246, 64
        %v2379 = vpop.permute.xlu0 %2378
        %2380 = vrot.lane.b32.xlu0 %v2247, 64
        %v2381 = vpop.permute.xlu0 %2380
        %2382 = vrot.lane.b32.xlu0 %v2248, 64
        %v2383 = vpop.permute.xlu0 %2382
        %2384 = vrot.lane.b32.xlu0 %v2249, 64
        %v2385 = vpop.permute.xlu0 %2384
        %v2386 = vsel %vm498, %v2383, %v2385
        %v2387 = vsel %vm498, %v2381, %v2383
        %v2388 = vsel %vm498, %v2379, %v2381
        %v2389 = vsel %vm498, %v2385, %v2379
        %s2390 = scalar_lea.vmem [#allocation6], 226
        %v2391 = vld [vmem:[%s2390] ss:$8 sm:$0xf]
        %v2393 = vperm.slane %v2391, 0
        %v2394 = vperm.slane %v2391, 1
        %v2395 = vperm.slane %v2391, 2
        %v2396 = vperm.slane %v2391, 3
        %v2401 = vmul.f32 %v2387, %v2393
        %v2402 = vmul.f32 %v2386, %v2394
        %v2403 = vmul.f32 %v2389, %v2395
        %v2404 = vmul.f32 %v2388, %v2396
        %2405 = vst [vmem:[#allocation2 + $0x80] sm:$0xff] %v2401
        %2406 = vst [vmem:[#allocation2 + $0x88] sm:$0xff] %v2402
        %2407 = vst [vmem:[#allocation2 + $0x90] sm:$0xff] %v2403
        %2408 = vst [vmem:[#allocation2 + $0x98] sm:$0xff] %v2404
        %2409 = vrot.lane.b32.xlu0 %v2246, 59
        %v2410 = vpop.permute.xlu0 %2409
        %2411 = vrot.lane.b32.xlu0 %v2247, 59
        %v2412 = vpop.permute.xlu0 %2411
        %2413 = vrot.lane.b32.xlu0 %v2248, 59
        %v2414 = vpop.permute.xlu0 %2413
        %2415 = vrot.lane.b32.xlu0 %v2249, 59
        %v2416 = vpop.permute.xlu0 %2415
        %vm2417 = vcmp.lt.s32.totalorder %v370, 59
        %v2418 = vsel %vm2417, %v2414, %v2416
        %v2419 = vsel %vm2417, %v2412, %v2414
        %v2420 = vsel %vm2417, %v2410, %v2412
        %v2421 = vsel %vm2417, %v2416, %v2410
        %s2422 = scalar_lea.vmem [#allocation6], 227
        %v2423 = vld [vmem:[%s2422] ss:$8 sm:$0xf]
        %v2425 = vperm.slane %v2423, 0
        %v2426 = vperm.slane %v2423, 1
        %v2427 = vperm.slane %v2423, 2
        %v2428 = vperm.slane %v2423, 3
        %v2433 = vmul.f32 %v2419, %v2425
        %v2434 = vmul.f32 %v2418, %v2426
        %v2435 = vmul.f32 %v2421, %v2427
        %v2436 = vmul.f32 %v2420, %v2428
        %2437 = vst [vmem:[#allocation2 + $0xa0] sm:$0xff] %v2433
        %2438 = vst [vmem:[#allocation2 + $0xa8] sm:$0xff] %v2434
        %2439 = vst [vmem:[#allocation2 + $0xb0] sm:$0xff] %v2435
        %2440 = vst [vmem:[#allocation2 + $0xb8] sm:$0xff] %v2436
        %2441 = vrot.lane.b32.xlu0 %v2246, 29
        %v2442 = vpop.permute.xlu0 %2441
        %2443 = vrot.lane.b32.xlu0 %v2247, 29
        %v2444 = vpop.permute.xlu0 %2443
        %2445 = vrot.lane.b32.xlu0 %v2248, 29
        %v2446 = vpop.permute.xlu0 %2445
        %2447 = vrot.lane.b32.xlu0 %v2249, 29
        %v2448 = vpop.permute.xlu0 %2447
        %vm2449 = vcmp.lt.s32.totalorder %v370, 29
        %v2450 = vsel %vm2449, %v2446, %v2448
        %v2451 = vsel %vm2449, %v2444, %v2446
        %v2452 = vsel %vm2449, %v2442, %v2444
        %v2453 = vsel %vm2449, %v2448, %v2442
        %s2454 = scalar_lea.vmem [#allocation6], 228
        %v2455 = vld [vmem:[%s2454] ss:$8 sm:$0xf]
        %v2457 = vperm.slane %v2455, 0
        %v2458 = vperm.slane %v2455, 1
        %v2459 = vperm.slane %v2455, 2
        %v2460 = vperm.slane %v2455, 3
        %v2465 = vmul.f32 %v2451, %v2457
        %v2466 = vmul.f32 %v2450, %v2458
        %v2467 = vmul.f32 %v2453, %v2459
        %v2468 = vmul.f32 %v2452, %v2460
        %2469 = vst [vmem:[#allocation2 + $0xc0] sm:$0xff] %v2465
        %2470 = vst [vmem:[#allocation2 + $0xc8] sm:$0xff] %v2466
        %2471 = vst [vmem:[#allocation2 + $0xd0] sm:$0xff] %v2467
        %2472 = vst [vmem:[#allocation2 + $0xd8] sm:$0xff] %v2468
        %2473 = vrot.lane.b32.xlu0 %v2246, 24
        %v2474 = vpop.permute.xlu0 %2473
        %2475 = vrot.lane.b32.xlu0 %v2247, 24
        %v2476 = vpop.permute.xlu0 %2475
        %2477 = vrot.lane.b32.xlu0 %v2248, 24
        %v2478 = vpop.permute.xlu0 %2477
        %2479 = vrot.lane.b32.xlu0 %v2249, 24
        %v2480 = vpop.permute.xlu0 %2479
        %vm2481 = vcmp.lt.s32.totalorder %v370, 24
        %v2482 = vsel %vm2481, %v2478, %v2480
        %v2483 = vsel %vm2481, %v2476, %v2478
        %v2484 = vsel %vm2481, %v2474, %v2476
        %v2485 = vsel %vm2481, %v2480, %v2474
        %s2486 = scalar_lea.vmem [#allocation6], 229
        %v2487 = vld [vmem:[%s2486] ss:$8 sm:$0xf]
        %v2489 = vperm.slane %v2487, 0
        %v2490 = vperm.slane %v2487, 1
        %v2491 = vperm.slane %v2487, 2
        %v2492 = vperm.slane %v2487, 3
        %v2497 = vmul.f32 %v2483, %v2489
        %v2498 = vmul.f32 %v2482, %v2490
        %v2499 = vmul.f32 %v2485, %v2491
        %v2500 = vmul.f32 %v2484, %v2492
        %2501 = vst [vmem:[#allocation2 + $0xe0] sm:$0xff] %v2497
        %2502 = vst [vmem:[#allocation2 + $0xe8] sm:$0xff] %v2498
        %2503 = vst [vmem:[#allocation2 + $0xf0] sm:$0xff] %v2499
        %2504 = vst [vmem:[#allocation2 + $0xf8] sm:$0xff] %v2500
        %2505 = vrot.lane.b32.xlu0 %v2246, 19
        %v2506 = vpop.permute.xlu0 %2505
        %2507 = vrot.lane.b32.xlu0 %v2247, 19
        %v2508 = vpop.permute.xlu0 %2507
        %2509 = vrot.lane.b32.xlu0 %v2248, 19
        %v2510 = vpop.permute.xlu0 %2509
        %2511 = vrot.lane.b32.xlu0 %v2249, 19
        %v2512 = vpop.permute.xlu0 %2511
        %vm2513 = vcmp.lt.s32.totalorder %v370, 19
        %v2514 = vsel %vm2513, %v2510, %v2512
        %v2515 = vsel %vm2513, %v2508, %v2510
        %v2516 = vsel %vm2513, %v2506, %v2508
        %v2517 = vsel %vm2513, %v2512, %v2506
        %s2518 = scalar_lea.vmem [#allocation6], 230
        %v2519 = vld [vmem:[%s2518] ss:$8 sm:$0xf]
        %v2521 = vperm.slane %v2519, 0
        %v2522 = vperm.slane %v2519, 1
        %v2523 = vperm.slane %v2519, 2
        %v2524 = vperm.slane %v2519, 3
        %v2529 = vmul.f32 %v2515, %v2521
        %v2530 = vmul.f32 %v2514, %v2522
        %v2531 = vmul.f32 %v2517, %v2523
        %v2532 = vmul.f32 %v2516, %v2524
        %2533 = vst [vmem:[#allocation2 + $0x100] sm:$0xff] %v2529
        %2534 = vst [vmem:[#allocation2 + $0x108] sm:$0xff] %v2530
        %2535 = vst [vmem:[#allocation2 + $0x110] sm:$0xff] %v2531
        %2536 = vst [vmem:[#allocation2 + $0x118] sm:$0xff] %v2532
        %2537 = vrot.lane.b32.xlu0 %v2246, 45
        %v2538 = vpop.permute.xlu0 %2537
        %2539 = vrot.lane.b32.xlu0 %v2247, 45
        %v2540 = vpop.permute.xlu0 %2539
        %2541 = vrot.lane.b32.xlu0 %v2248, 45
        %v2542 = vpop.permute.xlu0 %2541
        %2543 = vrot.lane.b32.xlu0 %v2249, 45
        %v2544 = vpop.permute.xlu0 %2543
        %vm2545 = vcmp.lt.s32.totalorder %v370, 45
        %v2546 = vsel %vm2545, %v2542, %v2544
        %v2547 = vsel %vm2545, %v2540, %v2542
        %v2548 = vsel %vm2545, %v2538, %v2540
        %v2549 = vsel %vm2545, %v2544, %v2538
        %s2550 = scalar_lea.vmem [#allocation6], 231
        %v2551 = vld [vmem:[%s2550] ss:$8 sm:$0xf]
        %v2553 = vperm.slane %v2551, 0
        %v2554 = vperm.slane %v2551, 1
        %v2555 = vperm.slane %v2551, 2
        %v2556 = vperm.slane %v2551, 3
        %v2561 = vmul.f32 %v2549, %v2553
        %v2562 = vmul.f32 %v2548, %v2554
        %v2563 = vmul.f32 %v2547, %v2555
        %v2564 = vmul.f32 %v2546, %v2556
        %2565 = vst [vmem:[#allocation2 + $0x120] sm:$0xff] %v2561
        %2566 = vst [vmem:[#allocation2 + $0x128] sm:$0xff] %v2562
        %2567 = vst [vmem:[#allocation2 + $0x130] sm:$0xff] %v2563
        %2568 = vst [vmem:[#allocation2 + $0x138] sm:$0xff] %v2564
        %2569 = vrot.lane.b32.xlu0 %v2246, 40
        %v2570 = vpop.permute.xlu0 %2569
        %2571 = vrot.lane.b32.xlu0 %v2247, 40
        %v2572 = vpop.permute.xlu0 %2571
        %2573 = vrot.lane.b32.xlu0 %v2248, 40
        %v2574 = vpop.permute.xlu0 %2573
        %2575 = vrot.lane.b32.xlu0 %v2249, 40
        %v2576 = vpop.permute.xlu0 %2575
        %vm2577 = vcmp.lt.s32.totalorder %v370, 40
        %v2578 = vsel %vm2577, %v2574, %v2576
        %v2579 = vsel %vm2577, %v2572, %v2574
        %v2580 = vsel %vm2577, %v2570, %v2572
        %v2581 = vsel %vm2577, %v2576, %v2570
        %s2582 = scalar_lea.vmem [#allocation6], 256
        %v2583 = vld [vmem:[%s2582] ss:$8 sm:$0xf]
        %v2585 = vperm.slane %v2583, 0
        %v2586 = vperm.slane %v2583, 1
        %v2587 = vperm.slane %v2583, 2
        %v2588 = vperm.slane %v2583, 3
        %v2593 = vmul.f32 %v2581, %v2585
        %v2594 = vmul.f32 %v2580, %v2586
        %v2595 = vmul.f32 %v2579, %v2587
        %v2596 = vmul.f32 %v2578, %v2588
        %2597 = vst [vmem:[#allocation2 + $0x140] sm:$0xff] %v2593
        %2598 = vst [vmem:[#allocation2 + $0x148] sm:$0xff] %v2594
        %2599 = vst [vmem:[#allocation2 + $0x150] sm:$0xff] %v2595
        %2600 = vst [vmem:[#allocation2 + $0x158] sm:$0xff] %v2596
        %2601 = vrot.lane.b32.xlu0 %v2246, 35
        %v2602 = vpop.permute.xlu0 %2601
        %2603 = vrot.lane.b32.xlu0 %v2247, 35
        %v2604 = vpop.permute.xlu0 %2603
        %2605 = vrot.lane.b32.xlu0 %v2248, 35
        %v2606 = vpop.permute.xlu0 %2605
        %2607 = vrot.lane.b32.xlu0 %v2249, 35
        %v2608 = vpop.permute.xlu0 %2607
        %vm2609 = vcmp.lt.s32.totalorder %v370, 35
        %v2610 = vsel %vm2609, %v2606, %v2608
        %v2611 = vsel %vm2609, %v2604, %v2606
        %v2612 = vsel %vm2609, %v2602, %v2604
        %v2613 = vsel %vm2609, %v2608, %v2602
        %s2614 = scalar_lea.vmem [#allocation6], 257
        %v2615 = vld [vmem:[%s2614] ss:$8 sm:$0xf]
        %v2617 = vperm.slane %v2615, 0
        %v2618 = vperm.slane %v2615, 1
        %v2619 = vperm.slane %v2615, 2
        %v2620 = vperm.slane %v2615, 3
        %v2625 = vmul.f32 %v2613, %v2617
        %v2626 = vmul.f32 %v2612, %v2618
        %v2627 = vmul.f32 %v2611, %v2619
        %v2628 = vmul.f32 %v2610, %v2620
        %2629 = vst [vmem:[#allocation2 + $0x160] sm:$0xff] %v2625
        %2630 = vst [vmem:[#allocation2 + $0x168] sm:$0xff] %v2626
        %2631 = vst [vmem:[#allocation2 + $0x170] sm:$0xff] %v2627
        %2632 = vst [vmem:[#allocation2 + $0x178] sm:$0xff] %v2628
        %2633 = vrot.lane.b32.xlu0 %v2246, 5
        %v2634 = vpop.permute.xlu0 %2633
        %2635 = vrot.lane.b32.xlu0 %v2247, 5
        %v2636 = vpop.permute.xlu0 %2635
        %2637 = vrot.lane.b32.xlu0 %v2248, 5
        %v2638 = vpop.permute.xlu0 %2637
        %2639 = vrot.lane.b32.xlu0 %v2249, 5
        %v2640 = vpop.permute.xlu0 %2639
        %vm2641 = vcmp.lt.s32.totalorder %v370, 5
        %v2642 = vsel %vm2641, %v2638, %v2640
        %v2643 = vsel %vm2641, %v2636, %v2638
        %v2644 = vsel %vm2641, %v2634, %v2636
        %v2645 = vsel %vm2641, %v2640, %v2634
        %s2646 = scalar_lea.vmem [#allocation6], 258
        %v2647 = vld [vmem:[%s2646] ss:$8 sm:$0xf]
        %v2649 = vperm.slane %v2647, 0
        %v2650 = vperm.slane %v2647, 1
        %v2651 = vperm.slane %v2647, 2
        %v2652 = vperm.slane %v2647, 3
        %v2657 = vmul.f32 %v2645, %v2649
        %v2658 = vmul.f32 %v2644, %v2650
        %v2659 = vmul.f32 %v2643, %v2651
        %v2660 = vmul.f32 %v2642, %v2652
        %2661 = vst [vmem:[#allocation2 + $0x180] sm:$0xff] %v2657
        %2662 = vst [vmem:[#allocation2 + $0x188] sm:$0xff] %v2658
        %2663 = vst [vmem:[#allocation2 + $0x190] sm:$0xff] %v2659
        %2664 = vst [vmem:[#allocation2 + $0x198] sm:$0xff] %v2660
        %2665 = vst [vmem:[#allocation2 + $0x1a0] sm:$0xff] %v2246
        %2666 = vst [vmem:[#allocation2 + $0x1a8] sm:$0xff] %v2247
        %2667 = vst [vmem:[#allocation2 + $0x1b0] sm:$0xff] %v2248
        %2668 = vst [vmem:[#allocation2 + $0x1b8] sm:$0xff] %v2249
        %2669 = vrot.lane.b32.xlu0 %v2246, 123
        %v2670 = vpop.permute.xlu0 %2669
        %2671 = vrot.lane.b32.xlu0 %v2247, 123
        %v2672 = vpop.permute.xlu0 %2671
        %2673 = vrot.lane.b32.xlu0 %v2248, 123
        %v2674 = vpop.permute.xlu0 %2673
        %2675 = vrot.lane.b32.xlu0 %v2249, 123
        %v2676 = vpop.permute.xlu0 %2675
        %vm2677 = vcmp.lt.s32.totalorder %v370, 123
        %v2678 = vsel %vm2677, %v2674, %v2676
        %v2679 = vsel %vm2677, %v2672, %v2674
        %v2680 = vsel %vm2677, %v2670, %v2672
        %v2681 = vsel %vm2677, %v2676, %v2670
        %s2682 = scalar_lea.vmem [#allocation6], 260
        %v2683 = vld [vmem:[%s2682] ss:$8 sm:$0xf]
        %v2685 = vperm.slane %v2683, 0
        %v2686 = vperm.slane %v2683, 1
        %v2687 = vperm.slane %v2683, 2
        %v2688 = vperm.slane %v2683, 3
        %v2693 = vmul.f32 %v2680, %v2685
        %v2694 = vmul.f32 %v2679, %v2686
        %v2695 = vmul.f32 %v2678, %v2687
        %v2696 = vmul.f32 %v2681, %v2688
        %2697 = vst [vmem:[#allocation2 + $0x1c0] sm:$0xff] %v2693
        %2698 = vst [vmem:[#allocation2 + $0x1c8] sm:$0xff] %v2694
        %2699 = vst [vmem:[#allocation2 + $0x1d0] sm:$0xff] %v2695
        %2700 = vst [vmem:[#allocation2 + $0x1d8] sm:$0xff] %v2696
        %2701 = vrot.lane.b32.xlu0 %v2246, 93
        %v2702 = vpop.permute.xlu0 %2701
        %2703 = vrot.lane.b32.xlu0 %v2247, 93
        %v2704 = vpop.permute.xlu0 %2703
        %2705 = vrot.lane.b32.xlu0 %v2248, 93
        %v2706 = vpop.permute.xlu0 %2705
        %2707 = vrot.lane.b32.xlu0 %v2249, 93
        %v2708 = vpop.permute.xlu0 %2707
        %vm2709 = vcmp.lt.s32.totalorder %v370, 93
        %v2710 = vsel %vm2709, %v2706, %v2708
        %v2711 = vsel %vm2709, %v2704, %v2706
        %v2712 = vsel %vm2709, %v2702, %v2704
        %v2713 = vsel %vm2709, %v2708, %v2702
        %s2714 = scalar_lea.vmem [#allocation6], 261
        %v2715 = vld [vmem:[%s2714] ss:$8 sm:$0xf]
        %v2717 = vperm.slane %v2715, 0
        %v2718 = vperm.slane %v2715, 1
        %v2719 = vperm.slane %v2715, 2
        %v2720 = vperm.slane %v2715, 3
        %v2725 = vmul.f32 %v2712, %v2717
        %v2726 = vmul.f32 %v2711, %v2718
        %v2727 = vmul.f32 %v2710, %v2719
        %v2728 = vmul.f32 %v2713, %v2720
        %2729 = vst [vmem:[#allocation2 + $0x1e0] sm:$0xff] %v2725
        %2730 = vst [vmem:[#allocation2 + $0x1e8] sm:$0xff] %v2726
        %2731 = vst [vmem:[#allocation2 + $0x1f0] sm:$0xff] %v2727
        %2732 = vst [vmem:[#allocation2 + $0x1f8] sm:$0xff] %v2728
        %2733 = vrot.lane.b32.xlu0 %v2246, 88
        %v2734 = vpop.permute.xlu0 %2733
        %2735 = vrot.lane.b32.xlu0 %v2247, 88
        %v2736 = vpop.permute.xlu0 %2735
        %2737 = vrot.lane.b32.xlu0 %v2248, 88
        %v2738 = vpop.permute.xlu0 %2737
        %2739 = vrot.lane.b32.xlu0 %v2249, 88
        %v2740 = vpop.permute.xlu0 %2739
        %vm2741 = vcmp.lt.s32.totalorder %v370, 88
        %v2742 = vsel %vm2741, %v2738, %v2740
        %v2743 = vsel %vm2741, %v2736, %v2738
        %v2744 = vsel %vm2741, %v2734, %v2736
        %v2745 = vsel %vm2741, %v2740, %v2734
        %s2746 = scalar_lea.vmem [#allocation6], 262
        %v2747 = vld [vmem:[%s2746] ss:$8 sm:$0xf]
        %v2749 = vperm.slane %v2747, 0
        %v2750 = vperm.slane %v2747, 1
        %v2751 = vperm.slane %v2747, 2
        %v2752 = vperm.slane %v2747, 3
        %v2757 = vmul.f32 %v2744, %v2749
        %v2758 = vmul.f32 %v2743, %v2750
        %v2759 = vmul.f32 %v2742, %v2751
        %v2760 = vmul.f32 %v2745, %v2752
        %2761 = vst [vmem:[#allocation2 + $0x200] sm:$0xff] %v2757
        %2762 = vst [vmem:[#allocation2 + $0x208] sm:$0xff] %v2758
        %2763 = vst [vmem:[#allocation2 + $0x210] sm:$0xff] %v2759
        %2764 = vst [vmem:[#allocation2 + $0x218] sm:$0xff] %v2760
        %2765 = vrot.lane.b32.xlu0 %v2246, 83
        %v2766 = vpop.permute.xlu0 %2765
        %2767 = vrot.lane.b32.xlu0 %v2247, 83
        %v2768 = vpop.permute.xlu0 %2767
        %2769 = vrot.lane.b32.xlu0 %v2248, 83
        %v2770 = vpop.permute.xlu0 %2769
        %2771 = vrot.lane.b32.xlu0 %v2249, 83
        %v2772 = vpop.permute.xlu0 %2771
        %vm2773 = vcmp.lt.s32.totalorder %v370, 83
        %v2774 = vsel %vm2773, %v2770, %v2772
        %v2775 = vsel %vm2773, %v2768, %v2770
        %v2776 = vsel %vm2773, %v2766, %v2768
        %v2777 = vsel %vm2773, %v2772, %v2766
        %s2778 = scalar_lea.vmem [#allocation6], 263
        %v2779 = vld [vmem:[%s2778] ss:$8 sm:$0xf]
        %v2781 = vperm.slane %v2779, 0
        %v2782 = vperm.slane %v2779, 1
        %v2783 = vperm.slane %v2779, 2
        %v2784 = vperm.slane %v2779, 3
        %v2789 = vmul.f32 %v2776, %v2781
        %v2790 = vmul.f32 %v2775, %v2782
        %v2791 = vmul.f32 %v2774, %v2783
        %v2792 = vmul.f32 %v2777, %v2784
        %2793 = vst [vmem:[#allocation2 + $0x220] sm:$0xff] %v2789
        %2794 = vst [vmem:[#allocation2 + $0x228] sm:$0xff] %v2790
        %2795 = vst [vmem:[#allocation2 + $0x230] sm:$0xff] %v2791
        %2796 = vst [vmem:[#allocation2 + $0x238] sm:$0xff] %v2792
        %s2797 = scalar_lea.vmem [#allocation6], 288
        %v2798 = vld [vmem:[%s2797] ss:$8 sm:$0xf]
        %v2800 = vperm.slane %v2798, 0
        %v2801 = vperm.slane %v2798, 1
        %v2802 = vperm.slane %v2798, 2
        %v2803 = vperm.slane %v2798, 3
        %v2808 = vmul.f32 %v2259, %v2800
        %v2809 = vmul.f32 %v2262, %v2801
        %v2810 = vmul.f32 %v2261, %v2802
        %v2811 = vmul.f32 %v2260, %v2803
        %2812 = vst [vmem:[#allocation2 + $0x240] sm:$0xff] %v2808
        %2813 = vst [vmem:[#allocation2 + $0x248] sm:$0xff] %v2809
        %2814 = vst [vmem:[#allocation2 + $0x250] sm:$0xff] %v2810
        %2815 = vst [vmem:[#allocation2 + $0x258] sm:$0xff] %v2811
        %s2816 = scalar_lea.vmem [#allocation6], 289
        %v2817 = vld [vmem:[%s2816] ss:$8 sm:$0xf]
        %v2819 = vperm.slane %v2817, 0
        %v2820 = vperm.slane %v2817, 1
        %v2821 = vperm.slane %v2817, 2
        %v2822 = vperm.slane %v2817, 3
        %v2827 = vmul.f32 %v2291, %v2819
        %v2828 = vmul.f32 %v2294, %v2820
        %v2829 = vmul.f32 %v2293, %v2821
        %v2830 = vmul.f32 %v2292, %v2822
        %2831 = vst [vmem:[#allocation2 + $0x260] sm:$0xff] %v2827
        %2832 = vst [vmem:[#allocation2 + $0x268] sm:$0xff] %v2828
        %2833 = vst [vmem:[#allocation2 + $0x270] sm:$0xff] %v2829
        %2834 = vst [vmem:[#allocation2 + $0x278] sm:$0xff] %v2830
        %s2835 = scalar_lea.vmem [#allocation6], 290
        %v2836 = vld [vmem:[%s2835] ss:$8 sm:$0xf]
        %v2838 = vperm.slane %v2836, 0
        %v2839 = vperm.slane %v2836, 1
        %v2840 = vperm.slane %v2836, 2
        %v2841 = vperm.slane %v2836, 3
        %v2846 = vmul.f32 %v2323, %v2838
        %v2847 = vmul.f32 %v2326, %v2839
        %v2848 = vmul.f32 %v2325, %v2840
        %v2849 = vmul.f32 %v2324, %v2841
        %2850 = vst [vmem:[#allocation2 + $0x280] sm:$0xff] %v2846
        %2851 = vst [vmem:[#allocation2 + $0x288] sm:$0xff] %v2847
        %2852 = vst [vmem:[#allocation2 + $0x290] sm:$0xff] %v2848
        %2853 = vst [vmem:[#allocation2 + $0x298] sm:$0xff] %v2849
        %s2854 = scalar_lea.vmem [#allocation6], 291
        %v2855 = vld [vmem:[%s2854] ss:$8 sm:$0xf]
        %v2857 = vperm.slane %v2855, 0
        %v2858 = vperm.slane %v2855, 1
        %v2859 = vperm.slane %v2855, 2
        %v2860 = vperm.slane %v2855, 3
        %v2865 = vmul.f32 %v2355, %v2857
        %v2866 = vmul.f32 %v2358, %v2858
        %v2867 = vmul.f32 %v2357, %v2859
        %v2868 = vmul.f32 %v2356, %v2860
        %2869 = vst [vmem:[#allocation2 + $0x2a0] sm:$0xff] %v2865
        %2870 = vst [vmem:[#allocation2 + $0x2a8] sm:$0xff] %v2866
        %2871 = vst [vmem:[#allocation2 + $0x2b0] sm:$0xff] %v2867
        %2872 = vst [vmem:[#allocation2 + $0x2b8] sm:$0xff] %v2868
        %s2873 = scalar_lea.vmem [#allocation6], 292
        %v2874 = vld [vmem:[%s2873] ss:$8 sm:$0xf]
        %v2876 = vperm.slane %v2874, 0
        %v2877 = vperm.slane %v2874, 1
        %v2878 = vperm.slane %v2874, 2
        %v2879 = vperm.slane %v2874, 3
        %v2884 = vmul.f32 %v2386, %v2876
        %v2885 = vmul.f32 %v2389, %v2877
        %v2886 = vmul.f32 %v2388, %v2878
        %v2887 = vmul.f32 %v2387, %v2879
        %2888 = vst [vmem:[#allocation2 + $0x2c0] sm:$0xff] %v2884
        %2889 = vst [vmem:[#allocation2 + $0x2c8] sm:$0xff] %v2885
        %2890 = vst [vmem:[#allocation2 + $0x2d0] sm:$0xff] %v2886
        %2891 = vst [vmem:[#allocation2 + $0x2d8] sm:$0xff] %v2887
        %s2892 = scalar_lea.vmem [#allocation6], 293
        %v2893 = vld [vmem:[%s2892] ss:$8 sm:$0xf]
        %v2895 = vperm.slane %v2893, 0
        %v2896 = vperm.slane %v2893, 1
        %v2897 = vperm.slane %v2893, 2
        %v2898 = vperm.slane %v2893, 3
        %v2903 = vmul.f32 %v2418, %v2895
        %v2904 = vmul.f32 %v2421, %v2896
        %v2905 = vmul.f32 %v2420, %v2897
        %v2906 = vmul.f32 %v2419, %v2898
        %2907 = vst [vmem:[#allocation2 + $0x2e0] sm:$0xff] %v2903
        %2908 = vst [vmem:[#allocation2 + $0x2e8] sm:$0xff] %v2904
        %2909 = vst [vmem:[#allocation2 + $0x2f0] sm:$0xff] %v2905
        %2910 = vst [vmem:[#allocation2 + $0x2f8] sm:$0xff] %v2906
        %s2911 = scalar_lea.vmem [#allocation6], 294
        %v2912 = vld [vmem:[%s2911] ss:$8 sm:$0xf]
        %v2914 = vperm.slane %v2912, 0
        %v2915 = vperm.slane %v2912, 1
        %v2916 = vperm.slane %v2912, 2
        %v2917 = vperm.slane %v2912, 3
        %v2922 = vmul.f32 %v2450, %v2914
        %v2923 = vmul.f32 %v2453, %v2915
        %v2924 = vmul.f32 %v2452, %v2916
        %v2925 = vmul.f32 %v2451, %v2917
        %2926 = vst [vmem:[#allocation2 + $0x300] sm:$0xff] %v2922
        %2927 = vst [vmem:[#allocation2 + $0x308] sm:$0xff] %v2923
        %2928 = vst [vmem:[#allocation2 + $0x310] sm:$0xff] %v2924
        %2929 = vst [vmem:[#allocation2 + $0x318] sm:$0xff] %v2925
        %s2930 = scalar_lea.vmem [#allocation6], 295
        %v2931 = vld [vmem:[%s2930] ss:$8 sm:$0xf]
        %v2933 = vperm.slane %v2931, 0
        %v2934 = vperm.slane %v2931, 1
        %v2935 = vperm.slane %v2931, 2
        %v2936 = vperm.slane %v2931, 3
        %v2941 = vmul.f32 %v2482, %v2933
        %v2942 = vmul.f32 %v2485, %v2934
        %v2943 = vmul.f32 %v2484, %v2935
        %v2944 = vmul.f32 %v2483, %v2936
        %2945 = vst [vmem:[#allocation2 + $0x320] sm:$0xff] %v2941
        %2946 = vst [vmem:[#allocation2 + $0x328] sm:$0xff] %v2942
        %2947 = vst [vmem:[#allocation2 + $0x330] sm:$0xff] %v2943
        %2948 = vst [vmem:[#allocation2 + $0x338] sm:$0xff] %v2944
        %s2949 = scalar_lea.vmem [#allocation6], 320
        %v2950 = vld [vmem:[%s2949] ss:$8 sm:$0xf]
        %v2952 = vperm.slane %v2950, 0
        %v2953 = vperm.slane %v2950, 1
        %v2954 = vperm.slane %v2950, 2
        %v2955 = vperm.slane %v2950, 3
        %v2960 = vmul.f32 %v2514, %v2952
        %v2961 = vmul.f32 %v2517, %v2953
        %v2962 = vmul.f32 %v2516, %v2954
        %v2963 = vmul.f32 %v2515, %v2955
        %2964 = vst [vmem:[#allocation2 + $0x340] sm:$0xff] %v2960
        %2965 = vst [vmem:[#allocation2 + $0x348] sm:$0xff] %v2961
        %2966 = vst [vmem:[#allocation2 + $0x350] sm:$0xff] %v2962
        %2967 = vst [vmem:[#allocation2 + $0x358] sm:$0xff] %v2963
        %v2968 = vld [vmem:[#allocation8] sm:$0xff]
        %v2969 = vld [vmem:[#allocation8 + $0x8] sm:$0xff]
        %v2970 = vld [vmem:[#allocation8 + $0x10] sm:$0xff]
        %v2971 = vld [vmem:[#allocation8 + $0x18] sm:$0xff]
        %v2972 = vld [vmem:[#allocation2] sm:$0xff]
        %v2973 = vld [vmem:[#allocation2 + $0x8] sm:$0xff]
        %v2974 = vld [vmem:[#allocation2 + $0x10] sm:$0xff]
        %v2975 = vld [vmem:[#allocation2 + $0x18] sm:$0xff]
        %v2976 = vld [vmem:[#allocation2 + $0x20] sm:$0xff]
        %v2977 = vld [vmem:[#allocation2 + $0x28] sm:$0xff]
        %v2978 = vld [vmem:[#allocation2 + $0x30] sm:$0xff]
        %v2979 = vld [vmem:[#allocation2 + $0x38] sm:$0xff]
        %v2980 = vld [vmem:[#allocation2 + $0x40] sm:$0xff]
        %v2981 = vld [vmem:[#allocation2 + $0x48] sm:$0xff]
        %v2982 = vld [vmem:[#allocation2 + $0x50] sm:$0xff]
        %v2983 = vld [vmem:[#allocation2 + $0x58] sm:$0xff]
        %v2984 = vld [vmem:[#allocation2 + $0x60] sm:$0xff]
        %v2985 = vld [vmem:[#allocation2 + $0x68] sm:$0xff]
        %v2986 = vld [vmem:[#allocation2 + $0x70] sm:$0xff]
        %v2987 = vld [vmem:[#allocation2 + $0x78] sm:$0xff]
        %v2988 = vld [vmem:[#allocation2 + $0x80] sm:$0xff]
        %v2989 = vld [vmem:[#allocation2 + $0x88] sm:$0xff]
        %v2990 = vld [vmem:[#allocation2 + $0x90] sm:$0xff]
        %v2991 = vld [vmem:[#allocation2 + $0x98] sm:$0xff]
        %v2992 = vld [vmem:[#allocation2 + $0xa0] sm:$0xff]
        %v2993 = vld [vmem:[#allocation2 + $0xa8] sm:$0xff]
        %v2994 = vld [vmem:[#allocation2 + $0xb0] sm:$0xff]
        %v2995 = vld [vmem:[#allocation2 + $0xb8] sm:$0xff]
        %v2996 = vld [vmem:[#allocation2 + $0xc0] sm:$0xff]
        %v2997 = vld [vmem:[#allocation2 + $0xc8] sm:$0xff]
        %v2998 = vld [vmem:[#allocation2 + $0xd0] sm:$0xff]
        %v2999 = vld [vmem:[#allocation2 + $0xd8] sm:$0xff]
        %v3000 = vld [vmem:[#allocation2 + $0xe0] sm:$0xff]
        %v3001 = vld [vmem:[#allocation2 + $0xe8] sm:$0xff]
        %v3002 = vld [vmem:[#allocation2 + $0xf0] sm:$0xff]
        %v3003 = vld [vmem:[#allocation2 + $0xf8] sm:$0xff]
        %v3004 = vld [vmem:[#allocation2 + $0x100] sm:$0xff]
        %v3005 = vld [vmem:[#allocation2 + $0x108] sm:$0xff]
        %v3006 = vld [vmem:[#allocation2 + $0x110] sm:$0xff]
        %v3007 = vld [vmem:[#allocation2 + $0x118] sm:$0xff]
        %v3008 = vld [vmem:[#allocation2 + $0x120] sm:$0xff]
        %v3009 = vld [vmem:[#allocation2 + $0x128] sm:$0xff]
        %v3010 = vld [vmem:[#allocation2 + $0x130] sm:$0xff]
        %v3011 = vld [vmem:[#allocation2 + $0x138] sm:$0xff]
        %v3012 = vld [vmem:[#allocation2 + $0x140] sm:$0xff]
        %v3013 = vld [vmem:[#allocation2 + $0x148] sm:$0xff]
        %v3014 = vld [vmem:[#allocation2 + $0x150] sm:$0xff]
        %v3015 = vld [vmem:[#allocation2 + $0x158] sm:$0xff]
        %v3016 = vld [vmem:[#allocation2 + $0x160] sm:$0xff]
        %v3017 = vld [vmem:[#allocation2 + $0x168] sm:$0xff]
        %v3018 = vld [vmem:[#allocation2 + $0x170] sm:$0xff]
        %v3019 = vld [vmem:[#allocation2 + $0x178] sm:$0xff]
        %v3020 = vld [vmem:[#allocation2 + $0x180] sm:$0xff]
        %v3021 = vld [vmem:[#allocation2 + $0x188] sm:$0xff]
        %v3022 = vld [vmem:[#allocation2 + $0x190] sm:$0xff]
        %v3023 = vld [vmem:[#allocation2 + $0x198] sm:$0xff]
        %v3024 = vld [vmem:[#allocation2 + $0x1a0] sm:$0xff]
        %v3025 = vld [vmem:[#allocation2 + $0x1a8] sm:$0xff]
        %v3026 = vld [vmem:[#allocation2 + $0x1b0] sm:$0xff]
        %v3027 = vld [vmem:[#allocation2 + $0x1b8] sm:$0xff]
        %v3028 = vld [vmem:[#allocation2 + $0x1c0] sm:$0xff]
        %v3029 = vld [vmem:[#allocation2 + $0x1c8] sm:$0xff]
        %v3030 = vld [vmem:[#allocation2 + $0x1d0] sm:$0xff]
        %v3031 = vld [vmem:[#allocation2 + $0x1d8] sm:$0xff]
        %v3032 = vld [vmem:[#allocation2 + $0x1e0] sm:$0xff]
        %v3033 = vld [vmem:[#allocation2 + $0x1e8] sm:$0xff]
        %v3034 = vld [vmem:[#allocation2 + $0x1f0] sm:$0xff]
        %v3035 = vld [vmem:[#allocation2 + $0x1f8] sm:$0xff]
        %v3036 = vld [vmem:[#allocation2 + $0x200] sm:$0xff]
        %v3037 = vld [vmem:[#allocation2 + $0x208] sm:$0xff]
        %v3038 = vld [vmem:[#allocation2 + $0x210] sm:$0xff]
        %v3039 = vld [vmem:[#allocation2 + $0x218] sm:$0xff]
        %v3040 = vld [vmem:[#allocation2 + $0x220] sm:$0xff]
        %v3041 = vld [vmem:[#allocation2 + $0x228] sm:$0xff]
        %v3042 = vld [vmem:[#allocation2 + $0x230] sm:$0xff]
        %v3043 = vld [vmem:[#allocation2 + $0x238] sm:$0xff]
        %v3044 = vld [vmem:[#allocation2 + $0x240] sm:$0xff]
        %v3045 = vld [vmem:[#allocation2 + $0x248] sm:$0xff]
        %v3046 = vld [vmem:[#allocation2 + $0x250] sm:$0xff]
        %v3047 = vld [vmem:[#allocation2 + $0x258] sm:$0xff]
        %v3048 = vld [vmem:[#allocation2 + $0x260] sm:$0xff]
        %v3049 = vld [vmem:[#allocation2 + $0x268] sm:$0xff]
        %v3050 = vld [vmem:[#allocation2 + $0x270] sm:$0xff]
        %v3051 = vld [vmem:[#allocation2 + $0x278] sm:$0xff]
        %v3052 = vld [vmem:[#allocation2 + $0x280] sm:$0xff]
        %v3053 = vld [vmem:[#allocation2 + $0x288] sm:$0xff]
        %v3054 = vld [vmem:[#allocation2 + $0x290] sm:$0xff]
        %v3055 = vld [vmem:[#allocation2 + $0x298] sm:$0xff]
        %v3056 = vld [vmem:[#allocation2 + $0x2a0] sm:$0xff]
        %v3057 = vld [vmem:[#allocation2 + $0x2a8] sm:$0xff]
        %v3058 = vld [vmem:[#allocation2 + $0x2b0] sm:$0xff]
        %v3059 = vld [vmem:[#allocation2 + $0x2b8] sm:$0xff]
        %v3060 = vld [vmem:[#allocation2 + $0x2c0] sm:$0xff]
        %v3061 = vld [vmem:[#allocation2 + $0x2c8] sm:$0xff]
        %v3062 = vld [vmem:[#allocation2 + $0x2d0] sm:$0xff]
        %v3063 = vld [vmem:[#allocation2 + $0x2d8] sm:$0xff]
        %v3064 = vld [vmem:[#allocation2 + $0x2e0] sm:$0xff]
        %v3065 = vld [vmem:[#allocation2 + $0x2e8] sm:$0xff]
        %v3066 = vld [vmem:[#allocation2 + $0x2f0] sm:$0xff]
        %v3067 = vld [vmem:[#allocation2 + $0x2f8] sm:$0xff]
        %v3068 = vld [vmem:[#allocation2 + $0x300] sm:$0xff]
        %v3069 = vld [vmem:[#allocation2 + $0x308] sm:$0xff]
        %v3070 = vld [vmem:[#allocation2 + $0x310] sm:$0xff]
        %v3071 = vld [vmem:[#allocation2 + $0x318] sm:$0xff]
        %v3072 = vld [vmem:[#allocation2 + $0x320] sm:$0xff]
        %v3073 = vld [vmem:[#allocation2 + $0x328] sm:$0xff]
        %v3074 = vld [vmem:[#allocation2 + $0x330] sm:$0xff]
        %v3075 = vld [vmem:[#allocation2 + $0x338] sm:$0xff]
        %v3076 = vld [vmem:[#allocation2 + $0x340] sm:$0xff]
        %v3077 = vld [vmem:[#allocation2 + $0x348] sm:$0xff]
        %v3078 = vld [vmem:[#allocation2 + $0x350] sm:$0xff]
        %v3079 = vld [vmem:[#allocation2 + $0x358] sm:$0xff]
        %v3080 = vld [vmem:[%s7] sm:$0xff]
        %v3081 = vld [vmem:[%s7 + $0x8] sm:$0xff]
        %3083 = vset.pattern.permute.xlu0 0
        %3084 = vperm.xlu0 %3083, %v3080
        %v3085 = vpop.permute.xlu0 %3084
        %3088 = vset.pattern.permute.xlu0 0
        %3089 = vperm.xlu0 %3088, %v3081
        %v3090 = vpop.permute.xlu0 %3089
        %v3093 = vsel %vm1197, %v2969, 0
        %v3096 = vsel %vm1197, %v2971, 0
        %3098 = vmatpush.msra.mxu0 %v3032
        %3099 = vmatpush.msra.mxu0 %v3028
        %3100 = vmatpush.msra.mxu0 %v3024
        %3101 = vmatpush.msra.mxu0 %v3020
        %3102 = vmatpush.msra.mxu0 %v3016
        %3103 = vmatpush.msra.mxu0 %v3012
        %3104 = vmatpush.msra.mxu0 %v3008
        %3105 = vmatpush.msra.mxu0 %v3004
        %3106 = vmatpush.msra.mxu0 %v3000
        %3107 = vmatpush.msra.mxu0 %v2996
        %3108 = vmatpush.msra.mxu0 %v2992
        %3109 = vmatpush.msra.mxu0 %v2988
        %3110 = vmatpush.msra.mxu0 %v2984
        %3111 = vmatpush.msra.mxu0 %v2980
        %3112 = vmatpush.msra.mxu0 %v2976
        %3113 = vmatpush.msra.mxu0 %v2972
        %3114 = vmatmul.f32.gmra.mxu0 %v2968
        %v3115 = vpop.f32.mrf.mxu0
        %v3116 = vadd.f32 %v3085, %v3115
        %3117 = vmatmul.f32.gmra.mxu0 %v2970
        %v3118 = vpop.f32.mrf.mxu0
        %v3119 = vadd.f32 %v3090, %v3118
        %3120 = vdwg.mxu0
        %3121 = vmatpush.msra.mxu0 0.0
        %3122 = vmatpush.msra.mxu0 0.0
        %3123 = vmatpush.msra.mxu0 0.0
        %3124 = vmatpush.msra.mxu0 0.0
        %3125 = vmatpush.msra.mxu0 0.0
        %3126 = vmatpush.msra.mxu0 %v3076
        %3127 = vmatpush.msra.mxu0 %v3072
        %3128 = vmatpush.msra.mxu0 %v3068
        %3129 = vmatpush.msra.mxu0 %v3064
        %3130 = vmatpush.msra.mxu0 %v3060
        %3131 = vmatpush.msra.mxu0 %v3056
        %3132 = vmatpush.msra.mxu0 %v3052
        %3133 = vmatpush.msra.mxu0 %v3048
        %3134 = vmatpush.msra.mxu0 %v3044
        %3135 = vmatpush.msra.mxu0 %v3040
        %3136 = vmatpush.msra.mxu0 %v3036
        %3137 = vmatmul.f32.gmra.mxu0 %v3093
        %v3138 = vpop.f32.mrf.mxu0
        %v3139 = vadd.f32 %v3116, %v3138
        %3140 = vmatmul.f32.gmra.mxu0 %v3096
        %v3141 = vpop.f32.mrf.mxu0
        %v3142 = vadd.f32 %v3119, %v3141
        %3143 = vdwg.mxu0
        %3144 = vmatpush.msra.mxu0 %v3033
        %3145 = vmatpush.msra.mxu0 %v3029
        %3146 = vmatpush.msra.mxu0 %v3025
        %3147 = vmatpush.msra.mxu0 %v3021
        %3148 = vmatpush.msra.mxu0 %v3017
        %3149 = vmatpush.msra.mxu0 %v3013
        %3150 = vmatpush.msra.mxu0 %v3009
        %3151 = vmatpush.msra.mxu0 %v3005
        %3152 = vmatpush.msra.mxu0 %v3001
        %3153 = vmatpush.msra.mxu0 %v2997
        %3154 = vmatpush.msra.mxu0 %v2993
        %3155 = vmatpush.msra.mxu0 %v2989
        %3156 = vmatpush.msra.mxu0 %v2985
        %3157 = vmatpush.msra.mxu0 %v2981
        %3158 = vmatpush.msra.mxu0 %v2977
        %3159 = vmatpush.msra.mxu0 %v2973
        %3160 = vmatmul.f32.gmra.mxu0 %v2968
        %v3161 = vpop.f32.mrf.mxu0
        %v3162 = vadd.f32 %v3085, %v3161
        %3163 = vmatmul.f32.gmra.mxu0 %v2970
        %v3164 = vpop.f32.mrf.mxu0
        %v3165 = vadd.f32 %v3090, %v3164
        %3166 = vdwg.mxu0
        %3167 = vmatpush.msra.mxu0 0.0
        %3168 = vmatpush.msra.mxu0 0.0
        %3169 = vmatpush.msra.mxu0 0.0
        %3170 = vmatpush.msra.mxu0 0.0
        %3171 = vmatpush.msra.mxu0 0.0
        %3172 = vmatpush.msra.mxu0 %v3077
        %3173 = vmatpush.msra.mxu0 %v3073
        %3174 = vmatpush.msra.mxu0 %v3069
        %3175 = vmatpush.msra.mxu0 %v3065
        %3176 = vmatpush.msra.mxu0 %v3061
        %3177 = vmatpush.msra.mxu0 %v3057
        %3178 = vmatpush.msra.mxu0 %v3053
        %3179 = vmatpush.msra.mxu0 %v3049
        %3180 = vmatpush.msra.mxu0 %v3045
        %3181 = vmatpush.msra.mxu0 %v3041
        %3182 = vmatpush.msra.mxu0 %v3037
        %3183 = vmatmul.f32.gmra.mxu0 %v3093
        %v3184 = vpop.f32.mrf.mxu0
        %v3185 = vadd.f32 %v3162, %v3184
        %3186 = vmatmul.f32.gmra.mxu0 %v3096
        %v3187 = vpop.f32.mrf.mxu0
        %v3188 = vadd.f32 %v3165, %v3187
        %3189 = vdwg.mxu0
        %3190 = vmatpush.msra.mxu0 %v3034
        %3191 = vmatpush.msra.mxu0 %v3030
        %3192 = vmatpush.msra.mxu0 %v3026
        %3193 = vmatpush.msra.mxu0 %v3022
        %3194 = vmatpush.msra.mxu0 %v3018
        %3195 = vmatpush.msra.mxu0 %v3014
        %3196 = vmatpush.msra.mxu0 %v3010
        %3197 = vmatpush.msra.mxu0 %v3006
        %3198 = vmatpush.msra.mxu0 %v3002
        %3199 = vmatpush.msra.mxu0 %v2998
        %3200 = vmatpush.msra.mxu0 %v2994
        %3201 = vmatpush.msra.mxu0 %v2990
        %3202 = vmatpush.msra.mxu0 %v2986
        %3203 = vmatpush.msra.mxu0 %v2982
        %3204 = vmatpush.msra.mxu0 %v2978
        %3205 = vmatpush.msra.mxu0 %v2974
        %3206 = vmatmul.f32.gmra.mxu0 %v2968
        %v3207 = vpop.f32.mrf.mxu0
        %v3208 = vadd.f32 %v3085, %v3207
        %3209 = vmatmul.f32.gmra.mxu0 %v2970
        %v3210 = vpop.f32.mrf.mxu0
        %v3211 = vadd.f32 %v3090, %v3210
        %3212 = vdwg.mxu0
        %3213 = vmatpush.msra.mxu0 0.0
        %3214 = vmatpush.msra.mxu0 0.0
        %3215 = vmatpush.msra.mxu0 0.0
        %3216 = vmatpush.msra.mxu0 0.0
        %3217 = vmatpush.msra.mxu0 0.0
        %3218 = vmatpush.msra.mxu0 %v3078
        %3219 = vmatpush.msra.mxu0 %v3074
        %3220 = vmatpush.msra.mxu0 %v3070
        %3221 = vmatpush.msra.mxu0 %v3066
        %3222 = vmatpush.msra.mxu0 %v3062
        %3223 = vmatpush.msra.mxu0 %v3058
        %3224 = vmatpush.msra.mxu0 %v3054
        %3225 = vmatpush.msra.mxu0 %v3050
        %3226 = vmatpush.msra.mxu0 %v3046
        %3227 = vmatpush.msra.mxu0 %v3042
        %3228 = vmatpush.msra.mxu0 %v3038
        %3229 = vmatmul.f32.gmra.mxu0 %v3093
        %v3230 = vpop.f32.mrf.mxu0
        %v3231 = vadd.f32 %v3208, %v3230
        %3232 = vmatmul.f32.gmra.mxu0 %v3096
        %v3233 = vpop.f32.mrf.mxu0
        %v3234 = vadd.f32 %v3211, %v3233
        %3235 = vdwg.mxu0
        %3236 = vmatpush.msra.mxu0 %v3035
        %3237 = vmatpush.msra.mxu0 %v3031
        %3238 = vmatpush.msra.mxu0 %v3027
        %3239 = vmatpush.msra.mxu0 %v3023
        %3240 = vmatpush.msra.mxu0 %v3019
        %3241 = vmatpush.msra.mxu0 %v3015
        %3242 = vmatpush.msra.mxu0 %v3011
        %3243 = vmatpush.msra.mxu0 %v3007
        %3244 = vmatpush.msra.mxu0 %v3003
        %3245 = vmatpush.msra.mxu0 %v2999
        %3246 = vmatpush.msra.mxu0 %v2995
        %3247 = vmatpush.msra.mxu0 %v2991
        %3248 = vmatpush.msra.mxu0 %v2987
        %3249 = vmatpush.msra.mxu0 %v2983
        %3250 = vmatpush.msra.mxu0 %v2979
        %3251 = vmatpush.msra.mxu0 %v2975
        %3252 = vmatmul.f32.gmra.mxu0 %v2968
        %v3253 = vpop.f32.mrf.mxu0
        %v3254 = vadd.f32 %v3085, %v3253
        %3255 = vmatmul.f32.gmra.mxu0 %v2970
        %v3256 = vpop.f32.mrf.mxu0
        %v3257 = vadd.f32 %v3090, %v3256
        %3258 = vdwg.mxu0
        %3259 = vmatpush.msra.mxu0 0.0
        %3260 = vmatpush.msra.mxu0 0.0
        %3261 = vmatpush.msra.mxu0 0.0
        %3262 = vmatpush.msra.mxu0 0.0
        %3263 = vmatpush.msra.mxu0 0.0
        %3264 = vmatpush.msra.mxu0 %v3079
        %3265 = vmatpush.msra.mxu0 %v3075
        %3266 = vmatpush.msra.mxu0 %v3071
        %3267 = vmatpush.msra.mxu0 %v3067
        %3268 = vmatpush.msra.mxu0 %v3063
        %3269 = vmatpush.msra.mxu0 %v3059
        %3270 = vmatpush.msra.mxu0 %v3055
        %3271 = vmatpush.msra.mxu0 %v3051
        %3272 = vmatpush.msra.mxu0 %v3047
        %3273 = vmatpush.msra.mxu0 %v3043
        %3274 = vmatpush.msra.mxu0 %v3039
        %3275 = vmatmul.f32.gmra.mxu0 %v3093
        %v3276 = vpop.f32.mrf.mxu0
        %v3277 = vadd.f32 %v3254, %v3276
        %3278 = vmatmul.f32.gmra.mxu0 %v3096
        %v3279 = vpop.f32.mrf.mxu0
        %v3280 = vadd.f32 %v3257, %v3279
        %3281 = vdwg.mxu0
        %v3282 = vmax.f32 %v3139, 0.0
        %v3283 = vmax.f32 %v3185, 0.0
        %v3284 = vmax.f32 %v3231, 0.0
        %v3285 = vmax.f32 %v3277, 0.0
        %v3286 = vmax.f32 %v3142, 0.0
        %v3287 = vmax.f32 %v3188, 0.0
        %v3288 = vmax.f32 %v3234, 0.0
        %v3289 = vmax.f32 %v3280, 0.0
        %3290 = vst [vmem:[%s356] sm:$0xff] %v3282
        %3291 = vst [vmem:[%s356 + $0x8] sm:$0xff] %v3283
        %3292 = vst [vmem:[%s356 + $0x10] sm:$0xff] %v3284
        %3293 = vst [vmem:[%s356 + $0x18] sm:$0xff] %v3285
        %3294 = vst [vmem:[%s356 + $0x20] sm:$0xff] %v3286
        %3295 = vst [vmem:[%s356 + $0x28] sm:$0xff] %v3287
        %3296 = vst [vmem:[%s356 + $0x30] sm:$0xff] %v3288
        %3297 = vst [vmem:[%s356 + $0x38] sm:$0xff] %v3289
        %s3298 = sand.u32 %s207, 1
        %s3299 = scalar_lea.sflag [#allocation5], %s3298
        %s3300 = sand.u32 %s207, 1
        %s3301 = smul.addr %s3300, 64
        %s3302 = scalar_lea.vmem [#allocation9], %s3301
        // Predicated region
        $region65: #{tpu_custom_call.1} parent=51 // pred_check
          %p3303 = pneg %p217
        $region66: #{tpu_custom_call.1} parent=51 // pred_check_branch
          %3305 = sbr.rel (%p3303) target = $region68
        $region67: #{tpu_custom_call.1} parent=51 // pred_region
          %3307 = vsyncadd %s3299, 0
          %s3308 = smul.addr %s26, 8
          %s3309 = smul.addr %s3308, 8
          %s3310 = scalar_lea.hbm %s8, %s3309
          %s3311 = sshll.u32 %s3302, 4
          %s3312 = int_to_ptr.vmem [resolvable:$true] %s3311
          %s3313 = sshll.u32 %s3310, 4
          %s3314 = int_to_ptr.hbm [resolvable:$true] %s3313
          %3319 = dma.vmem_to_hbm [thread:$0]  %s3312, 1024, %s3314, %s3299, 512, 512, 32
        $region68: #{tpu_custom_call.1} parent=51 // pred_fallthru
          _
      $region52: #{tpu_custom_call.1} parent=5 // pred_fallthru
        _
      %p3320 = scmp.le.s32.totalorder 2, %s21
      // Predicated region
      $region69: #{tpu_custom_call.1} parent=5 // pred_check
        %p3321 = pneg %p3320
      $region70: #{tpu_custom_call.1} parent=5 // pred_check_branch
        %3323 = sbr.rel (%p3321) target = $region72
      $region71: #{tpu_custom_call.1} parent=5 // pred_region
        %s3324 = ssub.s32 %s21, 2
        // Predicated region
        $region73: #{tpu_custom_call.1} parent=71 // pred_check
          %p3325 = pneg %p223
        $region74: #{tpu_custom_call.1} parent=71 // pred_check_branch
          %3327 = sbr.rel (%p3325) target = $region76
        $region75: #{tpu_custom_call.1} parent=71 // pred_region
          %s3328 = sand.u32 %s208, 1
          %s3329 = scalar_lea.sflag [#allocation5], %s3328
          %s3330 = sand.u32 %s208, 1
          %s3331 = smul.addr %s3330, 64
          %s3332 = scalar_lea.vmem [#allocation9], %s3331
          %3334 = dma.done %s3329, 1024
        $region76: #{tpu_custom_call.1} parent=71 // pred_fallthru
          _
      $region72: #{tpu_custom_call.1} parent=5 // pred_fallthru
        _
    $region6: #{tpu_custom_call.1} parent=1 // loop_footer
      %s25 = sadd.s32 1, %s21
    $region7: #{tpu_custom_call.1} parent=1 // loop_footer_branch
      %20 = sbr.rel target = $region3
    $region8: #{tpu_custom_call.1} parent=1 // loop_exit
      _
    %3335 = vsyncpa [#allocation4], 1
    %s3336 = scalar_lea.sflag [#allocation4], 1
    %3337 = vsyncpa %s3336, 1
    %3338 = vsyncpa [#allocation7], 1
    %3339 = vsyncpa [#allocation5], 1
    %s3340 = scalar_lea.sflag [#allocation5], 1
    %3341 = vsyncpa %s3340, 1

</llo_original>
